<compile_context>
chip_gen: v7x
topology: tpu7x:2x2x1
jax: 0.10.0
libtpu: 0.0.40
codegen_flags: <defaults>
</compile_context>

<pallas_src>
import sys

import jax
import jax.numpy as jnp
from jax.experimental import pallas as pl
from jax.experimental.pallas import tpu as pltpu


_HEAD_LANE_PAD = 128  # lane-dense head output; the real O columns are sliced in the wrapper

_WEIGHT_ORDER = ("wq", "wk", "wv", "bq", "bk", "bv", "wo", "bo",
                 "ln1_g", "ln1_b", "w1", "b1", "w2", "b2", "ln2_g", "ln2_b",
                 "w_out", "b_out")

# Only the large matmul weights are worth single-buffering (w1+w2 alone are
# multi-MiB at production sizes); biases / LN vectors keep default buffering.
_SINGLE_BUFFERED = frozenset({"wq", "wk", "wv", "wo", "w1", "w2", "w_out"})


# ----------------------------------------------------------------------------
# Fused kernel: encoder layer (CLS-only math) + Linear(H, O_pad) head.
# One grid step processes TB sequences.
# ----------------------------------------------------------------------------
def fused_encoder_head_kernel(
        x_ref, xcls_ref, bias_ref,
        wq_ref, wk_ref, wv_ref, bq_ref, bk_ref, bv_ref, wo_ref, bo_ref,
        ln1g_ref, ln1b_ref, w1_ref, b1_ref, w2_ref, b2_ref, ln2g_ref, ln2b_ref,
        wout_ref, bout_ref, score_ref):
    R, H = x_ref.shape              # R = TB * S
    TB = xcls_ref.shape[0]
    S = R // TB

    x = x_ref[...]                  # (TB*S, H) bf16, already flattened by the wrapper

    # K/V over all positions -- the only (TB*S)-row matmuls left after the
    # CLS-only rewrite (valid: single-layer backbone, only hidden[:,0,:] is used).
    k = jnp.dot(x, wk_ref[...], preferred_element_type=jnp.float32) + bk_ref[...]
    v = jnp.dot(x, wv_ref[...], preferred_element_type=jnp.float32) + bv_ref[...]
    k = k.reshape(TB, S, H).astype(jnp.bfloat16)     # row-grouping reshape (S % 8 == 0)
    v = v.reshape(TB, S, H).astype(jnp.bfloat16)

    # CLS query only (1/sqrt(H) pre-folded into wq/bq by the wrapper).
    x_cls = xcls_ref[...]                            # (TB, H) bf16
    q = (jnp.dot(x_cls, wq_ref[...], preferred_element_type=jnp.float32)
         + bq_ref[...]).astype(jnp.bfloat16)
    q = q.reshape(TB, 1, H)

    # Single-head attention for the CLS query (batched einsums, no explicit .T).
    s = jnp.einsum("bqh,bkh->bqk", q, k,
                   preferred_element_type=jnp.float32)        # (TB, 1, S)
    s = s + bias_ref[...]                                     # additive attention mask
    s = s - jnp.max(s, axis=-1, keepdims=True)
    p = jnp.exp(s)
    p = p * pl.reciprocal(jnp.sum(p, axis=-1, keepdims=True), approx=True)
    ctx = jnp.einsum("bqk,bkh->bqh", p.astype(jnp.bfloat16), v,
                     preferred_element_type=jnp.float32)      # (TB, 1, H)
    ctx = ctx.reshape(TB, H).astype(jnp.bfloat16)
    attn = jnp.dot(ctx, wo_ref[...], preferred_element_type=jnp.float32) + bo_ref[...]

    # Residual + LayerNorm 1 on (TB, H) only (f32 statistics).
    h = x_cls.astype(jnp.float32) + attn
    mu = jnp.mean(h, axis=-1, keepdims=True)
    var = jnp.mean((h - mu) ** 2, axis=-1, keepdims=True)
    h = (h - mu) * jax.lax.rsqrt(var + 1e-12) * ln1g_ref[...] + ln1b_ref[...]

    # Feed-forward (GELU) + residual + LayerNorm 2, all on (TB, .) rows.
    f = jnp.dot(h.astype(jnp.bfloat16), w1_ref[...],
                preferred_element_type=jnp.float32) + b1_ref[...]
    f = jax.nn.gelu(f)
    f = jnp.dot(f.astype(jnp.bfloat16), w2_ref[...],
                preferred_element_type=jnp.float32) + b2_ref[...]
    h2 = h + f
    mu2 = jnp.mean(h2, axis=-1, keepdims=True)
    var2 = jnp.mean((h2 - mu2) ** 2, axis=-1, keepdims=True)
    h2 = (h2 - mu2) * jax.lax.rsqrt(var2 + 1e-12) * ln2g_ref[...] + ln2b_ref[...]

    # MLMPredictor head: Linear(H, O) padded to 128 output lanes (lane-dense store).
    score = jnp.dot(h2.astype(jnp.bfloat16), wout_ref[...],
                    preferred_element_type=jnp.float32) + bout_ref[...]
    score_ref[...] = score.astype(score_ref.dtype)


# ----------------------------------------------------------------------------
# Weight preparation: bf16-cast matmul weights, fold 1/sqrt(H) into Wq/bq,
# pad the head to 128 output lanes.
# ----------------------------------------------------------------------------
def _prepare_kernel_weights(p):
    H = p["wq"].shape[0]
    O = p["w_out"].shape[1]
    inv = 1.0 / jnp.sqrt(jnp.float32(H))
    w_out_p = jnp.zeros((H, _HEAD_LANE_PAD), jnp.float32).at[:, :O].set(p["w_out"])
    b_out_p = jnp.zeros((1, _HEAD_LANE_PAD), jnp.float32).at[:, :O].set(p["b_out"])
    bf = lambda w: w.astype(jnp.bfloat16)
    return {
        "wq": bf(p["wq"] * inv), "wk": bf(p["wk"]), "wv": bf(p["wv"]),
        "bq": p["bq"] * inv, "bk": p["bk"], "bv": p["bv"],
        "wo": bf(p["wo"]), "bo": p["bo"],
        "ln1_g": p["ln1_g"], "ln1_b": p["ln1_b"],
        "w1": bf(p["w1"]), "b1": p["b1"],
        "w2": bf(p["w2"]), "b2": p["b2"],
        "ln2_g": p["ln2_g"], "ln2_b": p["ln2_b"],
        "w_out": bf(w_out_p), "b_out": b_out_p,
    }


# ----------------------------------------------------------------------------
# pallas_call wrapper.
# ----------------------------------------------------------------------------
def fused_encoder_head(x_flat, x_cls, attn_bias, kp, *, batch_tile):
    BS, H = x_flat.shape
    B = x_cls.shape[0]
    S = BS // B
    O_pad = kp["w_out"].shape[-1]
    TB = batch_tile
    assert B % TB == 0, (B, TB)
    weights = [kp[n] for n in _WEIGHT_ORDER]

    def weight_spec(name, arr, use_buffered):
        idx = lambda b: (0, 0)                       # grid-invariant (all weights are 2-D)
        if use_buffered and name in _SINGLE_BUFFERED:
            try:
                return pl.BlockSpec(arr.shape, idx, pipeline_mode=pl.Buffered(1))
            except TypeError:
                # Narrow guard: only the BlockSpec construction (signature mismatch
                # in this JAX build), not the pallas_call itself.
                return pl.BlockSpec(arr.shape, idx)
        return pl.BlockSpec(arr.shape, idx)

    def build(use_buffered):
        in_specs = (
            [pl.BlockSpec((TB * S, H), lambda b: (b, 0)),    # x, flattened in wrapper
             pl.BlockSpec((TB, H), lambda b: (b, 0)),        # CLS rows, pre-sliced
             pl.BlockSpec((TB, 1, S), lambda b: (b, 0, 0))]  # additive attention bias
            + [weight_spec(n, a, use_buffered) for n, a in zip(_WEIGHT_ORDER, weights)]
        )
        return pl.pallas_call(
            fused_encoder_head_kernel,
            out_shape=jax.ShapeDtypeStruct((B, O_pad), jnp.float32),
            grid=(B // TB,),
            in_specs=in_specs,
            out_specs=pl.BlockSpec((TB, O_pad), lambda b: (b, 0)),
            compiler_params=pltpu.CompilerParams(
                # TODO(synk): on v7x verify the batch axis actually splits across the
                # 2 TensorCores; if not, switch to pltpu.CORE_PARALLEL / pl.core_map.
                dimension_semantics=("parallel",),
                vmem_limit_bytes=48 * 1024 * 1024),
        )

    try:
        # Preferred path: single-buffer the large grid-invariant weights.
        return build(True)(x_flat, x_cls, attn_bias, *weights)
    except Exception as e:  # pragma: no cover - only hit if Buffered(1) is unsupported
        # Loud (stderr) fallback so the executed buffering path is never ambiguous.
        print(f"[mlm_predictor] Buffered(1) weight specs rejected "
              f"({type(e).__name__}); retrying with default double-buffering",
              file=sys.stderr, flush=True)
        return build(False)(x_flat, x_cls, attn_bias, *weights)


def mlm_predictor_forward(encoded_inputs, params, *, batch_tile=8):
    """MLMPredictor.forward: backbone -> CLS hidden state -> Linear head."""
    input_ids = encoded_inputs["input_ids"]                            # (B, S) int32
    B, S = input_ids.shape
    O = params["w_out"].shape[-1]

    # Glue (plain JAX/XLA): embedding gather + positional add.  Cast once to
    # bf16 -- x is the only per-step streamed tensor, so this halves its
    # HBM->VMEM DMA bytes and its double-buffered VMEM footprint.
    x = (params["tok_emb"][input_ids] + params["pos_emb"][None, :, :]).astype(jnp.bfloat16)
    x_flat = x.reshape(B * S, int(x.shape[-1]))     # wrapper-side flatten (free metadata)
    x_cls = x[:, 0, :]                              # CLS rows pre-sliced in the wrapper

    mask = encoded_inputs.get("attention_mask")
    if mask is None:
        mask = jnp.ones((B, S), jnp.float32)
    attn_bias = ((mask.astype(jnp.float32) - 1.0) * 1e9).reshape(B, 1, S)

    kp = _prepare_kernel_weights(params)
    score_padded = fused_encoder_head(x_flat, x_cls, attn_bias, kp,
                                      batch_tile=batch_tile)           # (B, 128)
    return score_padded[:, :O]                                         # (B, O)


# ----------------------------------------------------------------------------
# Pure-JAX reference.  bf16_matmuls=True mirrors the kernel's mixed precision
# (bf16 streamed x and MXU inputs, f32 accumulation/statistics); False is the
# full-f32 semantics of the original PyTorch module.
# ----------------------------------------------------------------------------
def reference_forward(encoded_inputs, p, *, bf16_matmuls=False):
    H = p["wq"].shape[0]

    def mm(a, w):
        if bf16_matmuls:
            a, w = a.astype(jnp.bfloat16), w.astype(jnp.bfloat16)
        return jnp.dot(a, w, preferred_element_type=jnp.float32)

    def bmm(eq, a, b):
        if bf16_matmuls:
            a, b = a.astype(jnp.bfloat16), b.astype(jnp.bfloat16)
        return jnp.einsum(eq, a, b, preferred_element_type=jnp.float32)

    ids = encoded_inputs["input_ids"]
    x = p["tok_emb"][ids] + p["pos_emb"][None, :, :]
    if bf16_matmuls:
        x = x.astype(jnp.bfloat16).astype(jnp.float32)   # mirror the kernel's bf16 stream
    B, S, _ = x.shape
    mask = encoded_inputs.get("attention_mask")
    if mask is None:
        mask = jnp.ones((B, S), jnp.float32)
    bias = (mask.astype(jnp.float32) - 1.0) * 1e9        # (B, S)

    x2 = x.reshape(B * S, H).astype(jnp.float32)
    q = (mm(x2, p["wq"]) + p["bq"]).reshape(B, S, H)
    k = (mm(x2, p["wk"]) + p["bk"]).reshape(B, S, H)
    v = (mm(x2, p["wv"]) + p["bv"]).reshape(B, S, H)
    s = bmm("bqh,bkh->bqk", q, k) / jnp.sqrt(jnp.float32(H)) + bias[:, None, :]
    a = jax.nn.softmax(s, axis=-1)
    attn = bmm("bqk,bkh->bqh", a, v).reshape(B * S, H)
    attn = mm(attn, p["wo"]) + p["bo"]

    h = x2 + attn
    mu = h.mean(-1, keepdims=True)
    var = ((h - mu) ** 2).mean(-1, keepdims=True)
    h = (h - mu) * jax.lax.rsqrt(var + 1e-12) * p["ln1_g"] + p["ln1_b"]

    f = jax.nn.gelu(mm(h, p["w1"]) + p["b1"])
    f = mm(f, p["w2"]) + p["b2"]
    h2 = h + f
    mu2 = h2.mean(-1, keepdims=True)
    var2 = ((h2 - mu2) ** 2).mean(-1, keepdims=True)
    h2 = (h2 - mu2) * jax.lax.rsqrt(var2 + 1e-12) * p["ln2_g"] + p["ln2_b"]

    cls = h2.reshape(B, S, H)[:, 0, :]
    return mm(cls, p["w_out"]) + p["b_out"]


if __name__ == "__main__":
    # Small, lane/MXU-aligned demo: H and F multiples of 128 (production should
    # use multiples of 256 on v6e/v7x).  TB=8, S=8 -> grid (2,), even extent.
    B, S, H, F, V, O = 16, 8, 128, 256, 64, 1
    TB = 8

    key = jax.random.PRNGKey(0)
    ks = jax.random.split(key, 10)
    wscale = 0.05
    params = {
        "tok_emb": 0.5 * jax.random.normal(ks[0], (V, H), jnp.float32),
        "pos_emb": 0.5 * jax.random.normal(ks[1], (S, H), jnp.float32),
        "wq": wscale * jax.random.normal(ks[2], (H, H), jnp.float32),
        "wk": wscale * jax.random.normal(ks[3], (H, H), jnp.float32),
        "wv": wscale * jax.random.normal(ks[4], (H, H), jnp.float32),
        "bq": jnp.zeros((1, H), jnp.float32),
        "bk": jnp.zeros((1, H), jnp.float32),
        "bv": jnp.zeros((1, H), jnp.float32),
        "wo": wscale * jax.random.normal(ks[5], (H, H), jnp.float32),
        "bo": jnp.zeros((1, H), jnp.float32),
        "ln1_g": jnp.ones((1, H), jnp.float32),
        "ln1_b": jnp.zeros((1, H), jnp.float32),
        "w1": wscale * jax.random.normal(ks[6], (H, F), jnp.float32),
        "b1": jnp.zeros((1, F), jnp.float32),
        "w2": wscale * jax.random.normal(ks[7], (F, H), jnp.float32),
        "b2": jnp.zeros((1, H), jnp.float32),
        "ln2_g": jnp.ones((1, H), jnp.float32),
        "ln2_b": jnp.zeros((1, H), jnp.float32),
        # nn.Linear(hidden_size, outpout_size=1) head
        "w_out": wscale * jax.random.normal(ks[8], (H, O), jnp.float32),
        "b_out": 0.1 * jnp.ones((1, O), jnp.float32),
    }

    input_ids = jax.random.randint(ks[9], (B, S), 0, V, dtype=jnp.int32)
    # Attention mask with real padding (last 2 tokens masked on odd rows); the
    # CLS position is always attended.
    attention_mask = jnp.ones((B, S), jnp.int32).at[1::2, S - 2:].set(0)
    encoded_inputs = {"input_ids": input_ids, "attention_mask": attention_mask}

    score = mlm_predictor_forward(encoded_inputs, params, batch_tile=TB)
    score = jax.block_until_ready(score)
    assert score.shape == (B, O), score.shape

    # Tight check vs a reference mirroring the kernel's mixed precision.
    ref_mixed = reference_forward(encoded_inputs, params, bf16_matmuls=True)
    assert jnp.allclose(score, ref_mixed, atol=1e-2, rtol=1e-2), (
        float(jnp.max(jnp.abs(score - ref_mixed))))

    # Looser sanity check vs the original module's full-f32 semantics.
    ref_f32 = reference_forward(encoded_inputs, params, bf16_matmuls=False)
    assert jnp.allclose(score, ref_f32, atol=5e-2, rtol=5e-2), (
        float(jnp.max(jnp.abs(score - ref_f32))))

    print("KERNEL_OK")
</pallas_src>

<mosaic_0001>
module attributes {stable_mosaic.version = 11 : i64} {
  func.func @fused_encoder_head_kernel(%arg0: i32, %arg1: memref<64x128xbf16, #tpu.memory_space<vmem>>, %arg2: memref<8x128xbf16, #tpu.memory_space<vmem>>, %arg3: memref<8x1x8xf32, #tpu.memory_space<vmem>>, %arg4: memref<128x128xbf16, #tpu.memory_space<vmem>>, %arg5: memref<128x128xbf16, #tpu.memory_space<vmem>>, %arg6: memref<128x128xbf16, #tpu.memory_space<vmem>>, %arg7: memref<1x128xf32, #tpu.memory_space<vmem>>, %arg8: memref<1x128xf32, #tpu.memory_space<vmem>>, %arg9: memref<1x128xf32, #tpu.memory_space<vmem>>, %arg10: memref<128x128xbf16, #tpu.memory_space<vmem>>, %arg11: memref<1x128xf32, #tpu.memory_space<vmem>>, %arg12: memref<1x128xf32, #tpu.memory_space<vmem>>, %arg13: memref<1x128xf32, #tpu.memory_space<vmem>>, %arg14: memref<128x256xbf16, #tpu.memory_space<vmem>>, %arg15: memref<1x256xf32, #tpu.memory_space<vmem>>, %arg16: memref<256x128xbf16, #tpu.memory_space<vmem>>, %arg17: memref<1x128xf32, #tpu.memory_space<vmem>>, %arg18: memref<1x128xf32, #tpu.memory_space<vmem>>, %arg19: memref<1x128xf32, #tpu.memory_space<vmem>>, %arg20: memref<128x128xbf16, #tpu.memory_space<vmem>>, %arg21: memref<1x128xf32, #tpu.memory_space<vmem>>, %arg22: memref<8x128xf32, #tpu.memory_space<vmem>>) attributes {dimension_semantics = [#tpu.dimension_semantics<parallel>], iteration_bounds = array<i64: 2>, scalar_prefetch = 0 : i64, scratch_operands = 0 : i64, tpu.core_type = #tpu.core_type<tc>, window_params = [{transform_indices = @transform_0, window_bounds = array<i64: 64, 128>}, {transform_indices = @transform_1, window_bounds = array<i64: 8, 128>}, {transform_indices = @transform_2, window_bounds = array<i64: 8, 1, 8>}, {pipeline_mode = #tpu.pipeline_mode<synchronous>, transform_indices = @transform_3, window_bounds = array<i64: 128, 128>}, {pipeline_mode = #tpu.pipeline_mode<synchronous>, transform_indices = @transform_4, window_bounds = array<i64: 128, 128>}, {pipeline_mode = #tpu.pipeline_mode<synchronous>, transform_indices = @transform_5, window_bounds = array<i64: 128, 128>}, {pipeline_mode = #tpu.pipeline_mode<synchronous>, transform_indices = @transform_6, window_bounds = array<i64: 1, 128>}, {pipeline_mode = #tpu.pipeline_mode<synchronous>, transform_indices = @transform_7, window_bounds = array<i64: 1, 128>}, {pipeline_mode = #tpu.pipeline_mode<synchronous>, transform_indices = @transform_8, window_bounds = array<i64: 1, 128>}, {pipeline_mode = #tpu.pipeline_mode<synchronous>, transform_indices = @transform_9, window_bounds = array<i64: 128, 128>}, {pipeline_mode = #tpu.pipeline_mode<synchronous>, transform_indices = @transform_10, window_bounds = array<i64: 1, 128>}, {pipeline_mode = #tpu.pipeline_mode<synchronous>, transform_indices = @transform_11, window_bounds = array<i64: 1, 128>}, {pipeline_mode = #tpu.pipeline_mode<synchronous>, transform_indices = @transform_12, window_bounds = array<i64: 1, 128>}, {pipeline_mode = #tpu.pipeline_mode<synchronous>, transform_indices = @transform_13, window_bounds = array<i64: 128, 256>}, {pipeline_mode = #tpu.pipeline_mode<synchronous>, transform_indices = @transform_14, window_bounds = array<i64: 1, 256>}, {pipeline_mode = #tpu.pipeline_mode<synchronous>, transform_indices = @transform_15, window_bounds = array<i64: 256, 128>}, {pipeline_mode = #tpu.pipeline_mode<synchronous>, transform_indices = @transform_16, window_bounds = array<i64: 1, 128>}, {pipeline_mode = #tpu.pipeline_mode<synchronous>, transform_indices = @transform_17, window_bounds = array<i64: 1, 128>}, {pipeline_mode = #tpu.pipeline_mode<synchronous>, transform_indices = @transform_18, window_bounds = array<i64: 1, 128>}, {pipeline_mode = #tpu.pipeline_mode<synchronous>, transform_indices = @transform_19, window_bounds = array<i64: 128, 128>}, {pipeline_mode = #tpu.pipeline_mode<synchronous>, transform_indices = @transform_20, window_bounds = array<i64: 1, 128>}, {transform_indices = @transform_21, window_bounds = array<i64: 8, 128>}]} {
    %c0 = arith.constant 0 : index
    %c0_0 = arith.constant 0 : index
    %0 = vector.load %arg1[%c0, %c0_0] : memref<64x128xbf16, #tpu.memory_space<vmem>>, vector<64x128xbf16>
    %c0_1 = arith.constant 0 : index
    %c0_2 = arith.constant 0 : index
    %1 = vector.load %arg5[%c0_1, %c0_2] : memref<128x128xbf16, #tpu.memory_space<vmem>>, vector<128x128xbf16>
    %cst = arith.constant dense<0.000000e+00> : vector<64x128xf32>
    %2 = tpu.matmul %0, %1, %cst {dimension_numbers = #tpu.dot_dimension_numbers<[1], [0], [0], [1], [0, 0, 1, 1], [], []>} : vector<64x128xbf16>, vector<128x128xbf16>, vector<64x128xf32> -> vector<64x128xf32>
    %c0_3 = arith.constant 0 : index
    %c0_4 = arith.constant 0 : index
    %3 = vector.load %arg8[%c0_3, %c0_4] : memref<1x128xf32, #tpu.memory_space<vmem>>, vector<1x128xf32>
    %4 = vector.broadcast %3 : vector<1x128xf32> to vector<64x128xf32>
    %5 = arith.addf %2, %4 : vector<64x128xf32>
    %c0_5 = arith.constant 0 : index
    %c0_6 = arith.constant 0 : index
    %6 = vector.load %arg6[%c0_5, %c0_6] : memref<128x128xbf16, #tpu.memory_space<vmem>>, vector<128x128xbf16>
    %cst_7 = arith.constant dense<0.000000e+00> : vector<64x128xf32>
    %7 = tpu.matmul %0, %6, %cst_7 {dimension_numbers = #tpu.dot_dimension_numbers<[1], [0], [0], [1], [0, 0, 1, 1], [], []>} : vector<64x128xbf16>, vector<128x128xbf16>, vector<64x128xf32> -> vector<64x128xf32>
    %c0_8 = arith.constant 0 : index
    %c0_9 = arith.constant 0 : index
    %8 = vector.load %arg9[%c0_8, %c0_9] : memref<1x128xf32, #tpu.memory_space<vmem>>, vector<1x128xf32>
    %9 = vector.broadcast %8 : vector<1x128xf32> to vector<64x128xf32>
    %10 = arith.addf %7, %9 : vector<64x128xf32>
    %11 = vector.shape_cast %5 : vector<64x128xf32> to vector<8x8x128xf32>
    %12 = arith.truncf %11 : vector<8x8x128xf32> to vector<8x8x128xbf16>
    %13 = vector.shape_cast %10 : vector<64x128xf32> to vector<8x8x128xf32>
    %14 = arith.truncf %13 : vector<8x8x128xf32> to vector<8x8x128xbf16>
    %c0_10 = arith.constant 0 : index
    %c0_11 = arith.constant 0 : index
    %15 = vector.load %arg2[%c0_10, %c0_11] : memref<8x128xbf16, #tpu.memory_space<vmem>>, vector<8x128xbf16>
    %c0_12 = arith.constant 0 : index
    %c0_13 = arith.constant 0 : index
    %16 = vector.load %arg4[%c0_12, %c0_13] : memref<128x128xbf16, #tpu.memory_space<vmem>>, vector<128x128xbf16>
    %cst_14 = arith.constant dense<0.000000e+00> : vector<8x128xf32>
    %17 = tpu.matmul %15, %16, %cst_14 {dimension_numbers = #tpu.dot_dimension_numbers<[1], [0], [0], [1], [0, 0, 1, 1], [], []>} : vector<8x128xbf16>, vector<128x128xbf16>, vector<8x128xf32> -> vector<8x128xf32>
    %c0_15 = arith.constant 0 : index
    %c0_16 = arith.constant 0 : index
    %18 = vector.load %arg7[%c0_15, %c0_16] : memref<1x128xf32, #tpu.memory_space<vmem>>, vector<1x128xf32>
    %19 = vector.broadcast %18 : vector<1x128xf32> to vector<8x128xf32>
    %20 = arith.addf %17, %19 : vector<8x128xf32>
    %21 = arith.truncf %20 : vector<8x128xf32> to vector<8x128xbf16>
    %22 = vector.shape_cast %21 : vector<8x128xbf16> to vector<8x1x128xbf16>
    "tpu.trace_start"() <{level = 10 : i32, message = "bqh,bkh->bqk"}> : () -> ()
    %cst_17 = arith.constant dense<0.000000e+00> : vector<8x1x8xf32>
    %23 = tpu.matmul %22, %12, %cst_17 {dimension_numbers = #tpu.dot_dimension_numbers<[2], [2], [1], [1], [0, 0, 0, 1, 1, 1], [0], [0]>} : vector<8x1x128xbf16>, vector<8x8x128xbf16>, vector<8x1x8xf32> -> vector<8x1x8xf32>
    "tpu.trace_stop"() : () -> ()
    %c0_18 = arith.constant 0 : index
    %c0_19 = arith.constant 0 : index
    %c0_20 = arith.constant 0 : index
    %24 = vector.load %arg3[%c0_18, %c0_19, %c0_20] : memref<8x1x8xf32, #tpu.memory_space<vmem>>, vector<8x1x8xf32>
    %25 = arith.addf %23, %24 : vector<8x1x8xf32>
    %cst_21 = arith.constant dense<0xFF800000> : vector<8x1xf32>
    %26 = vector.multi_reduction <maximumf>, %25, %cst_21 [2] : vector<8x1x8xf32> to vector<8x1xf32>
    %27 = vector.shape_cast %26 : vector<8x1xf32> to vector<8x1x1xf32>
    %28 = vector.broadcast %27 : vector<8x1x1xf32> to vector<8x1x8xf32>
    %29 = arith.subf %25, %28 : vector<8x1x8xf32>
    %30 = math.exp %29 : vector<8x1x8xf32>
    %cst_22 = arith.constant dense<0.000000e+00> : vector<8x1xf32>
    %31 = vector.multi_reduction <add>, %30, %cst_22 [2] : vector<8x1x8xf32> to vector<8x1xf32>
    %32 = vector.shape_cast %31 : vector<8x1xf32> to vector<8x1x1xf32>
    %33 = tpu.reciprocal %32 {approx = true} : vector<8x1x1xf32> -> vector<8x1x1xf32>
    %34 = vector.broadcast %33 : vector<8x1x1xf32> to vector<8x1x8xf32>
    %35 = arith.mulf %30, %34 : vector<8x1x8xf32>
    %36 = arith.truncf %35 : vector<8x1x8xf32> to vector<8x1x8xbf16>
    "tpu.trace_start"() <{level = 10 : i32, message = "bqk,bkh->bqh"}> : () -> ()
    %cst_23 = arith.constant dense<0.000000e+00> : vector<8x1x128xf32>
    %37 = tpu.matmul %36, %14, %cst_23 {dimension_numbers = #tpu.dot_dimension_numbers<[2], [1], [1], [2], [0, 0, 0, 1, 1, 2], [0], [0]>} : vector<8x1x8xbf16>, vector<8x8x128xbf16>, vector<8x1x128xf32> -> vector<8x1x128xf32>
    "tpu.trace_stop"() : () -> ()
    %38 = vector.shape_cast %37 : vector<8x1x128xf32> to vector<8x128xf32>
    %39 = arith.truncf %38 : vector<8x128xf32> to vector<8x128xbf16>
    %c0_24 = arith.constant 0 : index
    %c0_25 = arith.constant 0 : index
    %40 = vector.load %arg10[%c0_24, %c0_25] : memref<128x128xbf16, #tpu.memory_space<vmem>>, vector<128x128xbf16>
    %cst_26 = arith.constant dense<0.000000e+00> : vector<8x128xf32>
    %41 = tpu.matmul %39, %40, %cst_26 {dimension_numbers = #tpu.dot_dimension_numbers<[1], [0], [0], [1], [0, 0, 1, 1], [], []>} : vector<8x128xbf16>, vector<128x128xbf16>, vector<8x128xf32> -> vector<8x128xf32>
    %c0_27 = arith.constant 0 : index
    %c0_28 = arith.constant 0 : index
    %42 = vector.load %arg11[%c0_27, %c0_28] : memref<1x128xf32, #tpu.memory_space<vmem>>, vector<1x128xf32>
    %43 = vector.broadcast %42 : vector<1x128xf32> to vector<8x128xf32>
    %44 = arith.addf %41, %43 : vector<8x128xf32>
    %45 = arith.extf %15 : vector<8x128xbf16> to vector<8x128xf32>
    %46 = arith.addf %45, %44 : vector<8x128xf32>
    %cst_29 = arith.constant dense<0.000000e+00> : vector<8xf32>
    %47 = vector.multi_reduction <add>, %46, %cst_29 [1] : vector<8x128xf32> to vector<8xf32>
    %48 = vector.shape_cast %47 : vector<8xf32> to vector<8x1xf32>
    %cst_30 = arith.constant 1.280000e+02 : f32
    %49 = vector.broadcast %cst_30 : f32 to vector<8x1xf32>
    %50 = arith.divf %48, %49 : vector<8x1xf32>
    %51 = vector.broadcast %50 : vector<8x1xf32> to vector<8x128xf32>
    %52 = arith.subf %46, %51 : vector<8x128xf32>
    %53 = arith.mulf %52, %52 : vector<8x128xf32>
    %cst_31 = arith.constant dense<0.000000e+00> : vector<8xf32>
    %54 = vector.multi_reduction <add>, %53, %cst_31 [1] : vector<8x128xf32> to vector<8xf32>
    %55 = vector.shape_cast %54 : vector<8xf32> to vector<8x1xf32>
    %cst_32 = arith.constant 1.280000e+02 : f32
    %56 = vector.broadcast %cst_32 : f32 to vector<8x1xf32>
    %57 = arith.divf %55, %56 : vector<8x1xf32>
    %58 = vector.broadcast %50 : vector<8x1xf32> to vector<8x128xf32>
    %59 = arith.subf %46, %58 : vector<8x128xf32>
    %cst_33 = arith.constant 9.99999996E-13 : f32
    %60 = vector.broadcast %cst_33 : f32 to vector<8x1xf32>
    %61 = arith.addf %57, %60 : vector<8x1xf32>
    %62 = math.rsqrt %61 : vector<8x1xf32>
    %63 = vector.broadcast %62 : vector<8x1xf32> to vector<8x128xf32>
    %64 = arith.mulf %59, %63 : vector<8x128xf32>
    %c0_34 = arith.constant 0 : index
    %c0_35 = arith.constant 0 : index
    %65 = vector.load %arg12[%c0_34, %c0_35] : memref<1x128xf32, #tpu.memory_space<vmem>>, vector<1x128xf32>
    %66 = vector.broadcast %65 : vector<1x128xf32> to vector<8x128xf32>
    %67 = arith.mulf %64, %66 : vector<8x128xf32>
    %c0_36 = arith.constant 0 : index
    %c0_37 = arith.constant 0 : index
    %68 = vector.load %arg13[%c0_36, %c0_37] : memref<1x128xf32, #tpu.memory_space<vmem>>, vector<1x128xf32>
    %69 = vector.broadcast %68 : vector<1x128xf32> to vector<8x128xf32>
    %70 = arith.addf %67, %69 : vector<8x128xf32>
    %71 = arith.truncf %70 : vector<8x128xf32> to vector<8x128xbf16>
    %c0_38 = arith.constant 0 : index
    %c0_39 = arith.constant 0 : index
    %72 = vector.load %arg14[%c0_38, %c0_39] : memref<128x256xbf16, #tpu.memory_space<vmem>>, vector<128x256xbf16>
    %cst_40 = arith.constant dense<0.000000e+00> : vector<8x256xf32>
    %73 = tpu.matmul %71, %72, %cst_40 {dimension_numbers = #tpu.dot_dimension_numbers<[1], [0], [0], [1], [0, 0, 1, 1], [], []>} : vector<8x128xbf16>, vector<128x256xbf16>, vector<8x256xf32> -> vector<8x256xf32>
    %c0_41 = arith.constant 0 : index
    %c0_42 = arith.constant 0 : index
    %74 = vector.load %arg15[%c0_41, %c0_42] : memref<1x256xf32, #tpu.memory_space<vmem>>, vector<1x256xf32>
    %75 = vector.broadcast %74 : vector<1x256xf32> to vector<8x256xf32>
    %76 = arith.addf %73, %75 : vector<8x256xf32>
    %77 = arith.mulf %76, %76 : vector<8x256xf32>
    %78 = arith.mulf %76, %77 : vector<8x256xf32>
    %cst_43 = arith.constant 4.471500e-02 : f32
    %79 = vector.broadcast %cst_43 : f32 to vector<8x256xf32>
    %80 = arith.mulf %79, %78 : vector<8x256xf32>
    %81 = arith.addf %76, %80 : vector<8x256xf32>
    %cst_44 = arith.constant 0.797884583 : f32
    %82 = vector.broadcast %cst_44 : f32 to vector<8x256xf32>
    %83 = arith.mulf %82, %81 : vector<8x256xf32>
    %84 = math.tanh %83 : vector<8x256xf32>
    %cst_45 = arith.constant 1.000000e+00 : f32
    %85 = vector.broadcast %cst_45 : f32 to vector<8x256xf32>
    %86 = arith.addf %85, %84 : vector<8x256xf32>
    %cst_46 = arith.constant 5.000000e-01 : f32
    %87 = vector.broadcast %cst_46 : f32 to vector<8x256xf32>
    %88 = arith.mulf %87, %86 : vector<8x256xf32>
    %89 = arith.mulf %76, %88 : vector<8x256xf32>
    %90 = arith.truncf %89 : vector<8x256xf32> to vector<8x256xbf16>
    %c0_47 = arith.constant 0 : index
    %c0_48 = arith.constant 0 : index
    %91 = vector.load %arg16[%c0_47, %c0_48] : memref<256x128xbf16, #tpu.memory_space<vmem>>, vector<256x128xbf16>
    %cst_49 = arith.constant dense<0.000000e+00> : vector<8x128xf32>
    %92 = tpu.matmul %90, %91, %cst_49 {dimension_numbers = #tpu.dot_dimension_numbers<[1], [0], [0], [1], [0, 0, 1, 1], [], []>} : vector<8x256xbf16>, vector<256x128xbf16>, vector<8x128xf32> -> vector<8x128xf32>
    %c0_50 = arith.constant 0 : index
    %c0_51 = arith.constant 0 : index
    %93 = vector.load %arg17[%c0_50, %c0_51] : memref<1x128xf32, #tpu.memory_space<vmem>>, vector<1x128xf32>
    %94 = vector.broadcast %93 : vector<1x128xf32> to vector<8x128xf32>
    %95 = arith.addf %92, %94 : vector<8x128xf32>
    %96 = arith.addf %70, %95 : vector<8x128xf32>
    %cst_52 = arith.constant dense<0.000000e+00> : vector<8xf32>
    %97 = vector.multi_reduction <add>, %96, %cst_52 [1] : vector<8x128xf32> to vector<8xf32>
    %98 = vector.shape_cast %97 : vector<8xf32> to vector<8x1xf32>
    %cst_53 = arith.constant 1.280000e+02 : f32
    %99 = vector.broadcast %cst_53 : f32 to vector<8x1xf32>
    %100 = arith.divf %98, %99 : vector<8x1xf32>
    %101 = vector.broadcast %100 : vector<8x1xf32> to vector<8x128xf32>
    %102 = arith.subf %96, %101 : vector<8x128xf32>
    %103 = arith.mulf %102, %102 : vector<8x128xf32>
    %cst_54 = arith.constant dense<0.000000e+00> : vector<8xf32>
    %104 = vector.multi_reduction <add>, %103, %cst_54 [1] : vector<8x128xf32> to vector<8xf32>
    %105 = vector.shape_cast %104 : vector<8xf32> to vector<8x1xf32>
    %cst_55 = arith.constant 1.280000e+02 : f32
    %106 = vector.broadcast %cst_55 : f32 to vector<8x1xf32>
    %107 = arith.divf %105, %106 : vector<8x1xf32>
    %108 = vector.broadcast %100 : vector<8x1xf32> to vector<8x128xf32>
    %109 = arith.subf %96, %108 : vector<8x128xf32>
    %cst_56 = arith.constant 9.99999996E-13 : f32
    %110 = vector.broadcast %cst_56 : f32 to vector<8x1xf32>
    %111 = arith.addf %107, %110 : vector<8x1xf32>
    %112 = math.rsqrt %111 : vector<8x1xf32>
    %113 = vector.broadcast %112 : vector<8x1xf32> to vector<8x128xf32>
    %114 = arith.mulf %109, %113 : vector<8x128xf32>
    %c0_57 = arith.constant 0 : index
    %c0_58 = arith.constant 0 : index
    %115 = vector.load %arg18[%c0_57, %c0_58] : memref<1x128xf32, #tpu.memory_space<vmem>>, vector<1x128xf32>
    %116 = vector.broadcast %115 : vector<1x128xf32> to vector<8x128xf32>
    %117 = arith.mulf %114, %116 : vector<8x128xf32>
    %c0_59 = arith.constant 0 : index
    %c0_60 = arith.constant 0 : index
    %118 = vector.load %arg19[%c0_59, %c0_60] : memref<1x128xf32, #tpu.memory_space<vmem>>, vector<1x128xf32>
    %119 = vector.broadcast %118 : vector<1x128xf32> to vector<8x128xf32>
    %120 = arith.addf %117, %119 : vector<8x128xf32>
    %121 = arith.truncf %120 : vector<8x128xf32> to vector<8x128xbf16>
    %c0_61 = arith.constant 0 : index
    %c0_62 = arith.constant 0 : index
    %122 = vector.load %arg20[%c0_61, %c0_62] : memref<128x128xbf16, #tpu.memory_space<vmem>>, vector<128x128xbf16>
    %cst_63 = arith.constant dense<0.000000e+00> : vector<8x128xf32>
    %123 = tpu.matmul %121, %122, %cst_63 {dimension_numbers = #tpu.dot_dimension_numbers<[1], [0], [0], [1], [0, 0, 1, 1], [], []>} : vector<8x128xbf16>, vector<128x128xbf16>, vector<8x128xf32> -> vector<8x128xf32>
    %c0_64 = arith.constant 0 : index
    %c0_65 = arith.constant 0 : index
    %124 = vector.load %arg21[%c0_64, %c0_65] : memref<1x128xf32, #tpu.memory_space<vmem>>, vector<1x128xf32>
    %125 = vector.broadcast %124 : vector<1x128xf32> to vector<8x128xf32>
    %126 = arith.addf %123, %125 : vector<8x128xf32>
    %c0_66 = arith.constant 0 : index
    %c0_67 = arith.constant 0 : index
    %127 = vector.load %arg22[%c0_66, %c0_67] : memref<8x128xf32, #tpu.memory_space<vmem>>, vector<8x128xf32>
    tpu.vector_store %arg22[%c0_66, %c0_67], %126 {strides = array<i32>} : memref<8x128xf32, #tpu.memory_space<vmem>>, vector<8x128xf32>,
    return
  }
  func.func @transform_0(%arg0: i32) -> (i32, i32) {
    %c0_i32 = arith.constant 0 : i32
    %c0_i32_0 = arith.constant 0 : i32
    return %arg0, %c0_i32 : i32, i32
  }
  func.func @transform_1(%arg0: i32) -> (i32, i32) {
    %c0_i32 = arith.constant 0 : i32
    %c0_i32_0 = arith.constant 0 : i32
    return %arg0, %c0_i32 : i32, i32
  }
  func.func @transform_2(%arg0: i32) -> (i32, i32, i32) {
    %c0_i32 = arith.constant 0 : i32
    %c0_i32_0 = arith.constant 0 : i32
    %c0_i32_1 = arith.constant 0 : i32
    return %arg0, %c0_i32, %c0_i32_0 : i32, i32, i32
  }
  func.func @transform_3(%arg0: i32) -> (i32, i32) {
    %c0_i32 = arith.constant 0 : i32
    %c0_i32_0 = arith.constant 0 : i32
    %c0_i32_1 = arith.constant 0 : i32
    return %c0_i32, %c0_i32_0 : i32, i32
  }
  func.func @transform_4(%arg0: i32) -> (i32, i32) {
    %c0_i32 = arith.constant 0 : i32
    %c0_i32_0 = arith.constant 0 : i32
    %c0_i32_1 = arith.constant 0 : i32
    return %c0_i32, %c0_i32_0 : i32, i32
  }
  func.func @transform_5(%arg0: i32) -> (i32, i32) {
    %c0_i32 = arith.constant 0 : i32
    %c0_i32_0 = arith.constant 0 : i32
    %c0_i32_1 = arith.constant 0 : i32
    return %c0_i32, %c0_i32_0 : i32, i32
  }
  func.func @transform_6(%arg0: i32) -> (i32, i32) {
    %c0_i32 = arith.constant 0 : i32
    %c0_i32_0 = arith.constant 0 : i32
    %c0_i32_1 = arith.constant 0 : i32
    return %c0_i32, %c0_i32_0 : i32, i32
  }
  func.func @transform_7(%arg0: i32) -> (i32, i32) {
    %c0_i32 = arith.constant 0 : i32
    %c0_i32_0 = arith.constant 0 : i32
    %c0_i32_1 = arith.constant 0 : i32
    return %c0_i32, %c0_i32_0 : i32, i32
  }
  func.func @transform_8(%arg0: i32) -> (i32, i32) {
    %c0_i32 = arith.constant 0 : i32
    %c0_i32_0 = arith.constant 0 : i32
    %c0_i32_1 = arith.constant 0 : i32
    return %c0_i32, %c0_i32_0 : i32, i32
  }
  func.func @transform_9(%arg0: i32) -> (i32, i32) {
    %c0_i32 = arith.constant 0 : i32
    %c0_i32_0 = arith.constant 0 : i32
    %c0_i32_1 = arith.constant 0 : i32
    return %c0_i32, %c0_i32_0 : i32, i32
  }
  func.func @transform_10(%arg0: i32) -> (i32, i32) {
    %c0_i32 = arith.constant 0 : i32
    %c0_i32_0 = arith.constant 0 : i32
    %c0_i32_1 = arith.constant 0 : i32
    return %c0_i32, %c0_i32_0 : i32, i32
  }
  func.func @transform_11(%arg0: i32) -> (i32, i32) {
    %c0_i32 = arith.constant 0 : i32
    %c0_i32_0 = arith.constant 0 : i32
    %c0_i32_1 = arith.constant 0 : i32
    return %c0_i32, %c0_i32_0 : i32, i32
  }
  func.func @transform_12(%arg0: i32) -> (i32, i32) {
    %c0_i32 = arith.constant 0 : i32
    %c0_i32_0 = arith.constant 0 : i32
    %c0_i32_1 = arith.constant 0 : i32
    return %c0_i32, %c0_i32_0 : i32, i32
  }
  func.func @transform_13(%arg0: i32) -> (i32, i32) {
    %c0_i32 = arith.constant 0 : i32
    %c0_i32_0 = arith.constant 0 : i32
    %c0_i32_1 = arith.constant 0 : i32
    return %c0_i32, %c0_i32_0 : i32, i32
  }
  func.func @transform_14(%arg0: i32) -> (i32, i32) {
    %c0_i32 = arith.constant 0 : i32
    %c0_i32_0 = arith.constant 0 : i32
    %c0_i32_1 = arith.constant 0 : i32
    return %c0_i32, %c0_i32_0 : i32, i32
  }
  func.func @transform_15(%arg0: i32) -> (i32, i32) {
    %c0_i32 = arith.constant 0 : i32
    %c0_i32_0 = arith.constant 0 : i32
    %c0_i32_1 = arith.constant 0 : i32
    return %c0_i32, %c0_i32_0 : i32, i32
  }
  func.func @transform_16(%arg0: i32) -> (i32, i32) {
    %c0_i32 = arith.constant 0 : i32
    %c0_i32_0 = arith.constant 0 : i32
    %c0_i32_1 = arith.constant 0 : i32
    return %c0_i32, %c0_i32_0 : i32, i32
  }
  func.func @transform_17(%arg0: i32) -> (i32, i32) {
    %c0_i32 = arith.constant 0 : i32
    %c0_i32_0 = arith.constant 0 : i32
    %c0_i32_1 = arith.constant 0 : i32
    return %c0_i32, %c0_i32_0 : i32, i32
  }
  func.func @transform_18(%arg0: i32) -> (i32, i32) {
    %c0_i32 = arith.constant 0 : i32
    %c0_i32_0 = arith.constant 0 : i32
    %c0_i32_1 = arith.constant 0 : i32
    return %c0_i32, %c0_i32_0 : i32, i32
  }
  func.func @transform_19(%arg0: i32) -> (i32, i32) {
    %c0_i32 = arith.constant 0 : i32
    %c0_i32_0 = arith.constant 0 : i32
    %c0_i32_1 = arith.constant 0 : i32
    return %c0_i32, %c0_i32_0 : i32, i32
  }
  func.func @transform_20(%arg0: i32) -> (i32, i32) {
    %c0_i32 = arith.constant 0 : i32
    %c0_i32_0 = arith.constant 0 : i32
    %c0_i32_1 = arith.constant 0 : i32
    return %c0_i32, %c0_i32_0 : i32, i32
  }
  func.func @transform_21(%arg0: i32) -> (i32, i32) {
    %c0_i32 = arith.constant 0 : i32
    %c0_i32_0 = arith.constant 0 : i32
    return %arg0, %c0_i32 : i32, i32
  }
}

module attributes {stable_mosaic.version = 11 : i64} {
  func.func @fused_encoder_head_kernel(%arg0: i32, %arg1: memref<64x128xbf16, #tpu.memory_space<vmem>>, %arg2: memref<8x128xbf16, #tpu.memory_space<vmem>>, %arg3: memref<8x1x8xf32, #tpu.memory_space<vmem>>, %arg4: memref<128x128xbf16, #tpu.memory_space<vmem>>, %arg5: memref<128x128xbf16, #tpu.memory_space<vmem>>, %arg6: memref<128x128xbf16, #tpu.memory_space<vmem>>, %arg7: memref<1x128xf32, #tpu.memory_space<vmem>>, %arg8: memref<1x128xf32, #tpu.memory_space<vmem>>, %arg9: memref<1x128xf32, #tpu.memory_space<vmem>>, %arg10: memref<128x128xbf16, #tpu.memory_space<vmem>>, %arg11: memref<1x128xf32, #tpu.memory_space<vmem>>, %arg12: memref<1x128xf32, #tpu.memory_space<vmem>>, %arg13: memref<1x128xf32, #tpu.memory_space<vmem>>, %arg14: memref<128x256xbf16, #tpu.memory_space<vmem>>, %arg15: memref<1x256xf32, #tpu.memory_space<vmem>>, %arg16: memref<256x128xbf16, #tpu.memory_space<vmem>>, %arg17: memref<1x128xf32, #tpu.memory_space<vmem>>, %arg18: memref<1x128xf32, #tpu.memory_space<vmem>>, %arg19: memref<1x128xf32, #tpu.memory_space<vmem>>, %arg20: memref<128x128xbf16, #tpu.memory_space<vmem>>, %arg21: memref<1x128xf32, #tpu.memory_space<vmem>>, %arg22: memref<8x128xf32, #tpu.memory_space<vmem>>) attributes {dimension_semantics = [#tpu.dimension_semantics<parallel>], iteration_bounds = array<i64: 2>, scalar_prefetch = 0 : i64, scratch_operands = 0 : i64, tpu.core_type = #tpu.core_type<tc>, window_params = [{transform_indices = @transform_0, window_bounds = array<i64: 64, 128>}, {transform_indices = @transform_1, window_bounds = array<i64: 8, 128>}, {transform_indices = @transform_2, window_bounds = array<i64: 8, 1, 8>}, {pipeline_mode = #tpu.pipeline_mode<synchronous>, transform_indices = @transform_3, window_bounds = array<i64: 128, 128>}, {pipeline_mode = #tpu.pipeline_mode<synchronous>, transform_indices = @transform_4, window_bounds = array<i64: 128, 128>}, {pipeline_mode = #tpu.pipeline_mode<synchronous>, transform_indices = @transform_5, window_bounds = array<i64: 128, 128>}, {pipeline_mode = #tpu.pipeline_mode<synchronous>, transform_indices = @transform_6, window_bounds = array<i64: 1, 128>}, {pipeline_mode = #tpu.pipeline_mode<synchronous>, transform_indices = @transform_7, window_bounds = array<i64: 1, 128>}, {pipeline_mode = #tpu.pipeline_mode<synchronous>, transform_indices = @transform_8, window_bounds = array<i64: 1, 128>}, {pipeline_mode = #tpu.pipeline_mode<synchronous>, transform_indices = @transform_9, window_bounds = array<i64: 128, 128>}, {pipeline_mode = #tpu.pipeline_mode<synchronous>, transform_indices = @transform_10, window_bounds = array<i64: 1, 128>}, {pipeline_mode = #tpu.pipeline_mode<synchronous>, transform_indices = @transform_11, window_bounds = array<i64: 1, 128>}, {pipeline_mode = #tpu.pipeline_mode<synchronous>, transform_indices = @transform_12, window_bounds = array<i64: 1, 128>}, {pipeline_mode = #tpu.pipeline_mode<synchronous>, transform_indices = @transform_13, window_bounds = array<i64: 128, 256>}, {pipeline_mode = #tpu.pipeline_mode<synchronous>, transform_indices = @transform_14, window_bounds = array<i64: 1, 256>}, {pipeline_mode = #tpu.pipeline_mode<synchronous>, transform_indices = @transform_15, window_bounds = array<i64: 256, 128>}, {pipeline_mode = #tpu.pipeline_mode<synchronous>, transform_indices = @transform_16, window_bounds = array<i64: 1, 128>}, {pipeline_mode = #tpu.pipeline_mode<synchronous>, transform_indices = @transform_17, window_bounds = array<i64: 1, 128>}, {pipeline_mode = #tpu.pipeline_mode<synchronous>, transform_indices = @transform_18, window_bounds = array<i64: 1, 128>}, {pipeline_mode = #tpu.pipeline_mode<synchronous>, transform_indices = @transform_19, window_bounds = array<i64: 128, 128>}, {pipeline_mode = #tpu.pipeline_mode<synchronous>, transform_indices = @transform_20, window_bounds = array<i64: 1, 128>}, {transform_indices = @transform_21, window_bounds = array<i64: 8, 128>}]} {
    %c0 = arith.constant 0 : index
    %c0_0 = arith.constant 0 : index
    %0 = vector.load %arg1[%c0, %c0_0] : memref<64x128xbf16, #tpu.memory_space<vmem>>, vector<64x128xbf16>
    %c0_1 = arith.constant 0 : index
    %c0_2 = arith.constant 0 : index
    %1 = vector.load %arg5[%c0_1, %c0_2] : memref<128x128xbf16, #tpu.memory_space<vmem>>, vector<128x128xbf16>
    %cst = arith.constant dense<0.000000e+00> : vector<64x128xf32>
    %2 = tpu.matmul %0, %1, %cst {dimension_numbers = #tpu.dot_dimension_numbers<[1], [0], [0], [1], [0, 0, 1, 1], [], []>} : vector<64x128xbf16>, vector<128x128xbf16>, vector<64x128xf32> -> vector<64x128xf32>
    %c0_3 = arith.constant 0 : index
    %c0_4 = arith.constant 0 : index
    %3 = vector.load %arg8[%c0_3, %c0_4] : memref<1x128xf32, #tpu.memory_space<vmem>>, vector<1x128xf32>
    %4 = vector.broadcast %3 : vector<1x128xf32> to vector<64x128xf32>
    %5 = arith.addf %2, %4 : vector<64x128xf32>
    %c0_5 = arith.constant 0 : index
    %c0_6 = arith.constant 0 : index
    %6 = vector.load %arg6[%c0_5, %c0_6] : memref<128x128xbf16, #tpu.memory_space<vmem>>, vector<128x128xbf16>
    %cst_7 = arith.constant dense<0.000000e+00> : vector<64x128xf32>
    %7 = tpu.matmul %0, %6, %cst_7 {dimension_numbers = #tpu.dot_dimension_numbers<[1], [0], [0], [1], [0, 0, 1, 1], [], []>} : vector<64x128xbf16>, vector<128x128xbf16>, vector<64x128xf32> -> vector<64x128xf32>
    %c0_8 = arith.constant 0 : index
    %c0_9 = arith.constant 0 : index
    %8 = vector.load %arg9[%c0_8, %c0_9] : memref<1x128xf32, #tpu.memory_space<vmem>>, vector<1x128xf32>
    %9 = vector.broadcast %8 : vector<1x128xf32> to vector<64x128xf32>
    %10 = arith.addf %7, %9 : vector<64x128xf32>
    %11 = vector.shape_cast %5 : vector<64x128xf32> to vector<8x8x128xf32>
    %12 = arith.truncf %11 : vector<8x8x128xf32> to vector<8x8x128xbf16>
    %13 = vector.shape_cast %10 : vector<64x128xf32> to vector<8x8x128xf32>
    %14 = arith.truncf %13 : vector<8x8x128xf32> to vector<8x8x128xbf16>
    %c0_10 = arith.constant 0 : index
    %c0_11 = arith.constant 0 : index
    %15 = vector.load %arg2[%c0_10, %c0_11] : memref<8x128xbf16, #tpu.memory_space<vmem>>, vector<8x128xbf16>
    %c0_12 = arith.constant 0 : index
    %c0_13 = arith.constant 0 : index
    %16 = vector.load %arg4[%c0_12, %c0_13] : memref<128x128xbf16, #tpu.memory_space<vmem>>, vector<128x128xbf16>
    %cst_14 = arith.constant dense<0.000000e+00> : vector<8x128xf32>
    %17 = tpu.matmul %15, %16, %cst_14 {dimension_numbers = #tpu.dot_dimension_numbers<[1], [0], [0], [1], [0, 0, 1, 1], [], []>} : vector<8x128xbf16>, vector<128x128xbf16>, vector<8x128xf32> -> vector<8x128xf32>
    %c0_15 = arith.constant 0 : index
    %c0_16 = arith.constant 0 : index
    %18 = vector.load %arg7[%c0_15, %c0_16] : memref<1x128xf32, #tpu.memory_space<vmem>>, vector<1x128xf32>
    %19 = vector.broadcast %18 : vector<1x128xf32> to vector<8x128xf32>
    %20 = arith.addf %17, %19 : vector<8x128xf32>
    %21 = arith.truncf %20 : vector<8x128xf32> to vector<8x128xbf16>
    %22 = vector.shape_cast %21 : vector<8x128xbf16> to vector<8x1x128xbf16>
    "tpu.trace_start"() <{level = 10 : i32, message = "bqh,bkh->bqk"}> : () -> ()
    %cst_17 = arith.constant dense<0.000000e+00> : vector<8x1x8xf32>
    %23 = tpu.matmul %22, %12, %cst_17 {dimension_numbers = #tpu.dot_dimension_numbers<[2], [2], [1], [1], [0, 0, 0, 1, 1, 1], [0], [0]>} : vector<8x1x128xbf16>, vector<8x8x128xbf16>, vector<8x1x8xf32> -> vector<8x1x8xf32>
    "tpu.trace_stop"() : () -> ()
    %c0_18 = arith.constant 0 : index
    %c0_19 = arith.constant 0 : index
    %c0_20 = arith.constant 0 : index
    %24 = vector.load %arg3[%c0_18, %c0_19, %c0_20] : memref<8x1x8xf32, #tpu.memory_space<vmem>>, vector<8x1x8xf32>
    %25 = arith.addf %23, %24 : vector<8x1x8xf32>
    %cst_21 = arith.constant dense<0xFF800000> : vector<8x1xf32>
    %26 = vector.multi_reduction <maximumf>, %25, %cst_21 [2] : vector<8x1x8xf32> to vector<8x1xf32>
    %27 = vector.shape_cast %26 : vector<8x1xf32> to vector<8x1x1xf32>
    %28 = vector.broadcast %27 : vector<8x1x1xf32> to vector<8x1x8xf32>
    %29 = arith.subf %25, %28 : vector<8x1x8xf32>
    %30 = math.exp %29 : vector<8x1x8xf32>
    %cst_22 = arith.constant dense<0.000000e+00> : vector<8x1xf32>
    %31 = vector.multi_reduction <add>, %30, %cst_22 [2] : vector<8x1x8xf32> to vector<8x1xf32>
    %32 = vector.shape_cast %31 : vector<8x1xf32> to vector<8x1x1xf32>
    %33 = tpu.reciprocal %32 {approx = true} : vector<8x1x1xf32> -> vector<8x1x1xf32>
    %34 = vector.broadcast %33 : vector<8x1x1xf32> to vector<8x1x8xf32>
    %35 = arith.mulf %30, %34 : vector<8x1x8xf32>
    %36 = arith.truncf %35 : vector<8x1x8xf32> to vector<8x1x8xbf16>
    "tpu.trace_start"() <{level = 10 : i32, message = "bqk,bkh->bqh"}> : () -> ()
    %cst_23 = arith.constant dense<0.000000e+00> : vector<8x1x128xf32>
    %37 = tpu.matmul %36, %14, %cst_23 {dimension_numbers = #tpu.dot_dimension_numbers<[2], [1], [1], [2], [0, 0, 0, 1, 1, 2], [0], [0]>} : vector<8x1x8xbf16>, vector<8x8x128xbf16>, vector<8x1x128xf32> -> vector<8x1x128xf32>
    "tpu.trace_stop"() : () -> ()
    %38 = vector.shape_cast %37 : vector<8x1x128xf32> to vector<8x128xf32>
    %39 = arith.truncf %38 : vector<8x128xf32> to vector<8x128xbf16>
    %c0_24 = arith.constant 0 : index
    %c0_25 = arith.constant 0 : index
    %40 = vector.load %arg10[%c0_24, %c0_25] : memref<128x128xbf16, #tpu.memory_space<vmem>>, vector<128x128xbf16>
    %cst_26 = arith.constant dense<0.000000e+00> : vector<8x128xf32>
    %41 = tpu.matmul %39, %40, %cst_26 {dimension_numbers = #tpu.dot_dimension_numbers<[1], [0], [0], [1], [0, 0, 1, 1], [], []>} : vector<8x128xbf16>, vector<128x128xbf16>, vector<8x128xf32> -> vector<8x128xf32>
    %c0_27 = arith.constant 0 : index
    %c0_28 = arith.constant 0 : index
    %42 = vector.load %arg11[%c0_27, %c0_28] : memref<1x128xf32, #tpu.memory_space<vmem>>, vector<1x128xf32>
    %43 = vector.broadcast %42 : vector<1x128xf32> to vector<8x128xf32>
    %44 = arith.addf %41, %43 : vector<8x128xf32>
    %45 = arith.extf %15 : vector<8x128xbf16> to vector<8x128xf32>
    %46 = arith.addf %45, %44 : vector<8x128xf32>
    %cst_29 = arith.constant dense<0.000000e+00> : vector<8xf32>
    %47 = vector.multi_reduction <add>, %46, %cst_29 [1] : vector<8x128xf32> to vector<8xf32>
    %48 = vector.shape_cast %47 : vector<8xf32> to vector<8x1xf32>
    %cst_30 = arith.constant 1.280000e+02 : f32
    %49 = vector.broadcast %cst_30 : f32 to vector<8x1xf32>
    %50 = arith.divf %48, %49 : vector<8x1xf32>
    %51 = vector.broadcast %50 : vector<8x1xf32> to vector<8x128xf32>
    %52 = arith.subf %46, %51 : vector<8x128xf32>
    %53 = arith.mulf %52, %52 : vector<8x128xf32>
    %cst_31 = arith.constant dense<0.000000e+00> : vector<8xf32>
    %54 = vector.multi_reduction <add>, %53, %cst_31 [1] : vector<8x128xf32> to vector<8xf32>
    %55 = vector.shape_cast %54 : vector<8xf32> to vector<8x1xf32>
    %cst_32 = arith.constant 1.280000e+02 : f32
    %56 = vector.broadcast %cst_32 : f32 to vector<8x1xf32>
    %57 = arith.divf %55, %56 : vector<8x1xf32>
    %58 = vector.broadcast %50 : vector<8x1xf32> to vector<8x128xf32>
    %59 = arith.subf %46, %58 : vector<8x128xf32>
    %cst_33 = arith.constant 9.99999996E-13 : f32
    %60 = vector.broadcast %cst_33 : f32 to vector<8x1xf32>
    %61 = arith.addf %57, %60 : vector<8x1xf32>
    %62 = math.rsqrt %61 : vector<8x1xf32>
    %63 = vector.broadcast %62 : vector<8x1xf32> to vector<8x128xf32>
    %64 = arith.mulf %59, %63 : vector<8x128xf32>
    %c0_34 = arith.constant 0 : index
    %c0_35 = arith.constant 0 : index
    %65 = vector.load %arg12[%c0_34, %c0_35] : memref<1x128xf32, #tpu.memory_space<vmem>>, vector<1x128xf32>
    %66 = vector.broadcast %65 : vector<1x128xf32> to vector<8x128xf32>
    %67 = arith.mulf %64, %66 : vector<8x128xf32>
    %c0_36 = arith.constant 0 : index
    %c0_37 = arith.constant 0 : index
    %68 = vector.load %arg13[%c0_36, %c0_37] : memref<1x128xf32, #tpu.memory_space<vmem>>, vector<1x128xf32>
    %69 = vector.broadcast %68 : vector<1x128xf32> to vector<8x128xf32>
    %70 = arith.addf %67, %69 : vector<8x128xf32>
    %71 = arith.truncf %70 : vector<8x128xf32> to vector<8x128xbf16>
    %c0_38 = arith.constant 0 : index
    %c0_39 = arith.constant 0 : index
    %72 = vector.load %arg14[%c0_38, %c0_39] : memref<128x256xbf16, #tpu.memory_space<vmem>>, vector<128x256xbf16>
    %cst_40 = arith.constant dense<0.000000e+00> : vector<8x256xf32>
    %73 = tpu.matmul %71, %72, %cst_40 {dimension_numbers = #tpu.dot_dimension_numbers<[1], [0], [0], [1], [0, 0, 1, 1], [], []>} : vector<8x128xbf16>, vector<128x256xbf16>, vector<8x256xf32> -> vector<8x256xf32>
    %c0_41 = arith.constant 0 : index
    %c0_42 = arith.constant 0 : index
    %74 = vector.load %arg15[%c0_41, %c0_42] : memref<1x256xf32, #tpu.memory_space<vmem>>, vector<1x256xf32>
    %75 = vector.broadcast %74 : vector<1x256xf32> to vector<8x256xf32>
    %76 = arith.addf %73, %75 : vector<8x256xf32>
    %77 = arith.mulf %76, %76 : vector<8x256xf32>
    %78 = arith.mulf %76, %77 : vector<8x256xf32>
    %cst_43 = arith.constant 4.471500e-02 : f32
    %79 = vector.broadcast %cst_43 : f32 to vector<8x256xf32>
    %80 = arith.mulf %79, %78 : vector<8x256xf32>
    %81 = arith.addf %76, %80 : vector<8x256xf32>
    %cst_44 = arith.constant 0.797884583 : f32
    %82 = vector.broadcast %cst_44 : f32 to vector<8x256xf32>
    %83 = arith.mulf %82, %81 : vector<8x256xf32>
    %84 = math.tanh %83 : vector<8x256xf32>
    %cst_45 = arith.constant 1.000000e+00 : f32
    %85 = vector.broadcast %cst_45 : f32 to vector<8x256xf32>
    %86 = arith.addf %85, %84 : vector<8x256xf32>
    %cst_46 = arith.constant 5.000000e-01 : f32
    %87 = vector.broadcast %cst_46 : f32 to vector<8x256xf32>
    %88 = arith.mulf %87, %86 : vector<8x256xf32>
    %89 = arith.mulf %76, %88 : vector<8x256xf32>
    %90 = arith.truncf %89 : vector<8x256xf32> to vector<8x256xbf16>
    %c0_47 = arith.constant 0 : index
    %c0_48 = arith.constant 0 : index
    %91 = vector.load %arg16[%c0_47, %c0_48] : memref<256x128xbf16, #tpu.memory_space<vmem>>, vector<256x128xbf16>
    %cst_49 = arith.constant dense<0.000000e+00> : vector<8x128xf32>
    %92 = tpu.matmul %90, %91, %cst_49 {dimension_numbers = #tpu.dot_dimension_numbers<[1], [0], [0], [1], [0, 0, 1, 1], [], []>} : vector<8x256xbf16>, vector<256x128xbf16>, vector<8x128xf32> -> vector<8x128xf32>
    %c0_50 = arith.constant 0 : index
    %c0_51 = arith.constant 0 : index
    %93 = vector.load %arg17[%c0_50, %c0_51] : memref<1x128xf32, #tpu.memory_space<vmem>>, vector<1x128xf32>
    %94 = vector.broadcast %93 : vector<1x128xf32> to vector<8x128xf32>
    %95 = arith.addf %92, %94 : vector<8x128xf32>
    %96 = arith.addf %70, %95 : vector<8x128xf32>
    %cst_52 = arith.constant dense<0.000000e+00> : vector<8xf32>
    %97 = vector.multi_reduction <add>, %96, %cst_52 [1] : vector<8x128xf32> to vector<8xf32>
    %98 = vector.shape_cast %97 : vector<8xf32> to vector<8x1xf32>
    %cst_53 = arith.constant 1.280000e+02 : f32
    %99 = vector.broadcast %cst_53 : f32 to vector<8x1xf32>
    %100 = arith.divf %98, %99 : vector<8x1xf32>
    %101 = vector.broadcast %100 : vector<8x1xf32> to vector<8x128xf32>
    %102 = arith.subf %96, %101 : vector<8x128xf32>
    %103 = arith.mulf %102, %102 : vector<8x128xf32>
    %cst_54 = arith.constant dense<0.000000e+00> : vector<8xf32>
    %104 = vector.multi_reduction <add>, %103, %cst_54 [1] : vector<8x128xf32> to vector<8xf32>
    %105 = vector.shape_cast %104 : vector<8xf32> to vector<8x1xf32>
    %cst_55 = arith.constant 1.280000e+02 : f32
    %106 = vector.broadcast %cst_55 : f32 to vector<8x1xf32>
    %107 = arith.divf %105, %106 : vector<8x1xf32>
    %108 = vector.broadcast %100 : vector<8x1xf32> to vector<8x128xf32>
    %109 = arith.subf %96, %108 : vector<8x128xf32>
    %cst_56 = arith.constant 9.99999996E-13 : f32
    %110 = vector.broadcast %cst_56 : f32 to vector<8x1xf32>
    %111 = arith.addf %107, %110 : vector<8x1xf32>
    %112 = math.rsqrt %111 : vector<8x1xf32>
    %113 = vector.broadcast %112 : vector<8x1xf32> to vector<8x128xf32>
    %114 = arith.mulf %109, %113 : vector<8x128xf32>
    %c0_57 = arith.constant 0 : index
    %c0_58 = arith.constant 0 : index
    %115 = vector.load %arg18[%c0_57, %c0_58] : memref<1x128xf32, #tpu.memory_space<vmem>>, vector<1x128xf32>
    %116 = vector.broadcast %115 : vector<1x128xf32> to vector<8x128xf32>
    %117 = arith.mulf %114, %116 : vector<8x128xf32>
    %c0_59 = arith.constant 0 : index
    %c0_60 = arith.constant 0 : index
    %118 = vector.load %arg19[%c0_59, %c0_60] : memref<1x128xf32, #tpu.memory_space<vmem>>, vector<1x128xf32>
    %119 = vector.broadcast %118 : vector<1x128xf32> to vector<8x128xf32>
    %120 = arith.addf %117, %119 : vector<8x128xf32>
    %121 = arith.truncf %120 : vector<8x128xf32> to vector<8x128xbf16>
    %c0_61 = arith.constant 0 : index
    %c0_62 = arith.constant 0 : index
    %122 = vector.load %arg20[%c0_61, %c0_62] : memref<128x128xbf16, #tpu.memory_space<vmem>>, vector<128x128xbf16>
    %cst_63 = arith.constant dense<0.000000e+00> : vector<8x128xf32>
    %123 = tpu.matmul %121, %122, %cst_63 {dimension_numbers = #tpu.dot_dimension_numbers<[1], [0], [0], [1], [0, 0, 1, 1], [], []>} : vector<8x128xbf16>, vector<128x128xbf16>, vector<8x128xf32> -> vector<8x128xf32>
    %c0_64 = arith.constant 0 : index
    %c0_65 = arith.constant 0 : index
    %124 = vector.load %arg21[%c0_64, %c0_65] : memref<1x128xf32, #tpu.memory_space<vmem>>, vector<1x128xf32>
    %125 = vector.broadcast %124 : vector<1x128xf32> to vector<8x128xf32>
    %126 = arith.addf %123, %125 : vector<8x128xf32>
    %c0_66 = arith.constant 0 : index
    %c0_67 = arith.constant 0 : index
    %127 = vector.load %arg22[%c0_66, %c0_67] : memref<8x128xf32, #tpu.memory_space<vmem>>, vector<8x128xf32>
    tpu.vector_store %arg22[%c0_66, %c0_67], %126 {strides = array<i32>} : memref<8x128xf32, #tpu.memory_space<vmem>>, vector<8x128xf32>,
    return
  }
  func.func @transform_0(%arg0: i32) -> (i32, i32) {
    %c0_i32 = arith.constant 0 : i32
    %c0_i32_0 = arith.constant 0 : i32
    return %arg0, %c0_i32 : i32, i32
  }
  func.func @transform_1(%arg0: i32) -> (i32, i32) {
    %c0_i32 = arith.constant 0 : i32
    %c0_i32_0 = arith.constant 0 : i32
    return %arg0, %c0_i32 : i32, i32
  }
  func.func @transform_2(%arg0: i32) -> (i32, i32, i32) {
    %c0_i32 = arith.constant 0 : i32
    %c0_i32_0 = arith.constant 0 : i32
    %c0_i32_1 = arith.constant 0 : i32
    return %arg0, %c0_i32, %c0_i32_0 : i32, i32, i32
  }
  func.func @transform_3(%arg0: i32) -> (i32, i32) {
    %c0_i32 = arith.constant 0 : i32
    %c0_i32_0 = arith.constant 0 : i32
    %c0_i32_1 = arith.constant 0 : i32
    return %c0_i32, %c0_i32_0 : i32, i32
  }
  func.func @transform_4(%arg0: i32) -> (i32, i32) {
    %c0_i32 = arith.constant 0 : i32
    %c0_i32_0 = arith.constant 0 : i32
    %c0_i32_1 = arith.constant 0 : i32
    return %c0_i32, %c0_i32_0 : i32, i32
  }
  func.func @transform_5(%arg0: i32) -> (i32, i32) {
    %c0_i32 = arith.constant 0 : i32
    %c0_i32_0 = arith.constant 0 : i32
    %c0_i32_1 = arith.constant 0 : i32
    return %c0_i32, %c0_i32_0 : i32, i32
  }
  func.func @transform_6(%arg0: i32) -> (i32, i32) {
    %c0_i32 = arith.constant 0 : i32
    %c0_i32_0 = arith.constant 0 : i32
    %c0_i32_1 = arith.constant 0 : i32
    return %c0_i32, %c0_i32_0 : i32, i32
  }
  func.func @transform_7(%arg0: i32) -> (i32, i32) {
    %c0_i32 = arith.constant 0 : i32
    %c0_i32_0 = arith.constant 0 : i32
    %c0_i32_1 = arith.constant 0 : i32
    return %c0_i32, %c0_i32_0 : i32, i32
  }
  func.func @transform_8(%arg0: i32) -> (i32, i32) {
    %c0_i32 = arith.constant 0 : i32
    %c0_i32_0 = arith.constant 0 : i32
    %c0_i32_1 = arith.constant 0 : i32
    return %c0_i32, %c0_i32_0 : i32, i32
  }
  func.func @transform_9(%arg0: i32) -> (i32, i32) {
    %c0_i32 = arith.constant 0 : i32
    %c0_i32_0 = arith.constant 0 : i32
    %c0_i32_1 = arith.constant 0 : i32
    return %c0_i32, %c0_i32_0 : i32, i32
  }
  func.func @transform_10(%arg0: i32) -> (i32, i32) {
    %c0_i32 = arith.constant 0 : i32
    %c0_i32_0 = arith.constant 0 : i32
    %c0_i32_1 = arith.constant 0 : i32
    return %c0_i32, %c0_i32_0 : i32, i32
  }
  func.func @transform_11(%arg0: i32) -> (i32, i32) {
    %c0_i32 = arith.constant 0 : i32
    %c0_i32_0 = arith.constant 0 : i32
    %c0_i32_1 = arith.constant 0 : i32
    return %c0_i32, %c0_i32_0 : i32, i32
  }
  func.func @transform_12(%arg0: i32) -> (i32, i32) {
    %c0_i32 = arith.constant 0 : i32
    %c0_i32_0 = arith.constant 0 : i32
    %c0_i32_1 = arith.constant 0 : i32
    return %c0_i32, %c0_i32_0 : i32, i32
  }
  func.func @transform_13(%arg0: i32) -> (i32, i32) {
    %c0_i32 = arith.constant 0 : i32
    %c0_i32_0 = arith.constant 0 : i32
    %c0_i32_1 = arith.constant 0 : i32
    return %c0_i32, %c0_i32_0 : i32, i32
  }
  func.func @transform_14(%arg0: i32) -> (i32, i32) {
    %c0_i32 = arith.constant 0 : i32
    %c0_i32_0 = arith.constant 0 : i32
    %c0_i32_1 = arith.constant 0 : i32
    return %c0_i32, %c0_i32_0 : i32, i32
  }
  func.func @transform_15(%arg0: i32) -> (i32, i32) {
    %c0_i32 = arith.constant 0 : i32
    %c0_i32_0 = arith.constant 0 : i32
    %c0_i32_1 = arith.constant 0 : i32
    return %c0_i32, %c0_i32_0 : i32, i32
  }
  func.func @transform_16(%arg0: i32) -> (i32, i32) {
    %c0_i32 = arith.constant 0 : i32
    %c0_i32_0 = arith.constant 0 : i32
    %c0_i32_1 = arith.constant 0 : i32
    return %c0_i32, %c0_i32_0 : i32, i32
  }
  func.func @transform_17(%arg0: i32) -> (i32, i32) {
    %c0_i32 = arith.constant 0 : i32
    %c0_i32_0 = arith.constant 0 : i32
    %c0_i32_1 = arith.constant 0 : i32
    return %c0_i32, %c0_i32_0 : i32, i32
  }
  func.func @transform_18(%arg0: i32) -> (i32, i32) {
    %c0_i32 = arith.constant 0 : i32
    %c0_i32_0 = arith.constant 0 : i32
    %c0_i32_1 = arith.constant 0 : i32
    return %c0_i32, %c0_i32_0 : i32, i32
  }
  func.func @transform_19(%arg0: i32) -> (i32, i32) {
    %c0_i32 = arith.constant 0 : i32
    %c0_i32_0 = arith.constant 0 : i32
    %c0_i32_1 = arith.constant 0 : i32
    return %c0_i32, %c0_i32_0 : i32, i32
  }
  func.func @transform_20(%arg0: i32) -> (i32, i32) {
    %c0_i32 = arith.constant 0 : i32
    %c0_i32_0 = arith.constant 0 : i32
    %c0_i32_1 = arith.constant 0 : i32
    return %c0_i32, %c0_i32_0 : i32, i32
  }
  func.func @transform_21(%arg0: i32) -> (i32, i32) {
    %c0_i32 = arith.constant 0 : i32
    %c0_i32_0 = arith.constant 0 : i32
    return %arg0, %c0_i32 : i32, i32
  }
}

</mosaic_0001>

<llo_original>
// kernel: tpu_custom_call.1
$region0: #{tpu_custom_call.1}
  #allocation0 [shape = 'u32[]', space=smem, size = 0x4, offset = 0x4, fixed_abs, tag = 'smem constant byte address 0x4 - core index']
  #allocation1 [shape = 'u32[144,128]{1,0:T(1,128)}', space=vmem, size = 0x12000, scoped, tag = 'internal scratch']
  %s0 = inlined_call_operand.hbm [shape: bf16[128,128], index: 0, kind: input, shape index: {}]
  %s1 = inlined_call_operand.vmem [shape: bf16[16,128], index: 1, kind: input, shape index: {}]
  %s2 = inlined_call_operand.vmem [shape: f32[16,1,8], index: 2, kind: input, shape index: {}]
  %s3 = inlined_call_operand.hbm [shape: bf16[128,128], index: 3, kind: input, shape index: {}]
  %s4 = inlined_call_operand.hbm [shape: bf16[128,128], index: 4, kind: input, shape index: {}]
  %s5 = inlined_call_operand.hbm [shape: bf16[128,128], index: 5, kind: input, shape index: {}]
  %s6 = inlined_call_operand.vmem [shape: f32[1,128], index: 6, kind: input, shape index: {}]
  %s7 = inlined_call_operand.vmem [shape: f32[1,128], index: 7, kind: input, shape index: {}]
  %s8 = inlined_call_operand.vmem [shape: f32[1,128], index: 8, kind: input, shape index: {}]
  %s9 = inlined_call_operand.hbm [shape: bf16[128,128], index: 9, kind: input, shape index: {}]
  %s10 = inlined_call_operand.vmem [shape: f32[1,128], index: 10, kind: input, shape index: {}]
  %s11 = inlined_call_operand.vmem [shape: f32[1,128], index: 11, kind: input, shape index: {}]
  %s12 = inlined_call_operand.vmem [shape: f32[1,128], index: 12, kind: input, shape index: {}]
  %s13 = inlined_call_operand.hbm [shape: bf16[128,256], index: 13, kind: input, shape index: {}]
  %s14 = inlined_call_operand.vmem [shape: f32[1,256], index: 14, kind: input, shape index: {}]
  %s15 = inlined_call_operand.hbm [shape: bf16[256,128], index: 15, kind: input, shape index: {}]
  %s16 = inlined_call_operand.vmem [shape: f32[1,128], index: 16, kind: input, shape index: {}]
  %s17 = inlined_call_operand.vmem [shape: f32[1,128], index: 17, kind: input, shape index: {}]
  %s18 = inlined_call_operand.vmem [shape: f32[1,128], index: 18, kind: input, shape index: {}]
  %s19 = inlined_call_operand.vmem [shape: bf16[128,128], index: 19, kind: input, shape index: {}]
  %s20 = inlined_call_operand.vmem [shape: f32[1,128], index: 20, kind: input, shape index: {}]
  %s21 = inlined_call_operand.hbm [shape: f32[16,128], index: 21, kind: output, shape index: {}]
  %s22 = sld [smem:[#allocation0]]
  $region145: #{tpu_custom_call.1} parent=0
    _
  %s24 = ssub.s32 1, %s22
  %s25 = scalar_select 0, %s24, %s22
  $region1: #{tpu_custom_call.1} parent=0
    #allocation2 [shape = 'u8[32768]{0}', space=vmem, size = 0x8000, scoped, tag = 'input window, operand 0']
    #allocation3 [shape = 's32[2]{0}', space=sflag, size = 0x8, scoped, tag = 'scoped memory for tpu_custom_call.1']
    #allocation4 [shape = 's32[2]{0}', space=sflag, size = 0x8, scoped, tag = 'scoped memory for tpu_custom_call.1']
    #allocation5 [shape = 'u8[32768]{0}', space=vmem, size = 0x8000, scoped, tag = 'input window, operand 3, single buffered']
    #allocation6 [shape = 's32[1]{0}', space=sflag, size = 0x4, scoped, tag = 'scoped memory for tpu_custom_call.1']
    #allocation7 [shape = 'u8[32768]{0}', space=vmem, size = 0x8000, scoped, tag = 'input window, operand 4, single buffered']
    #allocation8 [shape = 'u8[32768]{0}', space=vmem, size = 0x8000, scoped, tag = 'input window, operand 5, single buffered']
    #allocation9 [shape = 's32[1]{0}', space=sflag, size = 0x4, scoped, tag = 'scoped memory for tpu_custom_call.1']
    #allocation10 [shape = 'u8[32768]{0}', space=vmem, size = 0x8000, scoped, tag = 'input window, operand 9, single buffered']
    #allocation11 [shape = 'u8[65536]{0}', space=vmem, size = 0x10000, scoped, tag = 'input window, operand 13, single buffered']
    #allocation12 [shape = 's32[1]{0}', space=sflag, size = 0x4, scoped, tag = 'scoped memory for tpu_custom_call.1']
    #allocation13 [shape = 'u8[65536]{0}', space=vmem, size = 0x10000, scoped, tag = 'input window, operand 15, single buffered']
    #allocation14 [shape = 'u8[8192]{0}', space=vmem, size = 0x2000, scoped, tag = 'output window, operand 0']
    %26 = vsyncpa [#allocation3], 0
    %s27 = scalar_lea.sflag [#allocation3], 1
    %28 = vsyncpa %s27, 0
    %29 = vsyncpa [#allocation6], 0
    %30 = vsyncpa [#allocation9], 0
    %31 = vsyncpa [#allocation12], 0
    %32 = vsyncpa [#allocation4], 0
    %s33 = scalar_lea.sflag [#allocation4], 1
    %34 = vsyncpa %s33, 0
    loop: start=0, step=1, limit=4
    $region2: #{tpu_custom_call.1} parent=1 // loop_pre_header
      _
    $region3: #{tpu_custom_call.1} parent=1 // loop_header
      %s36 = sphi 0, %s40
      %p37 = scmp.ge.s32.totalorder %s36, 4
      %s46 = sphi 0, %s48
      %s49 = sphi 0, %s46
      %s50 = sphi 0, %s49
      %s66 = sphi 0, %s50
      %s72 = sphi 0, %s74
      %s75 = sphi 0, %s72
      %s76 = sphi 0, %s75
      %s92 = sphi 0, %s76
      %s98 = sphi 0, %s100
      %s101 = sphi 0, %s98
      %s102 = sphi 0, %s101
      %s118 = sphi 0, %s102
      %s122 = sphi 0, %s122
      %s124 = sphi 0, %s122
      %s125 = sphi 0, %s124
      %s139 = sphi 0, %s125
      %s143 = sphi 0, %s143
      %s145 = sphi 0, %s143
      %s146 = sphi 0, %s145
      %s160 = sphi 0, %s146
      %s164 = sphi 0, %s164
      %s166 = sphi 0, %s164
      %s167 = sphi 0, %s166
      %s181 = sphi 0, %s167
      %s185 = sphi 0, %s185
      %s187 = sphi 0, %s185
      %s188 = sphi 0, %s187
      %s202 = sphi 0, %s188
      %s206 = sphi 0, %s206
      %s208 = sphi 0, %s206
      %s209 = sphi 0, %s208
      %s223 = sphi 0, %s209
      %s227 = sphi 0, %s227
      %s229 = sphi 0, %s227
      %s230 = sphi 0, %s229
      %s244 = sphi 0, %s230
      %s248 = sphi 0, %s248
      %s250 = sphi 0, %s248
      %s251 = sphi 0, %s250
      %s265 = sphi 0, %s251
      %s269 = sphi 0, %s269
      %s271 = sphi 0, %s269
      %s272 = sphi 0, %s271
      %s286 = sphi 0, %s272
      %s290 = sphi 0, %s290
      %s292 = sphi 0, %s290
      %s293 = sphi 0, %s292
      %s307 = sphi 0, %s293
      %s311 = sphi 0, %s311
      %s313 = sphi 0, %s311
      %s314 = sphi 0, %s313
      %s328 = sphi 0, %s314
      %s332 = sphi 0, %s332
      %s334 = sphi 0, %s332
      %s335 = sphi 0, %s334
      %s349 = sphi 0, %s335
      %s353 = sphi 0, %s353
      %s355 = sphi 0, %s353
      %s356 = sphi 0, %s355
      %s370 = sphi 0, %s356
      %s374 = sphi 0, %s374
      %s376 = sphi 0, %s374
      %s377 = sphi 0, %s376
      %s391 = sphi 0, %s377
      %s395 = sphi 0, %s395
      %s397 = sphi 0, %s395
      %s398 = sphi 0, %s397
      %s412 = sphi 0, %s398
      %s416 = sphi 0, %s416
      %s418 = sphi 0, %s416
      %s419 = sphi 0, %s418
      %s433 = sphi 0, %s419
      %s437 = sphi 0, %s437
      %s439 = sphi 0, %s437
      %s440 = sphi 0, %s439
      %s454 = sphi 0, %s440
      %s458 = sphi 0, %s458
      %s460 = sphi 0, %s458
      %s461 = sphi 0, %s460
      %s475 = sphi 0, %s461
      %s479 = sphi 0, %s479
      %s481 = sphi 0, %s479
      %s482 = sphi 0, %s481
      %s496 = sphi 0, %s482
      %s502 = sphi 0, %s504
      %s505 = sphi 0, %s502
      %s506 = sphi 0, %s505
      %s522 = sphi 0, %s506
    $region4: #{tpu_custom_call.1} parent=1 // loop_header_branch
      %39 = sbr.rel (%p37) target = $region8
    $region5: #{tpu_custom_call.1} parent=1 // loop_body
      %s41 = ssub.s32 %s36, 1
      %s42 = ssub.s32 %s36, 2
      %s43 = sadd.s32 %s36, 1
      %s44 = ssub.s32 %s36, %s43
      %p45 = scmp.eq.s32.totalorder %s44, 0
      %s47 = sadd.s32 %s46, 1
      %s48 = scalar_select %p45, %s46, %s47
      %p51 = pneg %p45
      %p52 = scmp.eq.s32.totalorder %s36, 1
      %p53 = por %p51, %p52
      %p54 = scmp.ne.s32.totalorder %s46, %s49
      %p55 = scmp.eq.s32.totalorder %s36, 0
      %p56 = por %p54, %p55
      %p57 = scmp.ne.s32.totalorder %s46, %s49
      %p58 = scmp.eq.s32.totalorder %s41, 1
      %p59 = por %p57, %p58
      %p60 = scmp.ne.s32.totalorder %s49, %s50
      %p61 = scmp.eq.s32.totalorder %s41, 0
      %p62 = por %p60, %p61
      %p63 = scmp.ne.s32.totalorder %s49, %s50
      %p64 = scmp.eq.s32.totalorder %s42, 1
      %p65 = por %p63, %p64
      %p67 = scmp.ne.s32.totalorder %s50, %s66
      %p68 = scmp.eq.s32.totalorder %s42, 0
      %p69 = por %p67, %p68
      %s70 = ssub.s32 %s36, %s43
      %p71 = scmp.eq.s32.totalorder %s70, 0
      %s73 = sadd.s32 %s72, 1
      %s74 = scalar_select %p71, %s72, %s73
      %p77 = pneg %p71
      %p78 = scmp.eq.s32.totalorder %s36, 1
      %p79 = por %p77, %p78
      %p80 = scmp.ne.s32.totalorder %s72, %s75
      %p81 = scmp.eq.s32.totalorder %s36, 0
      %p82 = por %p80, %p81
      %p83 = scmp.ne.s32.totalorder %s72, %s75
      %p84 = scmp.eq.s32.totalorder %s41, 1
      %p85 = por %p83, %p84
      %p86 = scmp.ne.s32.totalorder %s75, %s76
      %p87 = scmp.eq.s32.totalorder %s41, 0
      %p88 = por %p86, %p87
      %p89 = scmp.ne.s32.totalorder %s75, %s76
      %p90 = scmp.eq.s32.totalorder %s42, 1
      %p91 = por %p89, %p90
      %p93 = scmp.ne.s32.totalorder %s76, %s92
      %p94 = scmp.eq.s32.totalorder %s42, 0
      %p95 = por %p93, %p94
      %s96 = ssub.s32 %s36, %s43
      %p97 = scmp.eq.s32.totalorder %s96, 0
      %s99 = sadd.s32 %s98, 1
      %s100 = scalar_select %p97, %s98, %s99
      %p103 = pneg %p97
      %p104 = scmp.eq.s32.totalorder %s36, 1
      %p105 = por %p103, %p104
      %p106 = scmp.ne.s32.totalorder %s98, %s101
      %p107 = scmp.eq.s32.totalorder %s36, 0
      %p108 = por %p106, %p107
      %p109 = scmp.ne.s32.totalorder %s98, %s101
      %p110 = scmp.eq.s32.totalorder %s41, 1
      %p111 = por %p109, %p110
      %p112 = scmp.ne.s32.totalorder %s101, %s102
      %p113 = scmp.eq.s32.totalorder %s41, 0
      %p114 = por %p112, %p113
      %p115 = scmp.ne.s32.totalorder %s101, %s102
      %p116 = scmp.eq.s32.totalorder %s42, 1
      %p117 = por %p115, %p116
      %p119 = scmp.ne.s32.totalorder %s102, %s118
      %p120 = scmp.eq.s32.totalorder %s42, 0
      %p121 = por %p119, %p120
      %s123 = sadd.s32 %s122, 1
      %p126 = scmp.eq.s32.totalorder %s36, 1
      %p127 = scmp.ne.s32.totalorder %s122, %s124
      %p128 = scmp.eq.s32.totalorder %s36, 0
      %p129 = por %p127, %p128
      %p130 = scmp.ne.s32.totalorder %s122, %s124
      %p131 = scmp.eq.s32.totalorder %s41, 1
      %p132 = por %p130, %p131
      %p133 = scmp.ne.s32.totalorder %s124, %s125
      %p134 = scmp.eq.s32.totalorder %s41, 0
      %p135 = por %p133, %p134
      %p136 = scmp.ne.s32.totalorder %s124, %s125
      %p137 = scmp.eq.s32.totalorder %s42, 1
      %p138 = por %p136, %p137
      %p140 = scmp.ne.s32.totalorder %s125, %s139
      %p141 = scmp.eq.s32.totalorder %s42, 0
      %p142 = por %p140, %p141
      %s144 = sadd.s32 %s143, 1
      %p147 = scmp.eq.s32.totalorder %s36, 1
      %p148 = scmp.ne.s32.totalorder %s143, %s145
      %p149 = scmp.eq.s32.totalorder %s36, 0
      %p150 = por %p148, %p149
      %p151 = scmp.ne.s32.totalorder %s143, %s145
      %p152 = scmp.eq.s32.totalorder %s41, 1
      %p153 = por %p151, %p152
      %p154 = scmp.ne.s32.totalorder %s145, %s146
      %p155 = scmp.eq.s32.totalorder %s41, 0
      %p156 = por %p154, %p155
      %p157 = scmp.ne.s32.totalorder %s145, %s146
      %p158 = scmp.eq.s32.totalorder %s42, 1
      %p159 = por %p157, %p158
      %p161 = scmp.ne.s32.totalorder %s146, %s160
      %p162 = scmp.eq.s32.totalorder %s42, 0
      %p163 = por %p161, %p162
      %s165 = sadd.s32 %s164, 1
      %p168 = scmp.eq.s32.totalorder %s36, 1
      %p169 = scmp.ne.s32.totalorder %s164, %s166
      %p170 = scmp.eq.s32.totalorder %s36, 0
      %p171 = por %p169, %p170
      %p172 = scmp.ne.s32.totalorder %s164, %s166
      %p173 = scmp.eq.s32.totalorder %s41, 1
      %p174 = por %p172, %p173
      %p175 = scmp.ne.s32.totalorder %s166, %s167
      %p176 = scmp.eq.s32.totalorder %s41, 0
      %p177 = por %p175, %p176
      %p178 = scmp.ne.s32.totalorder %s166, %s167
      %p179 = scmp.eq.s32.totalorder %s42, 1
      %p180 = por %p178, %p179
      %p182 = scmp.ne.s32.totalorder %s167, %s181
      %p183 = scmp.eq.s32.totalorder %s42, 0
      %p184 = por %p182, %p183
      %s186 = sadd.s32 %s185, 1
      %p189 = scmp.eq.s32.totalorder %s36, 1
      %p190 = scmp.ne.s32.totalorder %s185, %s187
      %p191 = scmp.eq.s32.totalorder %s36, 0
      %p192 = por %p190, %p191
      %p193 = scmp.ne.s32.totalorder %s185, %s187
      %p194 = scmp.eq.s32.totalorder %s41, 1
      %p195 = por %p193, %p194
      %p196 = scmp.ne.s32.totalorder %s187, %s188
      %p197 = scmp.eq.s32.totalorder %s41, 0
      %p198 = por %p196, %p197
      %p199 = scmp.ne.s32.totalorder %s187, %s188
      %p200 = scmp.eq.s32.totalorder %s42, 1
      %p201 = por %p199, %p200
      %p203 = scmp.ne.s32.totalorder %s188, %s202
      %p204 = scmp.eq.s32.totalorder %s42, 0
      %p205 = por %p203, %p204
      %s207 = sadd.s32 %s206, 1
      %p210 = scmp.eq.s32.totalorder %s36, 1
      %p211 = scmp.ne.s32.totalorder %s206, %s208
      %p212 = scmp.eq.s32.totalorder %s36, 0
      %p213 = por %p211, %p212
      %p214 = scmp.ne.s32.totalorder %s206, %s208
      %p215 = scmp.eq.s32.totalorder %s41, 1
      %p216 = por %p214, %p215
      %p217 = scmp.ne.s32.totalorder %s208, %s209
      %p218 = scmp.eq.s32.totalorder %s41, 0
      %p219 = por %p217, %p218
      %p220 = scmp.ne.s32.totalorder %s208, %s209
      %p221 = scmp.eq.s32.totalorder %s42, 1
      %p222 = por %p220, %p221
      %p224 = scmp.ne.s32.totalorder %s209, %s223
      %p225 = scmp.eq.s32.totalorder %s42, 0
      %p226 = por %p224, %p225
      %s228 = sadd.s32 %s227, 1
      %p231 = scmp.eq.s32.totalorder %s36, 1
      %p232 = scmp.ne.s32.totalorder %s227, %s229
      %p233 = scmp.eq.s32.totalorder %s36, 0
      %p234 = por %p232, %p233
      %p235 = scmp.ne.s32.totalorder %s227, %s229
      %p236 = scmp.eq.s32.totalorder %s41, 1
      %p237 = por %p235, %p236
      %p238 = scmp.ne.s32.totalorder %s229, %s230
      %p239 = scmp.eq.s32.totalorder %s41, 0
      %p240 = por %p238, %p239
      %p241 = scmp.ne.s32.totalorder %s229, %s230
      %p242 = scmp.eq.s32.totalorder %s42, 1
      %p243 = por %p241, %p242
      %p245 = scmp.ne.s32.totalorder %s230, %s244
      %p246 = scmp.eq.s32.totalorder %s42, 0
      %p247 = por %p245, %p246
      %s249 = sadd.s32 %s248, 1
      %p252 = scmp.eq.s32.totalorder %s36, 1
      %p253 = scmp.ne.s32.totalorder %s248, %s250
      %p254 = scmp.eq.s32.totalorder %s36, 0
      %p255 = por %p253, %p254
      %p256 = scmp.ne.s32.totalorder %s248, %s250
      %p257 = scmp.eq.s32.totalorder %s41, 1
      %p258 = por %p256, %p257
      %p259 = scmp.ne.s32.totalorder %s250, %s251
      %p260 = scmp.eq.s32.totalorder %s41, 0
      %p261 = por %p259, %p260
      %p262 = scmp.ne.s32.totalorder %s250, %s251
      %p263 = scmp.eq.s32.totalorder %s42, 1
      %p264 = por %p262, %p263
      %p266 = scmp.ne.s32.totalorder %s251, %s265
      %p267 = scmp.eq.s32.totalorder %s42, 0
      %p268 = por %p266, %p267
      %s270 = sadd.s32 %s269, 1
      %p273 = scmp.eq.s32.totalorder %s36, 1
      %p274 = scmp.ne.s32.totalorder %s269, %s271
      %p275 = scmp.eq.s32.totalorder %s36, 0
      %p276 = por %p274, %p275
      %p277 = scmp.ne.s32.totalorder %s269, %s271
      %p278 = scmp.eq.s32.totalorder %s41, 1
      %p279 = por %p277, %p278
      %p280 = scmp.ne.s32.totalorder %s271, %s272
      %p281 = scmp.eq.s32.totalorder %s41, 0
      %p282 = por %p280, %p281
      %p283 = scmp.ne.s32.totalorder %s271, %s272
      %p284 = scmp.eq.s32.totalorder %s42, 1
      %p285 = por %p283, %p284
      %p287 = scmp.ne.s32.totalorder %s272, %s286
      %p288 = scmp.eq.s32.totalorder %s42, 0
      %p289 = por %p287, %p288
      %s291 = sadd.s32 %s290, 1
      %p294 = scmp.eq.s32.totalorder %s36, 1
      %p295 = scmp.ne.s32.totalorder %s290, %s292
      %p296 = scmp.eq.s32.totalorder %s36, 0
      %p297 = por %p295, %p296
      %p298 = scmp.ne.s32.totalorder %s290, %s292
      %p299 = scmp.eq.s32.totalorder %s41, 1
      %p300 = por %p298, %p299
      %p301 = scmp.ne.s32.totalorder %s292, %s293
      %p302 = scmp.eq.s32.totalorder %s41, 0
      %p303 = por %p301, %p302
      %p304 = scmp.ne.s32.totalorder %s292, %s293
      %p305 = scmp.eq.s32.totalorder %s42, 1
      %p306 = por %p304, %p305
      %p308 = scmp.ne.s32.totalorder %s293, %s307
      %p309 = scmp.eq.s32.totalorder %s42, 0
      %p310 = por %p308, %p309
      %s312 = sadd.s32 %s311, 1
      %p315 = scmp.eq.s32.totalorder %s36, 1
      %p316 = scmp.ne.s32.totalorder %s311, %s313
      %p317 = scmp.eq.s32.totalorder %s36, 0
      %p318 = por %p316, %p317
      %p319 = scmp.ne.s32.totalorder %s311, %s313
      %p320 = scmp.eq.s32.totalorder %s41, 1
      %p321 = por %p319, %p320
      %p322 = scmp.ne.s32.totalorder %s313, %s314
      %p323 = scmp.eq.s32.totalorder %s41, 0
      %p324 = por %p322, %p323
      %p325 = scmp.ne.s32.totalorder %s313, %s314
      %p326 = scmp.eq.s32.totalorder %s42, 1
      %p327 = por %p325, %p326
      %p329 = scmp.ne.s32.totalorder %s314, %s328
      %p330 = scmp.eq.s32.totalorder %s42, 0
      %p331 = por %p329, %p330
      %s333 = sadd.s32 %s332, 1
      %p336 = scmp.eq.s32.totalorder %s36, 1
      %p337 = scmp.ne.s32.totalorder %s332, %s334
      %p338 = scmp.eq.s32.totalorder %s36, 0
      %p339 = por %p337, %p338
      %p340 = scmp.ne.s32.totalorder %s332, %s334
      %p341 = scmp.eq.s32.totalorder %s41, 1
      %p342 = por %p340, %p341
      %p343 = scmp.ne.s32.totalorder %s334, %s335
      %p344 = scmp.eq.s32.totalorder %s41, 0
      %p345 = por %p343, %p344
      %p346 = scmp.ne.s32.totalorder %s334, %s335
      %p347 = scmp.eq.s32.totalorder %s42, 1
      %p348 = por %p346, %p347
      %p350 = scmp.ne.s32.totalorder %s335, %s349
      %p351 = scmp.eq.s32.totalorder %s42, 0
      %p352 = por %p350, %p351
      %s354 = sadd.s32 %s353, 1
      %p357 = scmp.eq.s32.totalorder %s36, 1
      %p358 = scmp.ne.s32.totalorder %s353, %s355
      %p359 = scmp.eq.s32.totalorder %s36, 0
      %p360 = por %p358, %p359
      %p361 = scmp.ne.s32.totalorder %s353, %s355
      %p362 = scmp.eq.s32.totalorder %s41, 1
      %p363 = por %p361, %p362
      %p364 = scmp.ne.s32.totalorder %s355, %s356
      %p365 = scmp.eq.s32.totalorder %s41, 0
      %p366 = por %p364, %p365
      %p367 = scmp.ne.s32.totalorder %s355, %s356
      %p368 = scmp.eq.s32.totalorder %s42, 1
      %p369 = por %p367, %p368
      %p371 = scmp.ne.s32.totalorder %s356, %s370
      %p372 = scmp.eq.s32.totalorder %s42, 0
      %p373 = por %p371, %p372
      %s375 = sadd.s32 %s374, 1
      %p378 = scmp.eq.s32.totalorder %s36, 1
      %p379 = scmp.ne.s32.totalorder %s374, %s376
      %p380 = scmp.eq.s32.totalorder %s36, 0
      %p381 = por %p379, %p380
      %p382 = scmp.ne.s32.totalorder %s374, %s376
      %p383 = scmp.eq.s32.totalorder %s41, 1
      %p384 = por %p382, %p383
      %p385 = scmp.ne.s32.totalorder %s376, %s377
      %p386 = scmp.eq.s32.totalorder %s41, 0
      %p387 = por %p385, %p386
      %p388 = scmp.ne.s32.totalorder %s376, %s377
      %p389 = scmp.eq.s32.totalorder %s42, 1
      %p390 = por %p388, %p389
      %p392 = scmp.ne.s32.totalorder %s377, %s391
      %p393 = scmp.eq.s32.totalorder %s42, 0
      %p394 = por %p392, %p393
      %s396 = sadd.s32 %s395, 1
      %p399 = scmp.eq.s32.totalorder %s36, 1
      %p400 = scmp.ne.s32.totalorder %s395, %s397
      %p401 = scmp.eq.s32.totalorder %s36, 0
      %p402 = por %p400, %p401
      %p403 = scmp.ne.s32.totalorder %s395, %s397
      %p404 = scmp.eq.s32.totalorder %s41, 1
      %p405 = por %p403, %p404
      %p406 = scmp.ne.s32.totalorder %s397, %s398
      %p407 = scmp.eq.s32.totalorder %s41, 0
      %p408 = por %p406, %p407
      %p409 = scmp.ne.s32.totalorder %s397, %s398
      %p410 = scmp.eq.s32.totalorder %s42, 1
      %p411 = por %p409, %p410
      %p413 = scmp.ne.s32.totalorder %s398, %s412
      %p414 = scmp.eq.s32.totalorder %s42, 0
      %p415 = por %p413, %p414
      %s417 = sadd.s32 %s416, 1
      %p420 = scmp.eq.s32.totalorder %s36, 1
      %p421 = scmp.ne.s32.totalorder %s416, %s418
      %p422 = scmp.eq.s32.totalorder %s36, 0
      %p423 = por %p421, %p422
      %p424 = scmp.ne.s32.totalorder %s416, %s418
      %p425 = scmp.eq.s32.totalorder %s41, 1
      %p426 = por %p424, %p425
      %p427 = scmp.ne.s32.totalorder %s418, %s419
      %p428 = scmp.eq.s32.totalorder %s41, 0
      %p429 = por %p427, %p428
      %p430 = scmp.ne.s32.totalorder %s418, %s419
      %p431 = scmp.eq.s32.totalorder %s42, 1
      %p432 = por %p430, %p431
      %p434 = scmp.ne.s32.totalorder %s419, %s433
      %p435 = scmp.eq.s32.totalorder %s42, 0
      %p436 = por %p434, %p435
      %s438 = sadd.s32 %s437, 1
      %p441 = scmp.eq.s32.totalorder %s36, 1
      %p442 = scmp.ne.s32.totalorder %s437, %s439
      %p443 = scmp.eq.s32.totalorder %s36, 0
      %p444 = por %p442, %p443
      %p445 = scmp.ne.s32.totalorder %s437, %s439
      %p446 = scmp.eq.s32.totalorder %s41, 1
      %p447 = por %p445, %p446
      %p448 = scmp.ne.s32.totalorder %s439, %s440
      %p449 = scmp.eq.s32.totalorder %s41, 0
      %p450 = por %p448, %p449
      %p451 = scmp.ne.s32.totalorder %s439, %s440
      %p452 = scmp.eq.s32.totalorder %s42, 1
      %p453 = por %p451, %p452
      %p455 = scmp.ne.s32.totalorder %s440, %s454
      %p456 = scmp.eq.s32.totalorder %s42, 0
      %p457 = por %p455, %p456
      %s459 = sadd.s32 %s458, 1
      %p462 = scmp.eq.s32.totalorder %s36, 1
      %p463 = scmp.ne.s32.totalorder %s458, %s460
      %p464 = scmp.eq.s32.totalorder %s36, 0
      %p465 = por %p463, %p464
      %p466 = scmp.ne.s32.totalorder %s458, %s460
      %p467 = scmp.eq.s32.totalorder %s41, 1
      %p468 = por %p466, %p467
      %p469 = scmp.ne.s32.totalorder %s460, %s461
      %p470 = scmp.eq.s32.totalorder %s41, 0
      %p471 = por %p469, %p470
      %p472 = scmp.ne.s32.totalorder %s460, %s461
      %p473 = scmp.eq.s32.totalorder %s42, 1
      %p474 = por %p472, %p473
      %p476 = scmp.ne.s32.totalorder %s461, %s475
      %p477 = scmp.eq.s32.totalorder %s42, 0
      %p478 = por %p476, %p477
      %s480 = sadd.s32 %s479, 1
      %p483 = scmp.eq.s32.totalorder %s36, 1
      %p484 = scmp.ne.s32.totalorder %s479, %s481
      %p485 = scmp.eq.s32.totalorder %s36, 0
      %p486 = por %p484, %p485
      %p487 = scmp.ne.s32.totalorder %s479, %s481
      %p488 = scmp.eq.s32.totalorder %s41, 1
      %p489 = por %p487, %p488
      %p490 = scmp.ne.s32.totalorder %s481, %s482
      %p491 = scmp.eq.s32.totalorder %s41, 0
      %p492 = por %p490, %p491
      %p493 = scmp.ne.s32.totalorder %s481, %s482
      %p494 = scmp.eq.s32.totalorder %s42, 1
      %p495 = por %p493, %p494
      %p497 = scmp.ne.s32.totalorder %s482, %s496
      %p498 = scmp.eq.s32.totalorder %s42, 0
      %p499 = por %p497, %p498
      %s500 = ssub.s32 %s36, %s43
      %p501 = scmp.eq.s32.totalorder %s500, 0
      %s503 = sadd.s32 %s502, 1
      %s504 = scalar_select %p501, %s502, %s503
      %p507 = pneg %p501
      %p508 = scmp.eq.s32.totalorder %s36, 1
      %p509 = por %p507, %p508
      %p510 = scmp.ne.s32.totalorder %s502, %s505
      %p511 = scmp.eq.s32.totalorder %s36, 0
      %p512 = por %p510, %p511
      %p513 = scmp.ne.s32.totalorder %s502, %s505
      %p514 = scmp.eq.s32.totalorder %s41, 1
      %p515 = por %p513, %p514
      %p516 = scmp.ne.s32.totalorder %s505, %s506
      %p517 = scmp.eq.s32.totalorder %s41, 0
      %p518 = por %p516, %p517
      %p519 = scmp.ne.s32.totalorder %s505, %s506
      %p520 = scmp.eq.s32.totalorder %s42, 1
      %p521 = por %p519, %p520
      %p523 = scmp.ne.s32.totalorder %s506, %s522
      %p524 = scmp.eq.s32.totalorder %s42, 0
      %p525 = por %p523, %p524
      %p526 = scmp.le.s32.totalorder 1, %s36
      %p527 = scmp.lt.s32.totalorder %s36, 3
      %p528 = pnand %p526, %p527
      %p529 = pneg %p528
      // Predicated region
      $region9: #{tpu_custom_call.1} parent=5 // pred_check
        _
      $region10: #{tpu_custom_call.1} parent=5 // pred_check_branch
        %531 = sbr.rel (%p528) target = $region12
      $region11: #{tpu_custom_call.1} parent=5 // pred_region
        %s532 = ssub.s32 %s36, 1
        // Predicated region
        $region13: #{tpu_custom_call.1} parent=11 // pred_check
          %p533 = pneg %p135
        $region14: #{tpu_custom_call.1} parent=11 // pred_check_branch
          %535 = sbr.rel (%p533) target = $region16
        $region15: #{tpu_custom_call.1} parent=11 // pred_region
          %s537 = ssub.s32 1024, 1024
          %538 = vsyncadd [#allocation6], %s537
          %s539 = sshll.u32 [#allocation5], 4
          %s540 = int_to_ptr.vmem [resolvable:$true] %s539
          %545 = dma.hbm_to_vmem [thread:$0]  %s3, 1024, %s540, [#allocation6], 64, 64, 4
        $region16: #{tpu_custom_call.1} parent=11 // pred_fallthru
          _
        // Predicated region
        $region17: #{tpu_custom_call.1} parent=11 // pred_check
          %p546 = pneg %p156
        $region18: #{tpu_custom_call.1} parent=11 // pred_check_branch
          %548 = sbr.rel (%p546) target = $region20
        $region19: #{tpu_custom_call.1} parent=11 // pred_region
          %s550 = ssub.s32 1024, 1024
          %551 = vsyncadd [#allocation6], %s550
          %s552 = sshll.u32 [#allocation7], 4
          %s553 = int_to_ptr.vmem [resolvable:$true] %s552
          %558 = dma.hbm_to_vmem [thread:$0]  %s4, 1024, %s553, [#allocation6], 64, 64, 4
        $region20: #{tpu_custom_call.1} parent=11 // pred_fallthru
          _
        // Predicated region
        $region21: #{tpu_custom_call.1} parent=11 // pred_check
          %p559 = pneg %p177
        $region22: #{tpu_custom_call.1} parent=11 // pred_check_branch
          %561 = sbr.rel (%p559) target = $region24
        $region23: #{tpu_custom_call.1} parent=11 // pred_region
          %s563 = ssub.s32 1024, 1024
          %564 = vsyncadd [#allocation9], %s563
          %s565 = sshll.u32 [#allocation8], 4
          %s566 = int_to_ptr.vmem [resolvable:$true] %s565
          %571 = dma.hbm_to_vmem [thread:$0]  %s5, 1024, %s566, [#allocation9], 64, 64, 4
        $region24: #{tpu_custom_call.1} parent=11 // pred_fallthru
          _
        // Predicated region
        $region25: #{tpu_custom_call.1} parent=11 // pred_check
          %p572 = pneg %p198
        $region26: #{tpu_custom_call.1} parent=11 // pred_check_branch
          %574 = sbr.rel (%p572) target = $region28
        $region27: #{tpu_custom_call.1} parent=11 // pred_region
          _
        $region28: #{tpu_custom_call.1} parent=11 // pred_fallthru
          _
        // Predicated region
        $region29: #{tpu_custom_call.1} parent=11 // pred_check
          %p575 = pneg %p219
        $region30: #{tpu_custom_call.1} parent=11 // pred_check_branch
          %577 = sbr.rel (%p575) target = $region32
        $region31: #{tpu_custom_call.1} parent=11 // pred_region
          _
        $region32: #{tpu_custom_call.1} parent=11 // pred_fallthru
          _
        // Predicated region
        $region33: #{tpu_custom_call.1} parent=11 // pred_check
          %p578 = pneg %p240
        $region34: #{tpu_custom_call.1} parent=11 // pred_check_branch
          %580 = sbr.rel (%p578) target = $region36
        $region35: #{tpu_custom_call.1} parent=11 // pred_region
          _
        $region36: #{tpu_custom_call.1} parent=11 // pred_fallthru
          _
        // Predicated region
        $region37: #{tpu_custom_call.1} parent=11 // pred_check
          %p581 = pneg %p261
        $region38: #{tpu_custom_call.1} parent=11 // pred_check_branch
          %583 = sbr.rel (%p581) target = $region40
        $region39: #{tpu_custom_call.1} parent=11 // pred_region
          %s585 = ssub.s32 1024, 1024
          %586 = vsyncadd [#allocation9], %s585
          %s587 = sshll.u32 [#allocation10], 4
          %s588 = int_to_ptr.vmem [resolvable:$true] %s587
          %593 = dma.hbm_to_vmem [thread:$0]  %s9, 1024, %s588, [#allocation9], 64, 64, 4
        $region40: #{tpu_custom_call.1} parent=11 // pred_fallthru
          _
        // Predicated region
        $region41: #{tpu_custom_call.1} parent=11 // pred_check
          %p594 = pneg %p282
        $region42: #{tpu_custom_call.1} parent=11 // pred_check_branch
          %596 = sbr.rel (%p594) target = $region44
        $region43: #{tpu_custom_call.1} parent=11 // pred_region
          _
        $region44: #{tpu_custom_call.1} parent=11 // pred_fallthru
          _
        // Predicated region
        $region45: #{tpu_custom_call.1} parent=11 // pred_check
          %p597 = pneg %p303
        $region46: #{tpu_custom_call.1} parent=11 // pred_check_branch
          %599 = sbr.rel (%p597) target = $region48
        $region47: #{tpu_custom_call.1} parent=11 // pred_region
          _
        $region48: #{tpu_custom_call.1} parent=11 // pred_fallthru
          _
        // Predicated region
        $region49: #{tpu_custom_call.1} parent=11 // pred_check
          %p600 = pneg %p324
        $region50: #{tpu_custom_call.1} parent=11 // pred_check_branch
          %602 = sbr.rel (%p600) target = $region52
        $region51: #{tpu_custom_call.1} parent=11 // pred_region
          _
        $region52: #{tpu_custom_call.1} parent=11 // pred_fallthru
          _
        // Predicated region
        $region53: #{tpu_custom_call.1} parent=11 // pred_check
          %p603 = pneg %p345
        $region54: #{tpu_custom_call.1} parent=11 // pred_check_branch
          %605 = sbr.rel (%p603) target = $region56
        $region55: #{tpu_custom_call.1} parent=11 // pred_region
          %s607 = ssub.s32 2048, 2048
          %608 = vsyncadd [#allocation12], %s607
          %s609 = sshll.u32 [#allocation11], 4
          %s610 = int_to_ptr.vmem [resolvable:$true] %s609
          %615 = dma.hbm_to_vmem [thread:$0]  %s13, 2048, %s610, [#allocation12], 128, 128, 8
        $region56: #{tpu_custom_call.1} parent=11 // pred_fallthru
          _
        // Predicated region
        $region57: #{tpu_custom_call.1} parent=11 // pred_check
          %p616 = pneg %p366
        $region58: #{tpu_custom_call.1} parent=11 // pred_check_branch
          %618 = sbr.rel (%p616) target = $region60
        $region59: #{tpu_custom_call.1} parent=11 // pred_region
          _
        $region60: #{tpu_custom_call.1} parent=11 // pred_fallthru
          _
        // Predicated region
        $region61: #{tpu_custom_call.1} parent=11 // pred_check
          %p619 = pneg %p387
        $region62: #{tpu_custom_call.1} parent=11 // pred_check_branch
          %621 = sbr.rel (%p619) target = $region64
        $region63: #{tpu_custom_call.1} parent=11 // pred_region
          %s623 = ssub.s32 2048, 2048
          %624 = vsyncadd [#allocation12], %s623
          %s625 = sshll.u32 [#allocation13], 4
          %s626 = int_to_ptr.vmem [resolvable:$true] %s625
          %631 = dma.hbm_to_vmem [thread:$0]  %s15, 2048, %s626, [#allocation12], 64, 64, 4
        $region64: #{tpu_custom_call.1} parent=11 // pred_fallthru
          _
        // Predicated region
        $region65: #{tpu_custom_call.1} parent=11 // pred_check
          %p632 = pneg %p408
        $region66: #{tpu_custom_call.1} parent=11 // pred_check_branch
          %634 = sbr.rel (%p632) target = $region68
        $region67: #{tpu_custom_call.1} parent=11 // pred_region
          _
        $region68: #{tpu_custom_call.1} parent=11 // pred_fallthru
          _
        // Predicated region
        $region69: #{tpu_custom_call.1} parent=11 // pred_check
          %p635 = pneg %p429
        $region70: #{tpu_custom_call.1} parent=11 // pred_check_branch
          %637 = sbr.rel (%p635) target = $region72
        $region71: #{tpu_custom_call.1} parent=11 // pred_region
          _
        $region72: #{tpu_custom_call.1} parent=11 // pred_fallthru
          _
        // Predicated region
        $region73: #{tpu_custom_call.1} parent=11 // pred_check
          %p638 = pneg %p450
        $region74: #{tpu_custom_call.1} parent=11 // pred_check_branch
          %640 = sbr.rel (%p638) target = $region76
        $region75: #{tpu_custom_call.1} parent=11 // pred_region
          _
        $region76: #{tpu_custom_call.1} parent=11 // pred_fallthru
          _
        // Predicated region
        $region77: #{tpu_custom_call.1} parent=11 // pred_check
          %p641 = pneg %p471
        $region78: #{tpu_custom_call.1} parent=11 // pred_check_branch
          %643 = sbr.rel (%p641) target = $region80
        $region79: #{tpu_custom_call.1} parent=11 // pred_region
          _
        $region80: #{tpu_custom_call.1} parent=11 // pred_fallthru
          _
        // Predicated region
        $region81: #{tpu_custom_call.1} parent=11 // pred_check
          %p644 = pneg %p492
        $region82: #{tpu_custom_call.1} parent=11 // pred_check_branch
          %646 = sbr.rel (%p644) target = $region84
        $region83: #{tpu_custom_call.1} parent=11 // pred_region
          _
        $region84: #{tpu_custom_call.1} parent=11 // pred_fallthru
          _
      $region12: #{tpu_custom_call.1} parent=5 // pred_fallthru
        _
      %p647 = scmp.lt.s32.totalorder %s36, 2
      // Predicated region
      $region85: #{tpu_custom_call.1} parent=5 // pred_check
        %p648 = pneg %p647
      $region86: #{tpu_custom_call.1} parent=5 // pred_check_branch
        %650 = sbr.rel (%p648) target = $region88
      $region87: #{tpu_custom_call.1} parent=5 // pred_region
        // Predicated region
        $region89: #{tpu_custom_call.1} parent=87 // pred_check
          %p651 = pneg %p56
        $region90: #{tpu_custom_call.1} parent=87 // pred_check_branch
          %653 = sbr.rel (%p651) target = $region92
        $region91: #{tpu_custom_call.1} parent=87 // pred_region
          %s654 = sand.u32 %s46, 1
          %s655 = scalar_lea.sflag [#allocation3], %s654
          %s656 = sand.u32 %s46, 1
          %s657 = smul.addr %s656, 32
          %s658 = scalar_lea.vmem [#allocation2], %s657
          %s659 = smul.u32 8, %s36
          %s661 = ssub.s32 512, 512
          %662 = vsyncadd %s655, %s661
          %s663 = smul.addr %s659, 64
          %s664 = scalar_lea.hbm %s0, %s663
          %s665 = sshll.u32 %s658, 4
          %s666 = int_to_ptr.vmem [resolvable:$true] %s665
          %671 = dma.hbm_to_vmem [thread:$0]  %s664, 512, %s666, %s655, 64, 64, 4
        $region92: #{tpu_custom_call.1} parent=87 // pred_fallthru
          _
        // Predicated region
        $region93: #{tpu_custom_call.1} parent=87 // pred_check
          %p672 = pneg %p82
        $region94: #{tpu_custom_call.1} parent=87 // pred_check_branch
          %674 = sbr.rel (%p672) target = $region96
        $region95: #{tpu_custom_call.1} parent=87 // pred_region
          %p675 = scmp.lt.s32.totalorder %s36, 1
          %s676 = scalar_select %p675, %s36, 1
          %s677 = smul.addr %s676, 4
          %s678 = scalar_lea.vmem %s1, %s677
        $region96: #{tpu_custom_call.1} parent=87 // pred_fallthru
          _
        // Predicated region
        $region97: #{tpu_custom_call.1} parent=87 // pred_check
          %p679 = pneg %p108
        $region98: #{tpu_custom_call.1} parent=87 // pred_check_branch
          %681 = sbr.rel (%p679) target = $region100
        $region99: #{tpu_custom_call.1} parent=87 // pred_region
          %s682 = smul.u32 8, %s36
          %p683 = scmp.lt.s32.totalorder %s682, 15
          %s684 = scalar_select %p683, %s682, 15
          %s685 = scalar_lea.vmem %s2, %s684
          %s686 = smul.u32 8, %s36
        $region100: #{tpu_custom_call.1} parent=87 // pred_fallthru
          _
      $region88: #{tpu_custom_call.1} parent=5 // pred_fallthru
        _
      %p687 = scmp.le.s32.totalorder 1, %s36
      %p688 = scmp.lt.s32.totalorder %s36, 3
      %p689 = pnand %p687, %p688
      %p690 = pneg %p689
      // Predicated region
      $region101: #{tpu_custom_call.1} parent=5 // pred_check
        _
      $region102: #{tpu_custom_call.1} parent=5 // pred_check_branch
        %692 = sbr.rel (%p689) target = $region104
      $region103: #{tpu_custom_call.1} parent=5 // pred_region
        %s693 = ssub.s32 %s36, 1
        %s694 = sand.u32 %s49, 1
        %s695 = scalar_lea.sflag [#allocation3], %s694
        %s696 = sand.u32 %s49, 1
        %s697 = smul.addr %s696, 32
        %s698 = scalar_lea.vmem [#allocation2], %s697
        // Predicated region
        $region105: #{tpu_custom_call.1} parent=103 // pred_check
          %p699 = pneg %p62
        $region106: #{tpu_custom_call.1} parent=103 // pred_check_branch
          %701 = sbr.rel (%p699) target = $region108
        $region107: #{tpu_custom_call.1} parent=103 // pred_region
          %702 = dma.done %s695, 512
        $region108: #{tpu_custom_call.1} parent=103 // pred_fallthru
          _
        // Predicated region
        $region109: #{tpu_custom_call.1} parent=103 // pred_check
          %p703 = pneg %p135
        $region110: #{tpu_custom_call.1} parent=103 // pred_check_branch
          %705 = sbr.rel (%p703) target = $region112
        $region111: #{tpu_custom_call.1} parent=103 // pred_region
          %706 = dma.done [#allocation6], 1024
        $region112: #{tpu_custom_call.1} parent=103 // pred_fallthru
          _
        // Predicated region
        $region113: #{tpu_custom_call.1} parent=103 // pred_check
          %p707 = pneg %p156
        $region114: #{tpu_custom_call.1} parent=103 // pred_check_branch
          %709 = sbr.rel (%p707) target = $region116
        $region115: #{tpu_custom_call.1} parent=103 // pred_region
          %710 = dma.done [#allocation6], 1024
        $region116: #{tpu_custom_call.1} parent=103 // pred_fallthru
          _
        // Predicated region
        $region117: #{tpu_custom_call.1} parent=103 // pred_check
          %p711 = pneg %p177
        $region118: #{tpu_custom_call.1} parent=103 // pred_check_branch
          %713 = sbr.rel (%p711) target = $region120
        $region119: #{tpu_custom_call.1} parent=103 // pred_region
          %714 = dma.done [#allocation9], 1024
        $region120: #{tpu_custom_call.1} parent=103 // pred_fallthru
          _
        // Predicated region
        $region121: #{tpu_custom_call.1} parent=103 // pred_check
          %p715 = pneg %p261
        $region122: #{tpu_custom_call.1} parent=103 // pred_check_branch
          %717 = sbr.rel (%p715) target = $region124
        $region123: #{tpu_custom_call.1} parent=103 // pred_region
          %718 = dma.done [#allocation9], 1024
        $region124: #{tpu_custom_call.1} parent=103 // pred_fallthru
          _
        // Predicated region
        $region125: #{tpu_custom_call.1} parent=103 // pred_check
          %p719 = pneg %p345
        $region126: #{tpu_custom_call.1} parent=103 // pred_check_branch
          %721 = sbr.rel (%p719) target = $region128
        $region127: #{tpu_custom_call.1} parent=103 // pred_region
          %722 = dma.done [#allocation12], 2048
        $region128: #{tpu_custom_call.1} parent=103 // pred_fallthru
          _
        // Predicated region
        $region129: #{tpu_custom_call.1} parent=103 // pred_check
          %p723 = pneg %p387
        $region130: #{tpu_custom_call.1} parent=103 // pred_check_branch
          %725 = sbr.rel (%p723) target = $region132
        $region131: #{tpu_custom_call.1} parent=103 // pred_region
          %726 = dma.done [#allocation12], 2048
        $region132: #{tpu_custom_call.1} parent=103 // pred_fallthru
          _
        %s727 = sand.u32 %s49, 1
        %s728 = scalar_lea.sflag [#allocation3], %s727
        %s729 = sand.u32 %s49, 1
        %s730 = smul.addr %s729, 32
        %s731 = scalar_lea.vmem [#allocation2], %s730
        %p732 = pneg %p62
        %p733 = pneg %p59
        %p734 = scmp.lt.s32.totalorder %s41, 1
        %s735 = scalar_select %p734, %s41, 1
        %s736 = smul.addr %s735, 4
        %s737 = scalar_lea.vmem %s1, %s736
        %p738 = pneg %p88
        %p739 = pneg %p85
        %s740 = smul.u32 8, %s41
        %p741 = scmp.lt.s32.totalorder %s740, 15
        %s742 = scalar_select %p741, %s740, 15
        %s743 = scalar_lea.vmem %s2, %s742
        %p744 = pneg %p114
        %p745 = pneg %p111
        %p746 = pneg %p135
        %p747 = pneg %p132
        %p748 = pneg %p156
        %p749 = pneg %p153
        %p750 = pneg %p177
        %p751 = pneg %p174
        %p752 = pneg %p198
        %p753 = pneg %p195
        %p754 = pneg %p219
        %p755 = pneg %p216
        %p756 = pneg %p240
        %p757 = pneg %p237
        %p758 = pneg %p261
        %p759 = pneg %p258
        %p760 = pneg %p282
        %p761 = pneg %p279
        %p762 = pneg %p303
        %p763 = pneg %p300
        %p764 = pneg %p324
        %p765 = pneg %p321
        %p766 = pneg %p345
        %p767 = pneg %p342
        %p768 = pneg %p366
        %p769 = pneg %p363
        %p770 = pneg %p387
        %p771 = pneg %p384
        %p772 = pneg %p408
        %p773 = pneg %p405
        %p774 = pneg %p429
        %p775 = pneg %p426
        %p776 = pneg %p450
        %p777 = pneg %p447
        %p778 = pneg %p471
        %p779 = pneg %p468
        %p780 = pneg %p492
        %p781 = pneg %p489
        %p782 = pneg %p518
        %p783 = pneg %p515
        %s784 = sand.u32 %s505, 1
        %s785 = scalar_lea.sflag [#allocation4], %s784
        %s786 = sand.u32 %s505, 1
        %s787 = smul.addr %s786, 8
        %s788 = scalar_lea.vmem [#allocation14], %s787
        %s789 = smul.u32 8, %s41
        %p790 = scmp.lt.s32.totalorder %s41, 1
        %s791 = scalar_select %p790, %s41, 1
        %s792 = smul.addr %s791, 4
        %s793 = scalar_lea.vmem %s1, %s792
        %s794 = smul.u32 8, %s41
        %p795 = scmp.lt.s32.totalorder %s794, 15
        %s796 = scalar_select %p795, %s794, 15
        %s797 = scalar_lea.vmem %s2, %s796
        %s798 = smul.u32 8, %s41
        %v800 = vld [vmem:[%s698] sm:$0xf]
        %v801 = vld [vmem:[%s698 + $0x4] sm:$0xf]
        %v802 = vld [vmem:[%s698 + $0x8] sm:$0xf]
        %v803 = vld [vmem:[%s698 + $0xc] sm:$0xf]
        %v804 = vld [vmem:[%s698 + $0x10] sm:$0xf]
        %v805 = vld [vmem:[%s698 + $0x14] sm:$0xf]
        %v806 = vld [vmem:[%s698 + $0x18] sm:$0xf]
        %v807 = vld [vmem:[%s698 + $0x1c] sm:$0xf]
        %v808 = vld [vmem:[#allocation7] sm:$0xf]
        %v809 = vld [vmem:[#allocation7 + $0x4] sm:$0xf]
        %v810 = vld [vmem:[#allocation7 + $0x8] sm:$0xf]
        %v811 = vld [vmem:[#allocation7 + $0xc] sm:$0xf]
        %v812 = vld [vmem:[#allocation7 + $0x10] sm:$0xf]
        %v813 = vld [vmem:[#allocation7 + $0x14] sm:$0xf]
        %v814 = vld [vmem:[#allocation7 + $0x18] sm:$0xf]
        %v815 = vld [vmem:[#allocation7 + $0x1c] sm:$0xf]
        %v816 = vld [vmem:[#allocation7 + $0x20] sm:$0xf]
        %v817 = vld [vmem:[#allocation7 + $0x24] sm:$0xf]
        %v818 = vld [vmem:[#allocation7 + $0x28] sm:$0xf]
        %v819 = vld [vmem:[#allocation7 + $0x2c] sm:$0xf]
        %v820 = vld [vmem:[#allocation7 + $0x30] sm:$0xf]
        %v821 = vld [vmem:[#allocation7 + $0x34] sm:$0xf]
        %v822 = vld [vmem:[#allocation7 + $0x38] sm:$0xf]
        %v823 = vld [vmem:[#allocation7 + $0x3c] sm:$0xf]
        %v824 = vld [vmem:[%s7] sm:$0x1]
        %v826 = vlaneseq
        %v827 = vshrl.u32 %v826, 7
        %v828 = vsub.s32 0, %v827
        %v829 = vrot.slane %v824, %v828
        %v839 = vunpack.c.l.b16 %v800
        %v840 = vunpack.c.l.b16 %v801
        %v841 = vunpack.c.l.b16 %v802
        %v842 = vunpack.c.l.b16 %v803
        %v843 = vunpack.c.l.b16 %v804
        %v844 = vunpack.c.l.b16 %v805
        %v845 = vunpack.c.l.b16 %v806
        %v846 = vunpack.c.l.b16 %v807
        %v847 = vpack.c.b16 %v840, %v839
        %v848 = vpack.c.b16 %v842, %v841
        %v849 = vpack.c.b16 %v844, %v843
        %v850 = vpack.c.b16 %v846, %v845
        %v871 = vunpack.c.l.b16 %v808
        %v872 = vunpack.c.l.b16 %v809
        %v873 = vunpack.c.l.b16 %v810
        %v874 = vunpack.c.l.b16 %v811
        %v875 = vunpack.c.l.b16 %v812
        %v876 = vunpack.c.l.b16 %v813
        %v877 = vunpack.c.l.b16 %v814
        %v878 = vunpack.c.l.b16 %v815
        %v879 = vunpack.c.l.b16 %v816
        %v880 = vunpack.c.l.b16 %v817
        %v881 = vunpack.c.l.b16 %v818
        %v882 = vunpack.c.l.b16 %v819
        %v883 = vunpack.c.l.b16 %v820
        %v884 = vunpack.c.l.b16 %v821
        %v885 = vunpack.c.l.b16 %v822
        %v886 = vunpack.c.l.b16 %v823
        %v887 = vpack.c.b16 %v872, %v871
        %v888 = vpack.c.b16 %v874, %v873
        %v889 = vpack.c.b16 %v876, %v875
        %v890 = vpack.c.b16 %v878, %v877
        %v891 = vpack.c.b16 %v880, %v879
        %v892 = vpack.c.b16 %v882, %v881
        %v893 = vpack.c.b16 %v884, %v883
        %v894 = vpack.c.b16 %v886, %v885
        %903 = vmatprep.subr.bf16.mxu0 0
        %904 = vmatpush1.bf16.msra.mxu0 %v887
        %905 = vmatprep.subr.bf16.mxu0 0
        %906 = vmatpush1.bf16.msra.mxu0 %v888
        %907 = vmatprep.subr.bf16.mxu0 0
        %908 = vmatpush1.bf16.msra.mxu0 %v889
        %909 = vmatprep.subr.bf16.mxu0 0
        %910 = vmatpush1.bf16.msra.mxu0 %v890
        %911 = vmatprep.subr.bf16.mxu0 0
        %912 = vmatpush1.bf16.msra.mxu0 %v891
        %913 = vmatprep.subr.bf16.mxu0 0
        %914 = vmatpush1.bf16.msra.mxu0 %v892
        %915 = vmatprep.subr.bf16.mxu0 0
        %916 = vmatpush1.bf16.msra.mxu0 %v893
        %917 = vmatprep.subr.bf16.mxu0 0
        %918 = vmatpush1.bf16.msra.mxu0 %v894
        %919 = vmatprep.subr.bf16.mxu0 0
        %920 = vmatpush1.bf16.msra.mxu0 0
        %921 = vmatprep.subr.bf16.mxu0 0
        %922 = vmatpush1.bf16.msra.mxu0 0
        %923 = vmatprep.subr.bf16.mxu0 0
        %924 = vmatpush1.bf16.msra.mxu0 0
        %925 = vmatprep.subr.bf16.mxu0 0
        %926 = vmatpush1.bf16.msra.mxu0 0
        %927 = vmatprep.subr.bf16.mxu0 0
        %928 = vmatpush1.bf16.msra.mxu0 0
        %929 = vmatprep.subr.bf16.mxu0 0
        %930 = vmatpush1.bf16.msra.mxu0 0
        %931 = vmatprep.subr.bf16.mxu0 0
        %932 = vmatpush1.bf16.msra.mxu0 0
        %933 = vmatprep.subr.bf16.mxu0 0
        %934 = vmatpush1.bf16.msra.mxu0 0
        %935 = vmatprep.mubr.bf16.mxu0 0
        %936 = vmatmul.mubr.bf16.gmra.mrb[0].mxu0 %v847
        %v937 = vpop.f32.mrb[0].mxu0
        %v938 = vadd.f32 %v829, %v937
        %v939 = vpop.f32.mrb[0].mxu0
        %v940 = vpop.f32.mrb[0].mxu0
        %v941 = vadd.f32 %v829, %v940
        %v942 = vpop.f32.mrb[0].mxu0
        %943 = vmatprep.mubr.bf16.mxu0 0
        %944 = vmatmul.mubr.bf16.gmra.mrb[0].mxu0 %v848
        %v945 = vpop.f32.mrb[0].mxu0
        %v946 = vadd.f32 %v829, %v945
        %v947 = vpop.f32.mrb[0].mxu0
        %v948 = vpop.f32.mrb[0].mxu0
        %v949 = vadd.f32 %v829, %v948
        %v950 = vpop.f32.mrb[0].mxu0
        %951 = vmatprep.mubr.bf16.mxu0 0
        %952 = vmatmul.mubr.bf16.gmra.mrb[0].mxu0 %v849
        %v953 = vpop.f32.mrb[0].mxu0
        %v954 = vadd.f32 %v829, %v953
        %v955 = vpop.f32.mrb[0].mxu0
        %v956 = vpop.f32.mrb[0].mxu0
        %v957 = vadd.f32 %v829, %v956
        %v958 = vpop.f32.mrb[0].mxu0
        %959 = vmatprep.mubr.bf16.mxu0 0
        %960 = vmatmul.mubr.bf16.gmra.mrb[0].mxu0 %v850
        %v961 = vpop.f32.mrb[0].mxu0
        %v962 = vadd.f32 %v829, %v961
        %v963 = vpop.f32.mrb[0].mxu0
        %v964 = vpop.f32.mrb[0].mxu0
        %v965 = vadd.f32 %v829, %v964
        %v966 = vpop.f32.mrb[0].mxu0
        %967 = vdwg.mxu0
        %v968 = vld [vmem:[#allocation8] sm:$0xf]
        %v969 = vld [vmem:[#allocation8 + $0x4] sm:$0xf]
        %v970 = vld [vmem:[#allocation8 + $0x8] sm:$0xf]
        %v971 = vld [vmem:[#allocation8 + $0xc] sm:$0xf]
        %v972 = vld [vmem:[#allocation8 + $0x10] sm:$0xf]
        %v973 = vld [vmem:[#allocation8 + $0x14] sm:$0xf]
        %v974 = vld [vmem:[#allocation8 + $0x18] sm:$0xf]
        %v975 = vld [vmem:[#allocation8 + $0x1c] sm:$0xf]
        %v976 = vld [vmem:[#allocation8 + $0x20] sm:$0xf]
        %v977 = vld [vmem:[#allocation8 + $0x24] sm:$0xf]
        %v978 = vld [vmem:[#allocation8 + $0x28] sm:$0xf]
        %v979 = vld [vmem:[#allocation8 + $0x2c] sm:$0xf]
        %v980 = vld [vmem:[#allocation8 + $0x30] sm:$0xf]
        %v981 = vld [vmem:[#allocation8 + $0x34] sm:$0xf]
        %v982 = vld [vmem:[#allocation8 + $0x38] sm:$0xf]
        %v983 = vld [vmem:[#allocation8 + $0x3c] sm:$0xf]
        %v984 = vld [vmem:[%s8] sm:$0x1]
        %v986 = vlaneseq
        %v987 = vshrl.u32 %v986, 7
        %v988 = vsub.s32 0, %v987
        %v989 = vrot.slane %v984, %v988
        %v1007 = vunpack.c.l.b16 %v968
        %v1008 = vunpack.c.l.b16 %v969
        %v1009 = vunpack.c.l.b16 %v970
        %v1010 = vunpack.c.l.b16 %v971
        %v1011 = vunpack.c.l.b16 %v972
        %v1012 = vunpack.c.l.b16 %v973
        %v1013 = vunpack.c.l.b16 %v974
        %v1014 = vunpack.c.l.b16 %v975
        %v1015 = vunpack.c.l.b16 %v976
        %v1016 = vunpack.c.l.b16 %v977
        %v1017 = vunpack.c.l.b16 %v978
        %v1018 = vunpack.c.l.b16 %v979
        %v1019 = vunpack.c.l.b16 %v980
        %v1020 = vunpack.c.l.b16 %v981
        %v1021 = vunpack.c.l.b16 %v982
        %v1022 = vunpack.c.l.b16 %v983
        %v1023 = vpack.c.b16 %v1008, %v1007
        %v1024 = vpack.c.b16 %v1010, %v1009
        %v1025 = vpack.c.b16 %v1012, %v1011
        %v1026 = vpack.c.b16 %v1014, %v1013
        %v1027 = vpack.c.b16 %v1016, %v1015
        %v1028 = vpack.c.b16 %v1018, %v1017
        %v1029 = vpack.c.b16 %v1020, %v1019
        %v1030 = vpack.c.b16 %v1022, %v1021
        %1039 = vmatprep.subr.bf16.mxu0 0
        %1040 = vmatpush1.bf16.msra.mxu0 %v1023
        %1041 = vmatprep.subr.bf16.mxu0 0
        %1042 = vmatpush1.bf16.msra.mxu0 %v1024
        %1043 = vmatprep.subr.bf16.mxu0 0
        %1044 = vmatpush1.bf16.msra.mxu0 %v1025
        %1045 = vmatprep.subr.bf16.mxu0 0
        %1046 = vmatpush1.bf16.msra.mxu0 %v1026
        %1047 = vmatprep.subr.bf16.mxu0 0
        %1048 = vmatpush1.bf16.msra.mxu0 %v1027
        %1049 = vmatprep.subr.bf16.mxu0 0
        %1050 = vmatpush1.bf16.msra.mxu0 %v1028
        %1051 = vmatprep.subr.bf16.mxu0 0
        %1052 = vmatpush1.bf16.msra.mxu0 %v1029
        %1053 = vmatprep.subr.bf16.mxu0 0
        %1054 = vmatpush1.bf16.msra.mxu0 %v1030
        %1055 = vmatprep.subr.bf16.mxu0 0
        %1056 = vmatpush1.bf16.msra.mxu0 0
        %1057 = vmatprep.subr.bf16.mxu0 0
        %1058 = vmatpush1.bf16.msra.mxu0 0
        %1059 = vmatprep.subr.bf16.mxu0 0
        %1060 = vmatpush1.bf16.msra.mxu0 0
        %1061 = vmatprep.subr.bf16.mxu0 0
        %1062 = vmatpush1.bf16.msra.mxu0 0
        %1063 = vmatprep.subr.bf16.mxu0 0
        %1064 = vmatpush1.bf16.msra.mxu0 0
        %1065 = vmatprep.subr.bf16.mxu0 0
        %1066 = vmatpush1.bf16.msra.mxu0 0
        %1067 = vmatprep.subr.bf16.mxu0 0
        %1068 = vmatpush1.bf16.msra.mxu0 0
        %1069 = vmatprep.subr.bf16.mxu0 0
        %1070 = vmatpush1.bf16.msra.mxu0 0
        %1071 = vmatprep.mubr.bf16.mxu0 0
        %1072 = vmatmul.mubr.bf16.gmra.mrb[0].mxu0 %v847
        %v1073 = vpop.f32.mrb[0].mxu0
        %v1074 = vadd.f32 %v989, %v1073
        %v1075 = vpop.f32.mrb[0].mxu0
        %v1076 = vpop.f32.mrb[0].mxu0
        %v1077 = vadd.f32 %v989, %v1076
        %v1078 = vpop.f32.mrb[0].mxu0
        %1079 = vmatprep.mubr.bf16.mxu0 0
        %1080 = vmatmul.mubr.bf16.gmra.mrb[0].mxu0 %v848
        %v1081 = vpop.f32.mrb[0].mxu0
        %v1082 = vadd.f32 %v989, %v1081
        %v1083 = vpop.f32.mrb[0].mxu0
        %v1084 = vpop.f32.mrb[0].mxu0
        %v1085 = vadd.f32 %v989, %v1084
        %v1086 = vpop.f32.mrb[0].mxu0
        %1087 = vmatprep.mubr.bf16.mxu0 0
        %1088 = vmatmul.mubr.bf16.gmra.mrb[0].mxu0 %v849
        %v1089 = vpop.f32.mrb[0].mxu0
        %v1090 = vadd.f32 %v989, %v1089
        %v1091 = vpop.f32.mrb[0].mxu0
        %v1092 = vpop.f32.mrb[0].mxu0
        %v1093 = vadd.f32 %v989, %v1092
        %v1094 = vpop.f32.mrb[0].mxu0
        %1095 = vmatprep.mubr.bf16.mxu0 0
        %1096 = vmatmul.mubr.bf16.gmra.mrb[0].mxu0 %v850
        %v1097 = vpop.f32.mrb[0].mxu0
        %v1098 = vadd.f32 %v989, %v1097
        %v1099 = vpop.f32.mrb[0].mxu0
        %v1100 = vpop.f32.mrb[0].mxu0
        %v1101 = vadd.f32 %v989, %v1100
        %v1102 = vpop.f32.mrb[0].mxu0
        %1103 = vdwg.mxu0
        %v1104 = vpack.c.bf16 %v938, %v938
        %v1105 = vpack.c.bf16 %v941, %v941
        %v1106 = vpack.c.bf16 %v946, %v946
        %v1107 = vpack.c.bf16 %v949, %v949
        %v1108 = vpack.c.bf16 %v954, %v954
        %v1109 = vpack.c.bf16 %v957, %v957
        %v1110 = vpack.c.bf16 %v962, %v962
        %v1111 = vpack.c.bf16 %v965, %v965
        %v1112 = vpack.c.bf16 %v1074, %v1074
        %v1113 = vpack.c.bf16 %v1077, %v1077
        %v1114 = vpack.c.bf16 %v1082, %v1082
        %v1115 = vpack.c.bf16 %v1085, %v1085
        %v1116 = vpack.c.bf16 %v1090, %v1090
        %v1117 = vpack.c.bf16 %v1093, %v1093
        %v1118 = vpack.c.bf16 %v1098, %v1098
        %v1119 = vpack.c.bf16 %v1101, %v1101
        %v1120 = vld [vmem:[%s793] sm:$0xf]
        %v1121 = vld [vmem:[#allocation5] sm:$0xf]
        %v1122 = vld [vmem:[#allocation5 + $0x4] sm:$0xf]
        %v1123 = vld [vmem:[#allocation5 + $0x8] sm:$0xf]
        %v1124 = vld [vmem:[#allocation5 + $0xc] sm:$0xf]
        %v1125 = vld [vmem:[#allocation5 + $0x10] sm:$0xf]
        %v1126 = vld [vmem:[#allocation5 + $0x14] sm:$0xf]
        %v1127 = vld [vmem:[#allocation5 + $0x18] sm:$0xf]
        %v1128 = vld [vmem:[#allocation5 + $0x1c] sm:$0xf]
        %v1129 = vld [vmem:[#allocation5 + $0x20] sm:$0xf]
        %v1130 = vld [vmem:[#allocation5 + $0x24] sm:$0xf]
        %v1131 = vld [vmem:[#allocation5 + $0x28] sm:$0xf]
        %v1132 = vld [vmem:[#allocation5 + $0x2c] sm:$0xf]
        %v1133 = vld [vmem:[#allocation5 + $0x30] sm:$0xf]
        %v1134 = vld [vmem:[#allocation5 + $0x34] sm:$0xf]
        %v1135 = vld [vmem:[#allocation5 + $0x38] sm:$0xf]
        %v1136 = vld [vmem:[#allocation5 + $0x3c] sm:$0xf]
        %v1137 = vld [vmem:[%s6] sm:$0x1]
        %v1139 = vlaneseq
        %v1140 = vshrl.u32 %v1139, 7
        %v1141 = vsub.s32 0, %v1140
        %v1142 = vrot.slane %v1137, %v1141
        %v1160 = vunpack.c.l.b16 %v1121
        %v1161 = vunpack.c.l.b16 %v1122
        %v1162 = vunpack.c.l.b16 %v1123
        %v1163 = vunpack.c.l.b16 %v1124
        %v1164 = vunpack.c.l.b16 %v1125
        %v1165 = vunpack.c.l.b16 %v1126
        %v1166 = vunpack.c.l.b16 %v1127
        %v1167 = vunpack.c.l.b16 %v1128
        %v1168 = vunpack.c.l.b16 %v1129
        %v1169 = vunpack.c.l.b16 %v1130
        %v1170 = vunpack.c.l.b16 %v1131
        %v1171 = vunpack.c.l.b16 %v1132
        %v1172 = vunpack.c.l.b16 %v1133
        %v1173 = vunpack.c.l.b16 %v1134
        %v1174 = vunpack.c.l.b16 %v1135
        %v1175 = vunpack.c.l.b16 %v1136
        %v1176 = vpack.c.b16 %v1161, %v1160
        %v1177 = vpack.c.b16 %v1163, %v1162
        %v1178 = vpack.c.b16 %v1165, %v1164
        %v1179 = vpack.c.b16 %v1167, %v1166
        %v1180 = vpack.c.b16 %v1169, %v1168
        %v1181 = vpack.c.b16 %v1171, %v1170
        %v1182 = vpack.c.b16 %v1173, %v1172
        %v1183 = vpack.c.b16 %v1175, %v1174
        %1192 = vmatprep.subr.bf16.mxu0 0
        %1193 = vmatpush1.bf16.msra.mxu0 %v1176
        %1194 = vmatprep.subr.bf16.mxu0 0
        %1195 = vmatpush1.bf16.msra.mxu0 %v1177
        %1196 = vmatprep.subr.bf16.mxu0 0
        %1197 = vmatpush1.bf16.msra.mxu0 %v1178
        %1198 = vmatprep.subr.bf16.mxu0 0
        %1199 = vmatpush1.bf16.msra.mxu0 %v1179
        %1200 = vmatprep.subr.bf16.mxu0 0
        %1201 = vmatpush1.bf16.msra.mxu0 %v1180
        %1202 = vmatprep.subr.bf16.mxu0 0
        %1203 = vmatpush1.bf16.msra.mxu0 %v1181
        %1204 = vmatprep.subr.bf16.mxu0 0
        %1205 = vmatpush1.bf16.msra.mxu0 %v1182
        %1206 = vmatprep.subr.bf16.mxu0 0
        %1207 = vmatpush1.bf16.msra.mxu0 %v1183
        %1208 = vmatprep.subr.bf16.mxu0 0
        %1209 = vmatpush1.bf16.msra.mxu0 0
        %1210 = vmatprep.subr.bf16.mxu0 0
        %1211 = vmatpush1.bf16.msra.mxu0 0
        %1212 = vmatprep.subr.bf16.mxu0 0
        %1213 = vmatpush1.bf16.msra.mxu0 0
        %1214 = vmatprep.subr.bf16.mxu0 0
        %1215 = vmatpush1.bf16.msra.mxu0 0
        %1216 = vmatprep.subr.bf16.mxu0 0
        %1217 = vmatpush1.bf16.msra.mxu0 0
        %1218 = vmatprep.subr.bf16.mxu0 0
        %1219 = vmatpush1.bf16.msra.mxu0 0
        %1220 = vmatprep.subr.bf16.mxu0 0
        %1221 = vmatpush1.bf16.msra.mxu0 0
        %1222 = vmatprep.subr.bf16.mxu0 0
        %1223 = vmatpush1.bf16.msra.mxu0 0
        %1224 = vmatprep.mubr.bf16.mxu0 0
        %1225 = vmatmul.mubr.bf16.gmra.mrb[0].mxu0 %v1120
        %v1226 = vpop.f32.mrb[0].mxu0
        %v1227 = vadd.f32 %v1142, %v1226
        %v1228 = vpop.f32.mrb[0].mxu0
        %v1229 = vpop.f32.mrb[0].mxu0
        %v1230 = vpop.f32.mrb[0].mxu0
        %1231 = vdwg.mxu0
        %v1232 = vpack.c.bf16 %v1227, %v1227
        %v1235 = vunpack.c.l.s4 1966171168
        %v1236 = vunpack.c.0.s8 %v1235
        %v1237 = vlaneseq
        %v1238 = vshrl.u32 %v1237, 7
        %v1239 = vsub.s32 %v1236, %v1238
        %v1240 = vrot.slane %v1232, %v1239
        %v1241 = vcombine.high %v1240, %v1240
        %v1243 = vunpack.c.l.s4 1966171168
        %v1244 = vunpack.c.0.s8 %v1243
        %v1245 = vlaneseq
        %v1246 = vshrl.u32 %v1245, 7
        %v1247 = vsub.s32 %v1244, %v1246
        %v1248 = vrot.slane %v1240, %v1247
        %v1250 = vunpack.c.l.s4 1966171168
        %v1251 = vunpack.c.0.s8 %v1250
        %v1252 = vlaneseq
        %v1253 = vshrl.u32 %v1252, 7
        %v1254 = vsub.s32 %v1251, %v1253
        %v1255 = vrot.slane %v1241, %v1254
        %v1256 = vcombine.high %v1248, %v1248
        %v1257 = vcombine.high %v1255, %v1255
        %v1258 = vunpack.i.l.s16 %v1248
        %v1259 = vunpack.i.h.s16 %v1248
        %v1260 = vunpack.i.l.s16 %v1255
        %v1261 = vunpack.i.h.s16 %v1255
        %v1262 = vunpack.i.l.s16 %v1256
        %v1263 = vunpack.i.h.s16 %v1256
        %v1264 = vunpack.i.l.s16 %v1257
        %v1265 = vunpack.i.h.s16 %v1257
        %v1266 = vld [vmem:[%s797] sm:$0x1]
        %v1267 = vld [vmem:[%s797 + $0x1] sm:$0x1]
        %v1268 = vld [vmem:[%s797 + $0x2] sm:$0x1]
        %v1269 = vld [vmem:[%s797 + $0x3] sm:$0x1]
        %v1270 = vld [vmem:[%s797 + $0x4] sm:$0x1]
        %v1271 = vld [vmem:[%s797 + $0x5] sm:$0x1]
        %v1272 = vld [vmem:[%s797 + $0x6] sm:$0x1]
        %v1273 = vld [vmem:[%s797 + $0x7] sm:$0x1]
        %v1274 = vpack.i.b16 %v1258, %v1258
        %v1275 = vlaneseq
        %v1276 = vshrl.u32 %v1275, 7
        %v1277 = vsub.s32 0, %v1276
        %v1278 = vrot.slane %v1274, %v1277
        %1280 = vmatprep.subr.bf16.mxu0 0
        %1281 = vmatpush1.bf16.xpose.msra.mxu0 %v1104
        %1282 = vmatprep.subr.bf16.mxu0 0
        %1283 = vmatpush1.bf16.xpose.msra.mxu0 0
        %1284 = vmatprep.subr.bf16.mxu0 0
        %1285 = vmatpush1.bf16.xpose.msra.mxu0 0
        %1286 = vmatprep.subr.bf16.mxu0 0
        %1287 = vmatpush1.bf16.xpose.msra.mxu0 0
        %1288 = vmatprep.subr.bf16.mxu0 0
        %1289 = vmatpush1.bf16.xpose.msra.mxu0 0
        %1290 = vmatprep.subr.bf16.mxu0 0
        %1291 = vmatpush1.bf16.xpose.msra.mxu0 0
        %1292 = vmatprep.subr.bf16.mxu0 0
        %1293 = vmatpush1.bf16.xpose.msra.mxu0 0
        %1294 = vmatprep.subr.bf16.mxu0 0
        %1295 = vmatpush1.bf16.xpose.msra.mxu0 0
        %1296 = vmatprep.subr.bf16.mxu0 0
        %1297 = vmatpush1.bf16.xpose.msra.mxu0 0
        %1298 = vmatprep.subr.bf16.mxu0 0
        %1299 = vmatpush1.bf16.xpose.msra.mxu0 0
        %1300 = vmatprep.subr.bf16.mxu0 0
        %1301 = vmatpush1.bf16.xpose.msra.mxu0 0
        %1302 = vmatprep.subr.bf16.mxu0 0
        %1303 = vmatpush1.bf16.xpose.msra.mxu0 0
        %1304 = vmatprep.subr.bf16.mxu0 0
        %1305 = vmatpush1.bf16.xpose.msra.mxu0 0
        %1306 = vmatprep.subr.bf16.mxu0 0
        %1307 = vmatpush1.bf16.xpose.msra.mxu0 0
        %1308 = vmatprep.subr.bf16.mxu0 0
        %1309 = vmatpush1.bf16.xpose.msra.mxu0 0
        %1310 = vmatprep.subr.bf16.mxu0 0
        %1311 = vmatpush1.bf16.xpose.msra.mxu0 0
        %1312 = vmatprep.mubr.bf16.mxu0 0
        %1313 = vmatmul.mubr.bf16.gmra.mrb[0].mxu0 %v1278
        %v1314 = vpop.f32.mrb[0].mxu0
        %v1315 = vadd.f32 %v1266, %v1314
        %v1316 = vpop.f32.mrb[0].mxu0
        %v1317 = vpop.f32.mrb[0].mxu0
        %v1318 = vpop.f32.mrb[0].mxu0
        %1319 = vdwg.mxu0
        %v1320 = vpack.i.b16 %v1259, %v1259
        %v1321 = vlaneseq
        %v1322 = vshrl.u32 %v1321, 7
        %v1323 = vsub.s32 0, %v1322
        %v1324 = vrot.slane %v1320, %v1323
        %1326 = vmatprep.subr.bf16.mxu0 0
        %1327 = vmatpush1.bf16.xpose.msra.mxu0 %v1105
        %1328 = vmatprep.subr.bf16.mxu0 0
        %1329 = vmatpush1.bf16.xpose.msra.mxu0 0
        %1330 = vmatprep.subr.bf16.mxu0 0
        %1331 = vmatpush1.bf16.xpose.msra.mxu0 0
        %1332 = vmatprep.subr.bf16.mxu0 0
        %1333 = vmatpush1.bf16.xpose.msra.mxu0 0
        %1334 = vmatprep.subr.bf16.mxu0 0
        %1335 = vmatpush1.bf16.xpose.msra.mxu0 0
        %1336 = vmatprep.subr.bf16.mxu0 0
        %1337 = vmatpush1.bf16.xpose.msra.mxu0 0
        %1338 = vmatprep.subr.bf16.mxu0 0
        %1339 = vmatpush1.bf16.xpose.msra.mxu0 0
        %1340 = vmatprep.subr.bf16.mxu0 0
        %1341 = vmatpush1.bf16.xpose.msra.mxu0 0
        %1342 = vmatprep.subr.bf16.mxu0 0
        %1343 = vmatpush1.bf16.xpose.msra.mxu0 0
        %1344 = vmatprep.subr.bf16.mxu0 0
        %1345 = vmatpush1.bf16.xpose.msra.mxu0 0
        %1346 = vmatprep.subr.bf16.mxu0 0
        %1347 = vmatpush1.bf16.xpose.msra.mxu0 0
        %1348 = vmatprep.subr.bf16.mxu0 0
        %1349 = vmatpush1.bf16.xpose.msra.mxu0 0
        %1350 = vmatprep.subr.bf16.mxu0 0
        %1351 = vmatpush1.bf16.xpose.msra.mxu0 0
        %1352 = vmatprep.subr.bf16.mxu0 0
        %1353 = vmatpush1.bf16.xpose.msra.mxu0 0
        %1354 = vmatprep.subr.bf16.mxu0 0
        %1355 = vmatpush1.bf16.xpose.msra.mxu0 0
        %1356 = vmatprep.subr.bf16.mxu0 0
        %1357 = vmatpush1.bf16.xpose.msra.mxu0 0
        %1358 = vmatprep.mubr.bf16.mxu0 0
        %1359 = vmatmul.mubr.bf16.gmra.mrb[0].mxu0 %v1324
        %v1360 = vpop.f32.mrb[0].mxu0
        %v1361 = vadd.f32 %v1267, %v1360
        %v1362 = vpop.f32.mrb[0].mxu0
        %v1363 = vpop.f32.mrb[0].mxu0
        %v1364 = vpop.f32.mrb[0].mxu0
        %1365 = vdwg.mxu0
        %v1366 = vpack.i.b16 %v1260, %v1260
        %v1367 = vlaneseq
        %v1368 = vshrl.u32 %v1367, 7
        %v1369 = vsub.s32 0, %v1368
        %v1370 = vrot.slane %v1366, %v1369
        %1372 = vmatprep.subr.bf16.mxu0 0
        %1373 = vmatpush1.bf16.xpose.msra.mxu0 %v1106
        %1374 = vmatprep.subr.bf16.mxu0 0
        %1375 = vmatpush1.bf16.xpose.msra.mxu0 0
        %1376 = vmatprep.subr.bf16.mxu0 0
        %1377 = vmatpush1.bf16.xpose.msra.mxu0 0
        %1378 = vmatprep.subr.bf16.mxu0 0
        %1379 = vmatpush1.bf16.xpose.msra.mxu0 0
        %1380 = vmatprep.subr.bf16.mxu0 0
        %1381 = vmatpush1.bf16.xpose.msra.mxu0 0
        %1382 = vmatprep.subr.bf16.mxu0 0
        %1383 = vmatpush1.bf16.xpose.msra.mxu0 0
        %1384 = vmatprep.subr.bf16.mxu0 0
        %1385 = vmatpush1.bf16.xpose.msra.mxu0 0
        %1386 = vmatprep.subr.bf16.mxu0 0
        %1387 = vmatpush1.bf16.xpose.msra.mxu0 0
        %1388 = vmatprep.subr.bf16.mxu0 0
        %1389 = vmatpush1.bf16.xpose.msra.mxu0 0
        %1390 = vmatprep.subr.bf16.mxu0 0
        %1391 = vmatpush1.bf16.xpose.msra.mxu0 0
        %1392 = vmatprep.subr.bf16.mxu0 0
        %1393 = vmatpush1.bf16.xpose.msra.mxu0 0
        %1394 = vmatprep.subr.bf16.mxu0 0
        %1395 = vmatpush1.bf16.xpose.msra.mxu0 0
        %1396 = vmatprep.subr.bf16.mxu0 0
        %1397 = vmatpush1.bf16.xpose.msra.mxu0 0
        %1398 = vmatprep.subr.bf16.mxu0 0
        %1399 = vmatpush1.bf16.xpose.msra.mxu0 0
        %1400 = vmatprep.subr.bf16.mxu0 0
        %1401 = vmatpush1.bf16.xpose.msra.mxu0 0
        %1402 = vmatprep.subr.bf16.mxu0 0
        %1403 = vmatpush1.bf16.xpose.msra.mxu0 0
        %1404 = vmatprep.mubr.bf16.mxu0 0
        %1405 = vmatmul.mubr.bf16.gmra.mrb[0].mxu0 %v1370
        %v1406 = vpop.f32.mrb[0].mxu0
        %v1407 = vadd.f32 %v1268, %v1406
        %v1408 = vpop.f32.mrb[0].mxu0
        %v1409 = vpop.f32.mrb[0].mxu0
        %v1410 = vpop.f32.mrb[0].mxu0
        %1411 = vdwg.mxu0
        %v1412 = vpack.i.b16 %v1261, %v1261
        %v1413 = vlaneseq
        %v1414 = vshrl.u32 %v1413, 7
        %v1415 = vsub.s32 0, %v1414
        %v1416 = vrot.slane %v1412, %v1415
        %1418 = vmatprep.subr.bf16.mxu0 0
        %1419 = vmatpush1.bf16.xpose.msra.mxu0 %v1107
        %1420 = vmatprep.subr.bf16.mxu0 0
        %1421 = vmatpush1.bf16.xpose.msra.mxu0 0
        %1422 = vmatprep.subr.bf16.mxu0 0
        %1423 = vmatpush1.bf16.xpose.msra.mxu0 0
        %1424 = vmatprep.subr.bf16.mxu0 0
        %1425 = vmatpush1.bf16.xpose.msra.mxu0 0
        %1426 = vmatprep.subr.bf16.mxu0 0
        %1427 = vmatpush1.bf16.xpose.msra.mxu0 0
        %1428 = vmatprep.subr.bf16.mxu0 0
        %1429 = vmatpush1.bf16.xpose.msra.mxu0 0
        %1430 = vmatprep.subr.bf16.mxu0 0
        %1431 = vmatpush1.bf16.xpose.msra.mxu0 0
        %1432 = vmatprep.subr.bf16.mxu0 0
        %1433 = vmatpush1.bf16.xpose.msra.mxu0 0
        %1434 = vmatprep.subr.bf16.mxu0 0
        %1435 = vmatpush1.bf16.xpose.msra.mxu0 0
        %1436 = vmatprep.subr.bf16.mxu0 0
        %1437 = vmatpush1.bf16.xpose.msra.mxu0 0
        %1438 = vmatprep.subr.bf16.mxu0 0
        %1439 = vmatpush1.bf16.xpose.msra.mxu0 0
        %1440 = vmatprep.subr.bf16.mxu0 0
        %1441 = vmatpush1.bf16.xpose.msra.mxu0 0
        %1442 = vmatprep.subr.bf16.mxu0 0
        %1443 = vmatpush1.bf16.xpose.msra.mxu0 0
        %1444 = vmatprep.subr.bf16.mxu0 0
        %1445 = vmatpush1.bf16.xpose.msra.mxu0 0
        %1446 = vmatprep.subr.bf16.mxu0 0
        %1447 = vmatpush1.bf16.xpose.msra.mxu0 0
        %1448 = vmatprep.subr.bf16.mxu0 0
        %1449 = vmatpush1.bf16.xpose.msra.mxu0 0
        %1450 = vmatprep.mubr.bf16.mxu0 0
        %1451 = vmatmul.mubr.bf16.gmra.mrb[0].mxu0 %v1416
        %v1452 = vpop.f32.mrb[0].mxu0
        %v1453 = vadd.f32 %v1269, %v1452
        %v1454 = vpop.f32.mrb[0].mxu0
        %v1455 = vpop.f32.mrb[0].mxu0
        %v1456 = vpop.f32.mrb[0].mxu0
        %1457 = vdwg.mxu0
        %v1458 = vpack.i.b16 %v1262, %v1262
        %v1459 = vlaneseq
        %v1460 = vshrl.u32 %v1459, 7
        %v1461 = vsub.s32 0, %v1460
        %v1462 = vrot.slane %v1458, %v1461
        %1464 = vmatprep.subr.bf16.mxu0 0
        %1465 = vmatpush1.bf16.xpose.msra.mxu0 %v1108
        %1466 = vmatprep.subr.bf16.mxu0 0
        %1467 = vmatpush1.bf16.xpose.msra.mxu0 0
        %1468 = vmatprep.subr.bf16.mxu0 0
        %1469 = vmatpush1.bf16.xpose.msra.mxu0 0
        %1470 = vmatprep.subr.bf16.mxu0 0
        %1471 = vmatpush1.bf16.xpose.msra.mxu0 0
        %1472 = vmatprep.subr.bf16.mxu0 0
        %1473 = vmatpush1.bf16.xpose.msra.mxu0 0
        %1474 = vmatprep.subr.bf16.mxu0 0
        %1475 = vmatpush1.bf16.xpose.msra.mxu0 0
        %1476 = vmatprep.subr.bf16.mxu0 0
        %1477 = vmatpush1.bf16.xpose.msra.mxu0 0
        %1478 = vmatprep.subr.bf16.mxu0 0
        %1479 = vmatpush1.bf16.xpose.msra.mxu0 0
        %1480 = vmatprep.subr.bf16.mxu0 0
        %1481 = vmatpush1.bf16.xpose.msra.mxu0 0
        %1482 = vmatprep.subr.bf16.mxu0 0
        %1483 = vmatpush1.bf16.xpose.msra.mxu0 0
        %1484 = vmatprep.subr.bf16.mxu0 0
        %1485 = vmatpush1.bf16.xpose.msra.mxu0 0
        %1486 = vmatprep.subr.bf16.mxu0 0
        %1487 = vmatpush1.bf16.xpose.msra.mxu0 0
        %1488 = vmatprep.subr.bf16.mxu0 0
        %1489 = vmatpush1.bf16.xpose.msra.mxu0 0
        %1490 = vmatprep.subr.bf16.mxu0 0
        %1491 = vmatpush1.bf16.xpose.msra.mxu0 0
        %1492 = vmatprep.subr.bf16.mxu0 0
        %1493 = vmatpush1.bf16.xpose.msra.mxu0 0
        %1494 = vmatprep.subr.bf16.mxu0 0
        %1495 = vmatpush1.bf16.xpose.msra.mxu0 0
        %1496 = vmatprep.mubr.bf16.mxu0 0
        %1497 = vmatmul.mubr.bf16.gmra.mrb[0].mxu0 %v1462
        %v1498 = vpop.f32.mrb[0].mxu0
        %v1499 = vadd.f32 %v1270, %v1498
        %v1500 = vpop.f32.mrb[0].mxu0
        %v1501 = vpop.f32.mrb[0].mxu0
        %v1502 = vpop.f32.mrb[0].mxu0
        %1503 = vdwg.mxu0
        %v1504 = vpack.i.b16 %v1263, %v1263
        %v1505 = vlaneseq
        %v1506 = vshrl.u32 %v1505, 7
        %v1507 = vsub.s32 0, %v1506
        %v1508 = vrot.slane %v1504, %v1507
        %1510 = vmatprep.subr.bf16.mxu0 0
        %1511 = vmatpush1.bf16.xpose.msra.mxu0 %v1109
        %1512 = vmatprep.subr.bf16.mxu0 0
        %1513 = vmatpush1.bf16.xpose.msra.mxu0 0
        %1514 = vmatprep.subr.bf16.mxu0 0
        %1515 = vmatpush1.bf16.xpose.msra.mxu0 0
        %1516 = vmatprep.subr.bf16.mxu0 0
        %1517 = vmatpush1.bf16.xpose.msra.mxu0 0
        %1518 = vmatprep.subr.bf16.mxu0 0
        %1519 = vmatpush1.bf16.xpose.msra.mxu0 0
        %1520 = vmatprep.subr.bf16.mxu0 0
        %1521 = vmatpush1.bf16.xpose.msra.mxu0 0
        %1522 = vmatprep.subr.bf16.mxu0 0
        %1523 = vmatpush1.bf16.xpose.msra.mxu0 0
        %1524 = vmatprep.subr.bf16.mxu0 0
        %1525 = vmatpush1.bf16.xpose.msra.mxu0 0
        %1526 = vmatprep.subr.bf16.mxu0 0
        %1527 = vmatpush1.bf16.xpose.msra.mxu0 0
        %1528 = vmatprep.subr.bf16.mxu0 0
        %1529 = vmatpush1.bf16.xpose.msra.mxu0 0
        %1530 = vmatprep.subr.bf16.mxu0 0
        %1531 = vmatpush1.bf16.xpose.msra.mxu0 0
        %1532 = vmatprep.subr.bf16.mxu0 0
        %1533 = vmatpush1.bf16.xpose.msra.mxu0 0
        %1534 = vmatprep.subr.bf16.mxu0 0
        %1535 = vmatpush1.bf16.xpose.msra.mxu0 0
        %1536 = vmatprep.subr.bf16.mxu0 0
        %1537 = vmatpush1.bf16.xpose.msra.mxu0 0
        %1538 = vmatprep.subr.bf16.mxu0 0
        %1539 = vmatpush1.bf16.xpose.msra.mxu0 0
        %1540 = vmatprep.subr.bf16.mxu0 0
        %1541 = vmatpush1.bf16.xpose.msra.mxu0 0
        %1542 = vmatprep.mubr.bf16.mxu0 0
        %1543 = vmatmul.mubr.bf16.gmra.mrb[0].mxu0 %v1508
        %v1544 = vpop.f32.mrb[0].mxu0
        %v1545 = vadd.f32 %v1271, %v1544
        %v1546 = vpop.f32.mrb[0].mxu0
        %v1547 = vpop.f32.mrb[0].mxu0
        %v1548 = vpop.f32.mrb[0].mxu0
        %1549 = vdwg.mxu0
        %v1550 = vpack.i.b16 %v1264, %v1264
        %v1551 = vlaneseq
        %v1552 = vshrl.u32 %v1551, 7
        %v1553 = vsub.s32 0, %v1552
        %v1554 = vrot.slane %v1550, %v1553
        %1556 = vmatprep.subr.bf16.mxu0 0
        %1557 = vmatpush1.bf16.xpose.msra.mxu0 %v1110
        %1558 = vmatprep.subr.bf16.mxu0 0
        %1559 = vmatpush1.bf16.xpose.msra.mxu0 0
        %1560 = vmatprep.subr.bf16.mxu0 0
        %1561 = vmatpush1.bf16.xpose.msra.mxu0 0
        %1562 = vmatprep.subr.bf16.mxu0 0
        %1563 = vmatpush1.bf16.xpose.msra.mxu0 0
        %1564 = vmatprep.subr.bf16.mxu0 0
        %1565 = vmatpush1.bf16.xpose.msra.mxu0 0
        %1566 = vmatprep.subr.bf16.mxu0 0
        %1567 = vmatpush1.bf16.xpose.msra.mxu0 0
        %1568 = vmatprep.subr.bf16.mxu0 0
        %1569 = vmatpush1.bf16.xpose.msra.mxu0 0
        %1570 = vmatprep.subr.bf16.mxu0 0
        %1571 = vmatpush1.bf16.xpose.msra.mxu0 0
        %1572 = vmatprep.subr.bf16.mxu0 0
        %1573 = vmatpush1.bf16.xpose.msra.mxu0 0
        %1574 = vmatprep.subr.bf16.mxu0 0
        %1575 = vmatpush1.bf16.xpose.msra.mxu0 0
        %1576 = vmatprep.subr.bf16.mxu0 0
        %1577 = vmatpush1.bf16.xpose.msra.mxu0 0
        %1578 = vmatprep.subr.bf16.mxu0 0
        %1579 = vmatpush1.bf16.xpose.msra.mxu0 0
        %1580 = vmatprep.subr.bf16.mxu0 0
        %1581 = vmatpush1.bf16.xpose.msra.mxu0 0
        %1582 = vmatprep.subr.bf16.mxu0 0
        %1583 = vmatpush1.bf16.xpose.msra.mxu0 0
        %1584 = vmatprep.subr.bf16.mxu0 0
        %1585 = vmatpush1.bf16.xpose.msra.mxu0 0
        %1586 = vmatprep.subr.bf16.mxu0 0
        %1587 = vmatpush1.bf16.xpose.msra.mxu0 0
        %1588 = vmatprep.mubr.bf16.mxu0 0
        %1589 = vmatmul.mubr.bf16.gmra.mrb[0].mxu0 %v1554
        %v1590 = vpop.f32.mrb[0].mxu0
        %v1591 = vadd.f32 %v1272, %v1590
        %v1592 = vpop.f32.mrb[0].mxu0
        %v1593 = vpop.f32.mrb[0].mxu0
        %v1594 = vpop.f32.mrb[0].mxu0
        %1595 = vdwg.mxu0
        %v1596 = vpack.i.b16 %v1265, %v1265
        %v1597 = vlaneseq
        %v1598 = vshrl.u32 %v1597, 7
        %v1599 = vsub.s32 0, %v1598
        %v1600 = vrot.slane %v1596, %v1599
        %1602 = vmatprep.subr.bf16.mxu0 0
        %1603 = vmatpush1.bf16.xpose.msra.mxu0 %v1111
        %1604 = vmatprep.subr.bf16.mxu0 0
        %1605 = vmatpush1.bf16.xpose.msra.mxu0 0
        %1606 = vmatprep.subr.bf16.mxu0 0
        %1607 = vmatpush1.bf16.xpose.msra.mxu0 0
        %1608 = vmatprep.subr.bf16.mxu0 0
        %1609 = vmatpush1.bf16.xpose.msra.mxu0 0
        %1610 = vmatprep.subr.bf16.mxu0 0
        %1611 = vmatpush1.bf16.xpose.msra.mxu0 0
        %1612 = vmatprep.subr.bf16.mxu0 0
        %1613 = vmatpush1.bf16.xpose.msra.mxu0 0
        %1614 = vmatprep.subr.bf16.mxu0 0
        %1615 = vmatpush1.bf16.xpose.msra.mxu0 0
        %1616 = vmatprep.subr.bf16.mxu0 0
        %1617 = vmatpush1.bf16.xpose.msra.mxu0 0
        %1618 = vmatprep.subr.bf16.mxu0 0
        %1619 = vmatpush1.bf16.xpose.msra.mxu0 0
        %1620 = vmatprep.subr.bf16.mxu0 0
        %1621 = vmatpush1.bf16.xpose.msra.mxu0 0
        %1622 = vmatprep.subr.bf16.mxu0 0
        %1623 = vmatpush1.bf16.xpose.msra.mxu0 0
        %1624 = vmatprep.subr.bf16.mxu0 0
        %1625 = vmatpush1.bf16.xpose.msra.mxu0 0
        %1626 = vmatprep.subr.bf16.mxu0 0
        %1627 = vmatpush1.bf16.xpose.msra.mxu0 0
        %1628 = vmatprep.subr.bf16.mxu0 0
        %1629 = vmatpush1.bf16.xpose.msra.mxu0 0
        %1630 = vmatprep.subr.bf16.mxu0 0
        %1631 = vmatpush1.bf16.xpose.msra.mxu0 0
        %1632 = vmatprep.subr.bf16.mxu0 0
        %1633 = vmatpush1.bf16.xpose.msra.mxu0 0
        %1634 = vmatprep.mubr.bf16.mxu0 0
        %1635 = vmatmul.mubr.bf16.gmra.mrb[0].mxu0 %v1600
        %v1636 = vpop.f32.mrb[0].mxu0
        %v1637 = vadd.f32 %v1273, %v1636
        %v1638 = vpop.f32.mrb[0].mxu0
        %v1639 = vpop.f32.mrb[0].mxu0
        %v1640 = vpop.f32.mrb[0].mxu0
        %1641 = vdwg.mxu0
        %vm1642 = vcmask 57344
        %v1643 = vsel %vm1642, %v1315, -inf
        %1644 = vmax.xlane.f32.xlu0 %v1643
        %v1645 = vpop.xlane.xlu0 %1644
        %v1646 = vsel %vm1642, %v1361, -inf
        %1647 = vmax.xlane.f32.xlu0 %v1646
        %v1648 = vpop.xlane.xlu0 %1647
        %v1649 = vsel %vm1642, %v1407, -inf
        %1650 = vmax.xlane.f32.xlu0 %v1649
        %v1651 = vpop.xlane.xlu0 %1650
        %v1652 = vsel %vm1642, %v1453, -inf
        %1653 = vmax.xlane.f32.xlu0 %v1652
        %v1654 = vpop.xlane.xlu0 %1653
        %v1655 = vsel %vm1642, %v1499, -inf
        %1656 = vmax.xlane.f32.xlu0 %v1655
        %v1657 = vpop.xlane.xlu0 %1656
        %v1658 = vsel %vm1642, %v1545, -inf
        %1659 = vmax.xlane.f32.xlu0 %v1658
        %v1660 = vpop.xlane.xlu0 %1659
        %v1661 = vsel %vm1642, %v1591, -inf
        %1662 = vmax.xlane.f32.xlu0 %v1661
        %v1663 = vpop.xlane.xlu0 %1662
        %v1664 = vsel %vm1642, %v1637, -inf
        %1665 = vmax.xlane.f32.xlu0 %v1664
        %v1666 = vpop.xlane.xlu0 %1665
        %v1667 = vsub.f32 %v1315, %v1645
        %v1668 = vsub.f32 %v1361, %v1648
        %v1669 = vsub.f32 %v1407, %v1651
        %v1670 = vsub.f32 %v1453, %v1654
        %v1671 = vsub.f32 %v1499, %v1657
        %v1672 = vsub.f32 %v1545, %v1660
        %v1673 = vsub.f32 %v1591, %v1663
        %v1674 = vsub.f32 %v1637, %v1666
        %v1675 = vmul.f32 %v1667, 1.442695
        %v1676 = vpow.pop %v1675
        %v1677 = vmul.f32 %v1668, 1.442695
        %v1678 = vpow.pop %v1677
        %v1679 = vmul.f32 %v1669, 1.442695
        %v1680 = vpow.pop %v1679
        %v1681 = vmul.f32 %v1670, 1.442695
        %v1682 = vpow.pop %v1681
        %v1683 = vmul.f32 %v1671, 1.442695
        %v1684 = vpow.pop %v1683
        %v1685 = vmul.f32 %v1672, 1.442695
        %v1686 = vpow.pop %v1685
        %v1687 = vmul.f32 %v1673, 1.442695
        %v1688 = vpow.pop %v1687
        %v1689 = vmul.f32 %v1674, 1.442695
        %v1690 = vpow.pop %v1689
        %v1691 = vsel %vm1642, %v1676, 0.0
        %1692 = vadd.xlane.f32.xlu0 %v1691
        %v1693 = vpop.xlane.xlu0 %1692
        %v1694 = vsel %vm1642, %v1678, 0.0
        %1695 = vadd.xlane.f32.xlu0 %v1694
        %v1696 = vpop.xlane.xlu0 %1695
        %v1697 = vsel %vm1642, %v1680, 0.0
        %1698 = vadd.xlane.f32.xlu0 %v1697
        %v1699 = vpop.xlane.xlu0 %1698
        %v1700 = vsel %vm1642, %v1682, 0.0
        %1701 = vadd.xlane.f32.xlu0 %v1700
        %v1702 = vpop.xlane.xlu0 %1701
        %v1703 = vsel %vm1642, %v1684, 0.0
        %1704 = vadd.xlane.f32.xlu0 %v1703
        %v1705 = vpop.xlane.xlu0 %1704
        %v1706 = vsel %vm1642, %v1686, 0.0
        %1707 = vadd.xlane.f32.xlu0 %v1706
        %v1708 = vpop.xlane.xlu0 %1707
        %v1709 = vsel %vm1642, %v1688, 0.0
        %1710 = vadd.xlane.f32.xlu0 %v1709
        %v1711 = vpop.xlane.xlu0 %1710
        %v1712 = vsel %vm1642, %v1690, 0.0
        %1713 = vadd.xlane.f32.xlu0 %v1712
        %v1714 = vpop.xlane.xlu0 %1713
        %v1715 = vrcp.pop %v1693
        %v1716 = vrcp.pop %v1696
        %v1717 = vrcp.pop %v1699
        %v1718 = vrcp.pop %v1702
        %v1719 = vrcp.pop %v1705
        %v1720 = vrcp.pop %v1708
        %v1721 = vrcp.pop %v1711
        %v1722 = vrcp.pop %v1714
        %v1723 = vmul.f32 %v1676, %v1715
        %v1724 = vmul.f32 %v1678, %v1716
        %v1725 = vmul.f32 %v1680, %v1717
        %v1726 = vmul.f32 %v1682, %v1718
        %v1727 = vmul.f32 %v1684, %v1719
        %v1728 = vmul.f32 %v1686, %v1720
        %v1729 = vmul.f32 %v1688, %v1721
        %v1730 = vmul.f32 %v1690, %v1722
        %v1731 = vpack.c.bf16 %v1723, %v1723
        %v1732 = vpack.c.bf16 %v1724, %v1724
        %v1733 = vpack.c.bf16 %v1725, %v1725
        %v1734 = vpack.c.bf16 %v1726, %v1726
        %v1735 = vpack.c.bf16 %v1727, %v1727
        %v1736 = vpack.c.bf16 %v1728, %v1728
        %v1737 = vpack.c.bf16 %v1729, %v1729
        %v1738 = vpack.c.bf16 %v1730, %v1730
        %vm1739 = vcmask 64512
        %v1741 = vsel %vm1739, %v1731, 0
        %vm1743 = vcmask 1043456
        %v1745 = vsel %vm1743, %v1112, 0
        %1747 = vmatprep.subr.bf16.mxu0 0
        %1748 = vmatpush1.bf16.msra.mxu0 %v1745
        %1749 = vmatprep.subr.bf16.mxu0 0
        %1750 = vmatpush1.bf16.msra.mxu0 0
        %1751 = vmatprep.subr.bf16.mxu0 0
        %1752 = vmatpush1.bf16.msra.mxu0 0
        %1753 = vmatprep.subr.bf16.mxu0 0
        %1754 = vmatpush1.bf16.msra.mxu0 0
        %1755 = vmatprep.subr.bf16.mxu0 0
        %1756 = vmatpush1.bf16.msra.mxu0 0
        %1757 = vmatprep.subr.bf16.mxu0 0
        %1758 = vmatpush1.bf16.msra.mxu0 0
        %1759 = vmatprep.subr.bf16.mxu0 0
        %1760 = vmatpush1.bf16.msra.mxu0 0
        %1761 = vmatprep.subr.bf16.mxu0 0
        %1762 = vmatpush1.bf16.msra.mxu0 0
        %1763 = vmatprep.subr.bf16.mxu0 0
        %1764 = vmatpush1.bf16.msra.mxu0 0
        %1765 = vmatprep.subr.bf16.mxu0 0
        %1766 = vmatpush1.bf16.msra.mxu0 0
        %1767 = vmatprep.subr.bf16.mxu0 0
        %1768 = vmatpush1.bf16.msra.mxu0 0
        %1769 = vmatprep.subr.bf16.mxu0 0
        %1770 = vmatpush1.bf16.msra.mxu0 0
        %1771 = vmatprep.subr.bf16.mxu0 0
        %1772 = vmatpush1.bf16.msra.mxu0 0
        %1773 = vmatprep.subr.bf16.mxu0 0
        %1774 = vmatpush1.bf16.msra.mxu0 0
        %1775 = vmatprep.subr.bf16.mxu0 0
        %1776 = vmatpush1.bf16.msra.mxu0 0
        %1777 = vmatprep.subr.bf16.mxu0 0
        %1778 = vmatpush1.bf16.msra.mxu0 0
        %1779 = vmatprep.mubr.bf16.mxu0 0
        %1780 = vmatmul.mubr.bf16.gmra.mrb[0].mxu0 %v1741
        %v1781 = vpop.f32.mrb[0].mxu0
        %v1782 = vadd.f32 0.0, %v1781
        %v1783 = vpop.f32.mrb[0].mxu0
        %v1784 = vpop.f32.mrb[0].mxu0
        %v1785 = vpop.f32.mrb[0].mxu0
        %1786 = vdwg.mxu0
        %v1788 = vsel %vm1739, %v1732, 0
        %v1791 = vsel %vm1743, %v1113, 0
        %1793 = vmatprep.subr.bf16.mxu0 0
        %1794 = vmatpush1.bf16.msra.mxu0 %v1791
        %1795 = vmatprep.subr.bf16.mxu0 0
        %1796 = vmatpush1.bf16.msra.mxu0 0
        %1797 = vmatprep.subr.bf16.mxu0 0
        %1798 = vmatpush1.bf16.msra.mxu0 0
        %1799 = vmatprep.subr.bf16.mxu0 0
        %1800 = vmatpush1.bf16.msra.mxu0 0
        %1801 = vmatprep.subr.bf16.mxu0 0
        %1802 = vmatpush1.bf16.msra.mxu0 0
        %1803 = vmatprep.subr.bf16.mxu0 0
        %1804 = vmatpush1.bf16.msra.mxu0 0
        %1805 = vmatprep.subr.bf16.mxu0 0
        %1806 = vmatpush1.bf16.msra.mxu0 0
        %1807 = vmatprep.subr.bf16.mxu0 0
        %1808 = vmatpush1.bf16.msra.mxu0 0
        %1809 = vmatprep.subr.bf16.mxu0 0
        %1810 = vmatpush1.bf16.msra.mxu0 0
        %1811 = vmatprep.subr.bf16.mxu0 0
        %1812 = vmatpush1.bf16.msra.mxu0 0
        %1813 = vmatprep.subr.bf16.mxu0 0
        %1814 = vmatpush1.bf16.msra.mxu0 0
        %1815 = vmatprep.subr.bf16.mxu0 0
        %1816 = vmatpush1.bf16.msra.mxu0 0
        %1817 = vmatprep.subr.bf16.mxu0 0
        %1818 = vmatpush1.bf16.msra.mxu0 0
        %1819 = vmatprep.subr.bf16.mxu0 0
        %1820 = vmatpush1.bf16.msra.mxu0 0
        %1821 = vmatprep.subr.bf16.mxu0 0
        %1822 = vmatpush1.bf16.msra.mxu0 0
        %1823 = vmatprep.subr.bf16.mxu0 0
        %1824 = vmatpush1.bf16.msra.mxu0 0
        %1825 = vmatprep.mubr.bf16.mxu0 0
        %1826 = vmatmul.mubr.bf16.gmra.mrb[0].mxu0 %v1788
        %v1827 = vpop.f32.mrb[0].mxu0
        %v1828 = vadd.f32 0.0, %v1827
        %v1829 = vpop.f32.mrb[0].mxu0
        %v1830 = vpop.f32.mrb[0].mxu0
        %v1831 = vpop.f32.mrb[0].mxu0
        %1832 = vdwg.mxu0
        %v1834 = vsel %vm1739, %v1733, 0
        %v1837 = vsel %vm1743, %v1114, 0
        %1839 = vmatprep.subr.bf16.mxu0 0
        %1840 = vmatpush1.bf16.msra.mxu0 %v1837
        %1841 = vmatprep.subr.bf16.mxu0 0
        %1842 = vmatpush1.bf16.msra.mxu0 0
        %1843 = vmatprep.subr.bf16.mxu0 0
        %1844 = vmatpush1.bf16.msra.mxu0 0
        %1845 = vmatprep.subr.bf16.mxu0 0
        %1846 = vmatpush1.bf16.msra.mxu0 0
        %1847 = vmatprep.subr.bf16.mxu0 0
        %1848 = vmatpush1.bf16.msra.mxu0 0
        %1849 = vmatprep.subr.bf16.mxu0 0
        %1850 = vmatpush1.bf16.msra.mxu0 0
        %1851 = vmatprep.subr.bf16.mxu0 0
        %1852 = vmatpush1.bf16.msra.mxu0 0
        %1853 = vmatprep.subr.bf16.mxu0 0
        %1854 = vmatpush1.bf16.msra.mxu0 0
        %1855 = vmatprep.subr.bf16.mxu0 0
        %1856 = vmatpush1.bf16.msra.mxu0 0
        %1857 = vmatprep.subr.bf16.mxu0 0
        %1858 = vmatpush1.bf16.msra.mxu0 0
        %1859 = vmatprep.subr.bf16.mxu0 0
        %1860 = vmatpush1.bf16.msra.mxu0 0
        %1861 = vmatprep.subr.bf16.mxu0 0
        %1862 = vmatpush1.bf16.msra.mxu0 0
        %1863 = vmatprep.subr.bf16.mxu0 0
        %1864 = vmatpush1.bf16.msra.mxu0 0
        %1865 = vmatprep.subr.bf16.mxu0 0
        %1866 = vmatpush1.bf16.msra.mxu0 0
        %1867 = vmatprep.subr.bf16.mxu0 0
        %1868 = vmatpush1.bf16.msra.mxu0 0
        %1869 = vmatprep.subr.bf16.mxu0 0
        %1870 = vmatpush1.bf16.msra.mxu0 0
        %1871 = vmatprep.mubr.bf16.mxu0 0
        %1872 = vmatmul.mubr.bf16.gmra.mrb[0].mxu0 %v1834
        %v1873 = vpop.f32.mrb[0].mxu0
        %v1874 = vadd.f32 0.0, %v1873
        %v1875 = vpop.f32.mrb[0].mxu0
        %v1876 = vpop.f32.mrb[0].mxu0
        %v1877 = vpop.f32.mrb[0].mxu0
        %1878 = vdwg.mxu0
        %v1880 = vsel %vm1739, %v1734, 0
        %v1883 = vsel %vm1743, %v1115, 0
        %1885 = vmatprep.subr.bf16.mxu0 0
        %1886 = vmatpush1.bf16.msra.mxu0 %v1883
        %1887 = vmatprep.subr.bf16.mxu0 0
        %1888 = vmatpush1.bf16.msra.mxu0 0
        %1889 = vmatprep.subr.bf16.mxu0 0
        %1890 = vmatpush1.bf16.msra.mxu0 0
        %1891 = vmatprep.subr.bf16.mxu0 0
        %1892 = vmatpush1.bf16.msra.mxu0 0
        %1893 = vmatprep.subr.bf16.mxu0 0
        %1894 = vmatpush1.bf16.msra.mxu0 0
        %1895 = vmatprep.subr.bf16.mxu0 0
        %1896 = vmatpush1.bf16.msra.mxu0 0
        %1897 = vmatprep.subr.bf16.mxu0 0
        %1898 = vmatpush1.bf16.msra.mxu0 0
        %1899 = vmatprep.subr.bf16.mxu0 0
        %1900 = vmatpush1.bf16.msra.mxu0 0
        %1901 = vmatprep.subr.bf16.mxu0 0
        %1902 = vmatpush1.bf16.msra.mxu0 0
        %1903 = vmatprep.subr.bf16.mxu0 0
        %1904 = vmatpush1.bf16.msra.mxu0 0
        %1905 = vmatprep.subr.bf16.mxu0 0
        %1906 = vmatpush1.bf16.msra.mxu0 0
        %1907 = vmatprep.subr.bf16.mxu0 0
        %1908 = vmatpush1.bf16.msra.mxu0 0
        %1909 = vmatprep.subr.bf16.mxu0 0
        %1910 = vmatpush1.bf16.msra.mxu0 0
        %1911 = vmatprep.subr.bf16.mxu0 0
        %1912 = vmatpush1.bf16.msra.mxu0 0
        %1913 = vmatprep.subr.bf16.mxu0 0
        %1914 = vmatpush1.bf16.msra.mxu0 0
        %1915 = vmatprep.subr.bf16.mxu0 0
        %1916 = vmatpush1.bf16.msra.mxu0 0
        %1917 = vmatprep.mubr.bf16.mxu0 0
        %1918 = vmatmul.mubr.bf16.gmra.mrb[0].mxu0 %v1880
        %v1919 = vpop.f32.mrb[0].mxu0
        %v1920 = vadd.f32 0.0, %v1919
        %v1921 = vpop.f32.mrb[0].mxu0
        %v1922 = vpop.f32.mrb[0].mxu0
        %v1923 = vpop.f32.mrb[0].mxu0
        %1924 = vdwg.mxu0
        %v1926 = vsel %vm1739, %v1735, 0
        %v1929 = vsel %vm1743, %v1116, 0
        %1931 = vmatprep.subr.bf16.mxu0 0
        %1932 = vmatpush1.bf16.msra.mxu0 %v1929
        %1933 = vmatprep.subr.bf16.mxu0 0
        %1934 = vmatpush1.bf16.msra.mxu0 0
        %1935 = vmatprep.subr.bf16.mxu0 0
        %1936 = vmatpush1.bf16.msra.mxu0 0
        %1937 = vmatprep.subr.bf16.mxu0 0
        %1938 = vmatpush1.bf16.msra.mxu0 0
        %1939 = vmatprep.subr.bf16.mxu0 0
        %1940 = vmatpush1.bf16.msra.mxu0 0
        %1941 = vmatprep.subr.bf16.mxu0 0
        %1942 = vmatpush1.bf16.msra.mxu0 0
        %1943 = vmatprep.subr.bf16.mxu0 0
        %1944 = vmatpush1.bf16.msra.mxu0 0
        %1945 = vmatprep.subr.bf16.mxu0 0
        %1946 = vmatpush1.bf16.msra.mxu0 0
        %1947 = vmatprep.subr.bf16.mxu0 0
        %1948 = vmatpush1.bf16.msra.mxu0 0
        %1949 = vmatprep.subr.bf16.mxu0 0
        %1950 = vmatpush1.bf16.msra.mxu0 0
        %1951 = vmatprep.subr.bf16.mxu0 0
        %1952 = vmatpush1.bf16.msra.mxu0 0
        %1953 = vmatprep.subr.bf16.mxu0 0
        %1954 = vmatpush1.bf16.msra.mxu0 0
        %1955 = vmatprep.subr.bf16.mxu0 0
        %1956 = vmatpush1.bf16.msra.mxu0 0
        %1957 = vmatprep.subr.bf16.mxu0 0
        %1958 = vmatpush1.bf16.msra.mxu0 0
        %1959 = vmatprep.subr.bf16.mxu0 0
        %1960 = vmatpush1.bf16.msra.mxu0 0
        %1961 = vmatprep.subr.bf16.mxu0 0
        %1962 = vmatpush1.bf16.msra.mxu0 0
        %1963 = vmatprep.mubr.bf16.mxu0 0
        %1964 = vmatmul.mubr.bf16.gmra.mrb[0].mxu0 %v1926
        %v1965 = vpop.f32.mrb[0].mxu0
        %v1966 = vadd.f32 0.0, %v1965
        %v1967 = vpop.f32.mrb[0].mxu0
        %v1968 = vpop.f32.mrb[0].mxu0
        %v1969 = vpop.f32.mrb[0].mxu0
        %1970 = vdwg.mxu0
        %v1972 = vsel %vm1739, %v1736, 0
        %v1975 = vsel %vm1743, %v1117, 0
        %1977 = vmatprep.subr.bf16.mxu0 0
        %1978 = vmatpush1.bf16.msra.mxu0 %v1975
        %1979 = vmatprep.subr.bf16.mxu0 0
        %1980 = vmatpush1.bf16.msra.mxu0 0
        %1981 = vmatprep.subr.bf16.mxu0 0
        %1982 = vmatpush1.bf16.msra.mxu0 0
        %1983 = vmatprep.subr.bf16.mxu0 0
        %1984 = vmatpush1.bf16.msra.mxu0 0
        %1985 = vmatprep.subr.bf16.mxu0 0
        %1986 = vmatpush1.bf16.msra.mxu0 0
        %1987 = vmatprep.subr.bf16.mxu0 0
        %1988 = vmatpush1.bf16.msra.mxu0 0
        %1989 = vmatprep.subr.bf16.mxu0 0
        %1990 = vmatpush1.bf16.msra.mxu0 0
        %1991 = vmatprep.subr.bf16.mxu0 0
        %1992 = vmatpush1.bf16.msra.mxu0 0
        %1993 = vmatprep.subr.bf16.mxu0 0
        %1994 = vmatpush1.bf16.msra.mxu0 0
        %1995 = vmatprep.subr.bf16.mxu0 0
        %1996 = vmatpush1.bf16.msra.mxu0 0
        %1997 = vmatprep.subr.bf16.mxu0 0
        %1998 = vmatpush1.bf16.msra.mxu0 0
        %1999 = vmatprep.subr.bf16.mxu0 0
        %2000 = vmatpush1.bf16.msra.mxu0 0
        %2001 = vmatprep.subr.bf16.mxu0 0
        %2002 = vmatpush1.bf16.msra.mxu0 0
        %2003 = vmatprep.subr.bf16.mxu0 0
        %2004 = vmatpush1.bf16.msra.mxu0 0
        %2005 = vmatprep.subr.bf16.mxu0 0
        %2006 = vmatpush1.bf16.msra.mxu0 0
        %2007 = vmatprep.subr.bf16.mxu0 0
        %2008 = vmatpush1.bf16.msra.mxu0 0
        %2009 = vmatprep.mubr.bf16.mxu0 0
        %2010 = vmatmul.mubr.bf16.gmra.mrb[0].mxu0 %v1972
        %v2011 = vpop.f32.mrb[0].mxu0
        %v2012 = vadd.f32 0.0, %v2011
        %v2013 = vpop.f32.mrb[0].mxu0
        %v2014 = vpop.f32.mrb[0].mxu0
        %v2015 = vpop.f32.mrb[0].mxu0
        %2016 = vdwg.mxu0
        %v2018 = vsel %vm1739, %v1737, 0
        %v2021 = vsel %vm1743, %v1118, 0
        %2023 = vmatprep.subr.bf16.mxu0 0
        %2024 = vmatpush1.bf16.msra.mxu0 %v2021
        %2025 = vmatprep.subr.bf16.mxu0 0
        %2026 = vmatpush1.bf16.msra.mxu0 0
        %2027 = vmatprep.subr.bf16.mxu0 0
        %2028 = vmatpush1.bf16.msra.mxu0 0
        %2029 = vmatprep.subr.bf16.mxu0 0
        %2030 = vmatpush1.bf16.msra.mxu0 0
        %2031 = vmatprep.subr.bf16.mxu0 0
        %2032 = vmatpush1.bf16.msra.mxu0 0
        %2033 = vmatprep.subr.bf16.mxu0 0
        %2034 = vmatpush1.bf16.msra.mxu0 0
        %2035 = vmatprep.subr.bf16.mxu0 0
        %2036 = vmatpush1.bf16.msra.mxu0 0
        %2037 = vmatprep.subr.bf16.mxu0 0
        %2038 = vmatpush1.bf16.msra.mxu0 0
        %2039 = vmatprep.subr.bf16.mxu0 0
        %2040 = vmatpush1.bf16.msra.mxu0 0
        %2041 = vmatprep.subr.bf16.mxu0 0
        %2042 = vmatpush1.bf16.msra.mxu0 0
        %2043 = vmatprep.subr.bf16.mxu0 0
        %2044 = vmatpush1.bf16.msra.mxu0 0
        %2045 = vmatprep.subr.bf16.mxu0 0
        %2046 = vmatpush1.bf16.msra.mxu0 0
        %2047 = vmatprep.subr.bf16.mxu0 0
        %2048 = vmatpush1.bf16.msra.mxu0 0
        %2049 = vmatprep.subr.bf16.mxu0 0
        %2050 = vmatpush1.bf16.msra.mxu0 0
        %2051 = vmatprep.subr.bf16.mxu0 0
        %2052 = vmatpush1.bf16.msra.mxu0 0
        %2053 = vmatprep.subr.bf16.mxu0 0
        %2054 = vmatpush1.bf16.msra.mxu0 0
        %2055 = vmatprep.mubr.bf16.mxu0 0
        %2056 = vmatmul.mubr.bf16.gmra.mrb[0].mxu0 %v2018
        %v2057 = vpop.f32.mrb[0].mxu0
        %v2058 = vadd.f32 0.0, %v2057
        %v2059 = vpop.f32.mrb[0].mxu0
        %v2060 = vpop.f32.mrb[0].mxu0
        %v2061 = vpop.f32.mrb[0].mxu0
        %2062 = vdwg.mxu0
        %v2064 = vsel %vm1739, %v1738, 0
        %v2067 = vsel %vm1743, %v1119, 0
        %2069 = vmatprep.subr.bf16.mxu0 0
        %2070 = vmatpush1.bf16.msra.mxu0 %v2067
        %2071 = vmatprep.subr.bf16.mxu0 0
        %2072 = vmatpush1.bf16.msra.mxu0 0
        %2073 = vmatprep.subr.bf16.mxu0 0
        %2074 = vmatpush1.bf16.msra.mxu0 0
        %2075 = vmatprep.subr.bf16.mxu0 0
        %2076 = vmatpush1.bf16.msra.mxu0 0
        %2077 = vmatprep.subr.bf16.mxu0 0
        %2078 = vmatpush1.bf16.msra.mxu0 0
        %2079 = vmatprep.subr.bf16.mxu0 0
        %2080 = vmatpush1.bf16.msra.mxu0 0
        %2081 = vmatprep.subr.bf16.mxu0 0
        %2082 = vmatpush1.bf16.msra.mxu0 0
        %2083 = vmatprep.subr.bf16.mxu0 0
        %2084 = vmatpush1.bf16.msra.mxu0 0
        %2085 = vmatprep.subr.bf16.mxu0 0
        %2086 = vmatpush1.bf16.msra.mxu0 0
        %2087 = vmatprep.subr.bf16.mxu0 0
        %2088 = vmatpush1.bf16.msra.mxu0 0
        %2089 = vmatprep.subr.bf16.mxu0 0
        %2090 = vmatpush1.bf16.msra.mxu0 0
        %2091 = vmatprep.subr.bf16.mxu0 0
        %2092 = vmatpush1.bf16.msra.mxu0 0
        %2093 = vmatprep.subr.bf16.mxu0 0
        %2094 = vmatpush1.bf16.msra.mxu0 0
        %2095 = vmatprep.subr.bf16.mxu0 0
        %2096 = vmatpush1.bf16.msra.mxu0 0
        %2097 = vmatprep.subr.bf16.mxu0 0
        %2098 = vmatpush1.bf16.msra.mxu0 0
        %2099 = vmatprep.subr.bf16.mxu0 0
        %2100 = vmatpush1.bf16.msra.mxu0 0
        %2101 = vmatprep.mubr.bf16.mxu0 0
        %2102 = vmatmul.mubr.bf16.gmra.mrb[0].mxu0 %v2064
        %v2103 = vpop.f32.mrb[0].mxu0
        %v2104 = vadd.f32 0.0, %v2103
        %v2105 = vpop.f32.mrb[0].mxu0
        %v2106 = vpop.f32.mrb[0].mxu0
        %v2107 = vpop.f32.mrb[0].mxu0
        %2108 = vdwg.mxu0
        %v2109 = vpack.c.bf16 %v1782, %v1782
        %v2110 = vpack.c.bf16 %v1828, %v1828
        %v2111 = vpack.c.bf16 %v1874, %v1874
        %v2112 = vpack.c.bf16 %v1920, %v1920
        %v2113 = vpack.c.bf16 %v1966, %v1966
        %v2114 = vpack.c.bf16 %v2012, %v2012
        %v2115 = vpack.c.bf16 %v2058, %v2058
        %v2116 = vpack.c.bf16 %v2104, %v2104
        %v2117 = vld [vmem:[#allocation10] sm:$0xf]
        %v2118 = vld [vmem:[#allocation10 + $0x4] sm:$0xf]
        %v2119 = vld [vmem:[#allocation10 + $0x8] sm:$0xf]
        %v2120 = vld [vmem:[#allocation10 + $0xc] sm:$0xf]
        %v2121 = vld [vmem:[#allocation10 + $0x10] sm:$0xf]
        %v2122 = vld [vmem:[#allocation10 + $0x14] sm:$0xf]
        %v2123 = vld [vmem:[#allocation10 + $0x18] sm:$0xf]
        %v2124 = vld [vmem:[#allocation10 + $0x1c] sm:$0xf]
        %v2125 = vld [vmem:[#allocation10 + $0x20] sm:$0xf]
        %v2126 = vld [vmem:[#allocation10 + $0x24] sm:$0xf]
        %v2127 = vld [vmem:[#allocation10 + $0x28] sm:$0xf]
        %v2128 = vld [vmem:[#allocation10 + $0x2c] sm:$0xf]
        %v2129 = vld [vmem:[#allocation10 + $0x30] sm:$0xf]
        %v2130 = vld [vmem:[#allocation10 + $0x34] sm:$0xf]
        %v2131 = vld [vmem:[#allocation10 + $0x38] sm:$0xf]
        %v2132 = vld [vmem:[#allocation10 + $0x3c] sm:$0xf]
        %v2133 = vld [vmem:[%s10] sm:$0x1]
        %v2135 = vlaneseq
        %v2136 = vshrl.u32 %v2135, 7
        %v2137 = vsub.s32 0, %v2136
        %v2138 = vrot.slane %v2133, %v2137
        %v2148 = vunpack.c.l.b16 %v2109
        %v2149 = vunpack.c.l.b16 %v2110
        %v2150 = vunpack.c.l.b16 %v2111
        %v2151 = vunpack.c.l.b16 %v2112
        %v2152 = vunpack.c.l.b16 %v2113
        %v2153 = vunpack.c.l.b16 %v2114
        %v2154 = vunpack.c.l.b16 %v2115
        %v2155 = vunpack.c.l.b16 %v2116
        %v2156 = vrot.slane %v2149, 7
        %vm2157 = vcmask 1041409
        %v2158 = vsel %vm2157, %v2156, %v2148
        %v2159 = vrot.slane %v2150, 6
        %vm2160 = vcmask 1042434
        %v2161 = vsel %vm2160, %v2159, %v2158
        %v2162 = vrot.slane %v2151, 5
        %vm2163 = vcmask 1043459
        %v2164 = vsel %vm2163, %v2162, %v2161
        %v2165 = vrot.slane %v2152, 4
        %vm2166 = vcmask 1044484
        %v2167 = vsel %vm2166, %v2165, %v2164
        %v2168 = vrot.slane %v2153, 3
        %vm2169 = vcmask 1045509
        %v2170 = vsel %vm2169, %v2168, %v2167
        %v2171 = vrot.slane %v2154, 2
        %vm2172 = vcmask 1046534
        %v2173 = vsel %vm2172, %v2171, %v2170
        %v2174 = vrot.slane %v2155, 1
        %vm2175 = vcmask 1047559
        %v2176 = vsel %vm2175, %v2174, %v2173
        %v2177 = vpack.c.b16 %v2176, %v2176
        %v2195 = vunpack.c.l.b16 %v2117
        %v2196 = vunpack.c.l.b16 %v2118
        %v2197 = vunpack.c.l.b16 %v2119
        %v2198 = vunpack.c.l.b16 %v2120
        %v2199 = vunpack.c.l.b16 %v2121
        %v2200 = vunpack.c.l.b16 %v2122
        %v2201 = vunpack.c.l.b16 %v2123
        %v2202 = vunpack.c.l.b16 %v2124
        %v2203 = vunpack.c.l.b16 %v2125
        %v2204 = vunpack.c.l.b16 %v2126
        %v2205 = vunpack.c.l.b16 %v2127
        %v2206 = vunpack.c.l.b16 %v2128
        %v2207 = vunpack.c.l.b16 %v2129
        %v2208 = vunpack.c.l.b16 %v2130
        %v2209 = vunpack.c.l.b16 %v2131
        %v2210 = vunpack.c.l.b16 %v2132
        %v2211 = vpack.c.b16 %v2196, %v2195
        %v2212 = vpack.c.b16 %v2198, %v2197
        %v2213 = vpack.c.b16 %v2200, %v2199
        %v2214 = vpack.c.b16 %v2202, %v2201
        %v2215 = vpack.c.b16 %v2204, %v2203
        %v2216 = vpack.c.b16 %v2206, %v2205
        %v2217 = vpack.c.b16 %v2208, %v2207
        %v2218 = vpack.c.b16 %v2210, %v2209
        %2227 = vmatprep.subr.bf16.mxu0 0
        %2228 = vmatpush1.bf16.msra.mxu0 %v2211
        %2229 = vmatprep.subr.bf16.mxu0 0
        %2230 = vmatpush1.bf16.msra.mxu0 %v2212
        %2231 = vmatprep.subr.bf16.mxu0 0
        %2232 = vmatpush1.bf16.msra.mxu0 %v2213
        %2233 = vmatprep.subr.bf16.mxu0 0
        %2234 = vmatpush1.bf16.msra.mxu0 %v2214
        %2235 = vmatprep.subr.bf16.mxu0 0
        %2236 = vmatpush1.bf16.msra.mxu0 %v2215
        %2237 = vmatprep.subr.bf16.mxu0 0
        %2238 = vmatpush1.bf16.msra.mxu0 %v2216
        %2239 = vmatprep.subr.bf16.mxu0 0
        %2240 = vmatpush1.bf16.msra.mxu0 %v2217
        %2241 = vmatprep.subr.bf16.mxu0 0
        %2242 = vmatpush1.bf16.msra.mxu0 %v2218
        %2243 = vmatprep.subr.bf16.mxu0 0
        %2244 = vmatpush1.bf16.msra.mxu0 0
        %2245 = vmatprep.subr.bf16.mxu0 0
        %2246 = vmatpush1.bf16.msra.mxu0 0
        %2247 = vmatprep.subr.bf16.mxu0 0
        %2248 = vmatpush1.bf16.msra.mxu0 0
        %2249 = vmatprep.subr.bf16.mxu0 0
        %2250 = vmatpush1.bf16.msra.mxu0 0
        %2251 = vmatprep.subr.bf16.mxu0 0
        %2252 = vmatpush1.bf16.msra.mxu0 0
        %2253 = vmatprep.subr.bf16.mxu0 0
        %2254 = vmatpush1.bf16.msra.mxu0 0
        %2255 = vmatprep.subr.bf16.mxu0 0
        %2256 = vmatpush1.bf16.msra.mxu0 0
        %2257 = vmatprep.subr.bf16.mxu0 0
        %2258 = vmatpush1.bf16.msra.mxu0 0
        %2259 = vmatprep.mubr.bf16.mxu0 0
        %2260 = vmatmul.mubr.bf16.gmra.mrb[0].mxu0 %v2177
        %v2261 = vpop.f32.mrb[0].mxu0
        %v2262 = vadd.f32 %v2138, %v2261
        %v2263 = vpop.f32.mrb[0].mxu0
        %v2264 = vpop.f32.mrb[0].mxu0
        %v2265 = vpop.f32.mrb[0].mxu0
        %2266 = vdwg.mxu0
        %v2267 = vunpack.c.l.bf16 %v1120
        %v2268 = vadd.f32 %v2267, %v2262
        %2269 = vadd.xlane.f32.xlu0 %v2268
        %v2270 = vpop.xlane.xlu0 %2269
        %v2271 = vrcp.pop 128.0
        %v2272 = vmul.f32 %v2270, %v2271
        %v2273 = vsub.f32 %v2268, %v2272
        %v2274 = vmul.f32 %v2273, %v2273
        %2275 = vadd.xlane.f32.xlu0 %v2274
        %v2276 = vpop.xlane.xlu0 %2275
        %v2277 = vmul.f32 %v2276, %v2271
        %v2278 = vadd.f32 %v2277, 1e-12
        %v2279 = vrsqrt.pop %v2278
        %v2280 = vmul.f32 %v2273, %v2279
        %v2281 = vld [vmem:[%s11] sm:$0x1]
        %v2283 = vlaneseq
        %v2284 = vshrl.u32 %v2283, 7
        %v2285 = vsub.s32 0, %v2284
        %v2286 = vrot.slane %v2281, %v2285
        %v2288 = vmul.f32 %v2280, %v2286
        %v2289 = vld [vmem:[%s12] sm:$0x1]
        %v2291 = vlaneseq
        %v2292 = vshrl.u32 %v2291, 7
        %v2293 = vsub.s32 0, %v2292
        %v2294 = vrot.slane %v2289, %v2293
        %v2296 = vadd.f32 %v2288, %v2294
        %v2297 = vpack.c.bf16 %v2296, %v2296
        %v2298 = vld [vmem:[#allocation11] sm:$0xff]
        %v2299 = vld [vmem:[#allocation11 + $0x8] sm:$0xff]
        %v2300 = vld [vmem:[#allocation11 + $0x10] sm:$0xff]
        %v2301 = vld [vmem:[#allocation11 + $0x18] sm:$0xff]
        %v2302 = vld [vmem:[#allocation11 + $0x20] sm:$0xff]
        %v2303 = vld [vmem:[#allocation11 + $0x28] sm:$0xff]
        %v2304 = vld [vmem:[#allocation11 + $0x30] sm:$0xff]
        %v2305 = vld [vmem:[#allocation11 + $0x38] sm:$0xff]
        %v2306 = vld [vmem:[#allocation11 + $0x40] sm:$0xff]
        %v2307 = vld [vmem:[#allocation11 + $0x48] sm:$0xff]
        %v2308 = vld [vmem:[#allocation11 + $0x50] sm:$0xff]
        %v2309 = vld [vmem:[#allocation11 + $0x58] sm:$0xff]
        %v2310 = vld [vmem:[#allocation11 + $0x60] sm:$0xff]
        %v2311 = vld [vmem:[#allocation11 + $0x68] sm:$0xff]
        %v2312 = vld [vmem:[#allocation11 + $0x70] sm:$0xff]
        %v2313 = vld [vmem:[#allocation11 + $0x78] sm:$0xff]
        %v2314 = vld [vmem:[%s14] sm:$0x3]
        %v2316 = vlaneseq
        %v2317 = vshrl.u32 %v2316, 7
        %v2318 = vsub.s32 0, %v2317
        %v2319 = vrot.slane %v2314, %v2318
        %v2320 = vlaneseq
        %v2321 = vshrl.u32 %v2320, 7
        %v2322 = vsub.s32 1, %v2321
        %v2323 = vrot.slane %v2314, %v2322
        %v2342 = vunpack.c.l.b16 %v2298
        %v2343 = vunpack.c.h.b16 %v2298
        %v2344 = vunpack.c.l.b16 %v2299
        %v2345 = vunpack.c.h.b16 %v2299
        %v2346 = vunpack.c.l.b16 %v2300
        %v2347 = vunpack.c.h.b16 %v2300
        %v2348 = vunpack.c.l.b16 %v2301
        %v2349 = vunpack.c.h.b16 %v2301
        %v2350 = vunpack.c.l.b16 %v2302
        %v2351 = vunpack.c.h.b16 %v2302
        %v2352 = vunpack.c.l.b16 %v2303
        %v2353 = vunpack.c.h.b16 %v2303
        %v2354 = vunpack.c.l.b16 %v2304
        %v2355 = vunpack.c.h.b16 %v2304
        %v2356 = vunpack.c.l.b16 %v2305
        %v2357 = vunpack.c.h.b16 %v2305
        %v2358 = vunpack.c.l.b16 %v2306
        %v2359 = vunpack.c.h.b16 %v2306
        %v2360 = vunpack.c.l.b16 %v2307
        %v2361 = vunpack.c.h.b16 %v2307
        %v2362 = vunpack.c.l.b16 %v2308
        %v2363 = vunpack.c.h.b16 %v2308
        %v2364 = vunpack.c.l.b16 %v2309
        %v2365 = vunpack.c.h.b16 %v2309
        %v2366 = vunpack.c.l.b16 %v2310
        %v2367 = vunpack.c.h.b16 %v2310
        %v2368 = vunpack.c.l.b16 %v2311
        %v2369 = vunpack.c.h.b16 %v2311
        %v2370 = vunpack.c.l.b16 %v2312
        %v2371 = vunpack.c.h.b16 %v2312
        %v2372 = vunpack.c.l.b16 %v2313
        %v2373 = vunpack.c.h.b16 %v2313
        %v2374 = vpack.c.b16 %v2344, %v2342
        %v2375 = vpack.c.b16 %v2345, %v2343
        %v2376 = vpack.c.b16 %v2348, %v2346
        %v2377 = vpack.c.b16 %v2349, %v2347
        %v2378 = vpack.c.b16 %v2352, %v2350
        %v2379 = vpack.c.b16 %v2353, %v2351
        %v2380 = vpack.c.b16 %v2356, %v2354
        %v2381 = vpack.c.b16 %v2357, %v2355
        %v2382 = vpack.c.b16 %v2360, %v2358
        %v2383 = vpack.c.b16 %v2361, %v2359
        %v2384 = vpack.c.b16 %v2364, %v2362
        %v2385 = vpack.c.b16 %v2365, %v2363
        %v2386 = vpack.c.b16 %v2368, %v2366
        %v2387 = vpack.c.b16 %v2369, %v2367
        %v2388 = vpack.c.b16 %v2372, %v2370
        %v2389 = vpack.c.b16 %v2373, %v2371
        %2406 = vmatprep.subr.bf16.mxu0 %v2375
        %2407 = vmatpush1.bf16.msra.mxu0 %v2374
        %2408 = vmatprep.subr.bf16.mxu0 %v2377
        %2409 = vmatpush1.bf16.msra.mxu0 %v2376
        %2410 = vmatprep.subr.bf16.mxu0 %v2379
        %2411 = vmatpush1.bf16.msra.mxu0 %v2378
        %2412 = vmatprep.subr.bf16.mxu0 %v2381
        %2413 = vmatpush1.bf16.msra.mxu0 %v2380
        %2414 = vmatprep.subr.bf16.mxu0 %v2383
        %2415 = vmatpush1.bf16.msra.mxu0 %v2382
        %2416 = vmatprep.subr.bf16.mxu0 %v2385
        %2417 = vmatpush1.bf16.msra.mxu0 %v2384
        %2418 = vmatprep.subr.bf16.mxu0 %v2387
        %2419 = vmatpush1.bf16.msra.mxu0 %v2386
        %2420 = vmatprep.subr.bf16.mxu0 %v2389
        %2421 = vmatpush1.bf16.msra.mxu0 %v2388
        %2422 = vmatprep.subr.bf16.mxu0 0
        %2423 = vmatpush1.bf16.msra.mxu0 0
        %2424 = vmatprep.subr.bf16.mxu0 0
        %2425 = vmatpush1.bf16.msra.mxu0 0
        %2426 = vmatprep.subr.bf16.mxu0 0
        %2427 = vmatpush1.bf16.msra.mxu0 0
        %2428 = vmatprep.subr.bf16.mxu0 0
        %2429 = vmatpush1.bf16.msra.mxu0 0
        %2430 = vmatprep.subr.bf16.mxu0 0
        %2431 = vmatpush1.bf16.msra.mxu0 0
        %2432 = vmatprep.subr.bf16.mxu0 0
        %2433 = vmatpush1.bf16.msra.mxu0 0
        %2434 = vmatprep.subr.bf16.mxu0 0
        %2435 = vmatpush1.bf16.msra.mxu0 0
        %2436 = vmatprep.subr.bf16.mxu0 0
        %2437 = vmatpush1.bf16.msra.mxu0 0
        %2438 = vmatprep.mubr.bf16.mxu0 0
        %2439 = vmatmul.mubr.bf16.gmra.mrb[0].mxu0 %v2297
        %v2440 = vpop.f32.mrb[0].mxu0
        %v2441 = vadd.f32 %v2319, %v2440
        %v2442 = vpop.f32.mrb[0].mxu0
        %v2443 = vadd.f32 %v2323, %v2442
        %v2444 = vpop.f32.mrb[0].mxu0
        %v2445 = vpop.f32.mrb[0].mxu0
        %2446 = vdwg.mxu0
        %v2447 = vmul.f32 %v2441, %v2441
        %v2448 = vmul.f32 %v2443, %v2443
        %v2449 = vmul.f32 %v2441, %v2447
        %v2450 = vmul.f32 %v2443, %v2448
        %v2451 = vmul.f32 %v2449, 0.044715
        %v2452 = vmul.f32 %v2450, 0.044715
        %v2453 = vadd.f32 %v2441, %v2451
        %v2454 = vadd.f32 %v2443, %v2452
        %v2455 = vmul.f32 %v2453, 0.7978846
        %v2456 = vmul.f32 %v2454, 0.7978846
        %v2457 = vtanh.pop %v2455
        %v2458 = vtanh.pop %v2456
        %v2459 = vadd.f32 %v2457, 1.0
        %v2460 = vadd.f32 %v2458, 1.0
        %v2461 = vmul.f32 %v2459, 0.5
        %v2462 = vmul.f32 %v2460, 0.5
        %v2463 = vmul.f32 %v2441, %v2461
        %v2464 = vmul.f32 %v2443, %v2462
        %v2465 = vpack.c.bf16 %v2463, %v2463
        %v2466 = vpack.c.bf16 %v2464, %v2464
        %v2467 = vld [vmem:[#allocation13] sm:$0xf]
        %v2468 = vld [vmem:[#allocation13 + $0x4] sm:$0xf]
        %v2469 = vld [vmem:[#allocation13 + $0x8] sm:$0xf]
        %v2470 = vld [vmem:[#allocation13 + $0xc] sm:$0xf]
        %v2471 = vld [vmem:[#allocation13 + $0x10] sm:$0xf]
        %v2472 = vld [vmem:[#allocation13 + $0x14] sm:$0xf]
        %v2473 = vld [vmem:[#allocation13 + $0x18] sm:$0xf]
        %v2474 = vld [vmem:[#allocation13 + $0x1c] sm:$0xf]
        %v2475 = vld [vmem:[#allocation13 + $0x20] sm:$0xf]
        %v2476 = vld [vmem:[#allocation13 + $0x24] sm:$0xf]
        %v2477 = vld [vmem:[#allocation13 + $0x28] sm:$0xf]
        %v2478 = vld [vmem:[#allocation13 + $0x2c] sm:$0xf]
        %v2479 = vld [vmem:[#allocation13 + $0x30] sm:$0xf]
        %v2480 = vld [vmem:[#allocation13 + $0x34] sm:$0xf]
        %v2481 = vld [vmem:[#allocation13 + $0x38] sm:$0xf]
        %v2482 = vld [vmem:[#allocation13 + $0x3c] sm:$0xf]
        %v2483 = vld [vmem:[#allocation13 + $0x40] sm:$0xf]
        %v2484 = vld [vmem:[#allocation13 + $0x44] sm:$0xf]
        %v2485 = vld [vmem:[#allocation13 + $0x48] sm:$0xf]
        %v2486 = vld [vmem:[#allocation13 + $0x4c] sm:$0xf]
        %v2487 = vld [vmem:[#allocation13 + $0x50] sm:$0xf]
        %v2488 = vld [vmem:[#allocation13 + $0x54] sm:$0xf]
        %v2489 = vld [vmem:[#allocation13 + $0x58] sm:$0xf]
        %v2490 = vld [vmem:[#allocation13 + $0x5c] sm:$0xf]
        %v2491 = vld [vmem:[#allocation13 + $0x60] sm:$0xf]
        %v2492 = vld [vmem:[#allocation13 + $0x64] sm:$0xf]
        %v2493 = vld [vmem:[#allocation13 + $0x68] sm:$0xf]
        %v2494 = vld [vmem:[#allocation13 + $0x6c] sm:$0xf]
        %v2495 = vld [vmem:[#allocation13 + $0x70] sm:$0xf]
        %v2496 = vld [vmem:[#allocation13 + $0x74] sm:$0xf]
        %v2497 = vld [vmem:[#allocation13 + $0x78] sm:$0xf]
        %v2498 = vld [vmem:[#allocation13 + $0x7c] sm:$0xf]
        %v2499 = vld [vmem:[%s16] sm:$0x1]
        %v2501 = vlaneseq
        %v2502 = vshrl.u32 %v2501, 7
        %v2503 = vsub.s32 0, %v2502
        %v2504 = vrot.slane %v2499, %v2503
        %v2538 = vunpack.c.l.b16 %v2467
        %v2539 = vunpack.c.l.b16 %v2468
        %v2540 = vunpack.c.l.b16 %v2469
        %v2541 = vunpack.c.l.b16 %v2470
        %v2542 = vunpack.c.l.b16 %v2471
        %v2543 = vunpack.c.l.b16 %v2472
        %v2544 = vunpack.c.l.b16 %v2473
        %v2545 = vunpack.c.l.b16 %v2474
        %v2546 = vunpack.c.l.b16 %v2475
        %v2547 = vunpack.c.l.b16 %v2476
        %v2548 = vunpack.c.l.b16 %v2477
        %v2549 = vunpack.c.l.b16 %v2478
        %v2550 = vunpack.c.l.b16 %v2479
        %v2551 = vunpack.c.l.b16 %v2480
        %v2552 = vunpack.c.l.b16 %v2481
        %v2553 = vunpack.c.l.b16 %v2482
        %v2554 = vunpack.c.l.b16 %v2483
        %v2555 = vunpack.c.l.b16 %v2484
        %v2556 = vunpack.c.l.b16 %v2485
        %v2557 = vunpack.c.l.b16 %v2486
        %v2558 = vunpack.c.l.b16 %v2487
        %v2559 = vunpack.c.l.b16 %v2488
        %v2560 = vunpack.c.l.b16 %v2489
        %v2561 = vunpack.c.l.b16 %v2490
        %v2562 = vunpack.c.l.b16 %v2491
        %v2563 = vunpack.c.l.b16 %v2492
        %v2564 = vunpack.c.l.b16 %v2493
        %v2565 = vunpack.c.l.b16 %v2494
        %v2566 = vunpack.c.l.b16 %v2495
        %v2567 = vunpack.c.l.b16 %v2496
        %v2568 = vunpack.c.l.b16 %v2497
        %v2569 = vunpack.c.l.b16 %v2498
        %v2570 = vpack.c.b16 %v2539, %v2538
        %v2571 = vpack.c.b16 %v2541, %v2540
        %v2572 = vpack.c.b16 %v2543, %v2542
        %v2573 = vpack.c.b16 %v2545, %v2544
        %v2574 = vpack.c.b16 %v2547, %v2546
        %v2575 = vpack.c.b16 %v2549, %v2548
        %v2576 = vpack.c.b16 %v2551, %v2550
        %v2577 = vpack.c.b16 %v2553, %v2552
        %v2578 = vpack.c.b16 %v2555, %v2554
        %v2579 = vpack.c.b16 %v2557, %v2556
        %v2580 = vpack.c.b16 %v2559, %v2558
        %v2581 = vpack.c.b16 %v2561, %v2560
        %v2582 = vpack.c.b16 %v2563, %v2562
        %v2583 = vpack.c.b16 %v2565, %v2564
        %v2584 = vpack.c.b16 %v2567, %v2566
        %v2585 = vpack.c.b16 %v2569, %v2568
        %2602 = vmatprep.subr.bf16.mxu0 0
        %2603 = vmatpush1.bf16.msra.mxu0 %v2570
        %2604 = vmatprep.subr.bf16.mxu0 0
        %2605 = vmatpush1.bf16.msra.mxu0 %v2571
        %2606 = vmatprep.subr.bf16.mxu0 0
        %2607 = vmatpush1.bf16.msra.mxu0 %v2572
        %2608 = vmatprep.subr.bf16.mxu0 0
        %2609 = vmatpush1.bf16.msra.mxu0 %v2573
        %2610 = vmatprep.subr.bf16.mxu0 0
        %2611 = vmatpush1.bf16.msra.mxu0 %v2574
        %2612 = vmatprep.subr.bf16.mxu0 0
        %2613 = vmatpush1.bf16.msra.mxu0 %v2575
        %2614 = vmatprep.subr.bf16.mxu0 0
        %2615 = vmatpush1.bf16.msra.mxu0 %v2576
        %2616 = vmatprep.subr.bf16.mxu0 0
        %2617 = vmatpush1.bf16.msra.mxu0 %v2577
        %2618 = vmatprep.subr.bf16.mxu0 0
        %2619 = vmatpush1.bf16.msra.mxu0 %v2578
        %2620 = vmatprep.subr.bf16.mxu0 0
        %2621 = vmatpush1.bf16.msra.mxu0 %v2579
        %2622 = vmatprep.subr.bf16.mxu0 0
        %2623 = vmatpush1.bf16.msra.mxu0 %v2580
        %2624 = vmatprep.subr.bf16.mxu0 0
        %2625 = vmatpush1.bf16.msra.mxu0 %v2581
        %2626 = vmatprep.subr.bf16.mxu0 0
        %2627 = vmatpush1.bf16.msra.mxu0 %v2582
        %2628 = vmatprep.subr.bf16.mxu0 0
        %2629 = vmatpush1.bf16.msra.mxu0 %v2583
        %2630 = vmatprep.subr.bf16.mxu0 0
        %2631 = vmatpush1.bf16.msra.mxu0 %v2584
        %2632 = vmatprep.subr.bf16.mxu0 0
        %2633 = vmatpush1.bf16.msra.mxu0 %v2585
        %2634 = vmatprep.mubr.bf16.mxu0 %v2466
        %2635 = vmatmul.mubr.bf16.gmra.mrb[0].mxu0 %v2465
        %v2636 = vpop.f32.mrb[0].mxu0
        %v2637 = vadd.f32 %v2504, %v2636
        %v2638 = vpop.f32.mrb[0].mxu0
        %v2639 = vpop.f32.mrb[0].mxu0
        %v2640 = vpop.f32.mrb[0].mxu0
        %2641 = vdwg.mxu0
        %v2642 = vadd.f32 %v2296, %v2637
        %2643 = vadd.xlane.f32.xlu0 %v2642
        %v2644 = vpop.xlane.xlu0 %2643
        %v2645 = vmul.f32 %v2644, %v2271
        %v2646 = vsub.f32 %v2642, %v2645
        %v2647 = vmul.f32 %v2646, %v2646
        %2648 = vadd.xlane.f32.xlu0 %v2647
        %v2649 = vpop.xlane.xlu0 %2648
        %v2650 = vmul.f32 %v2649, %v2271
        %v2651 = vadd.f32 %v2650, 1e-12
        %v2652 = vrsqrt.pop %v2651
        %v2653 = vmul.f32 %v2646, %v2652
        %v2654 = vld [vmem:[%s17] sm:$0x1]
        %v2656 = vlaneseq
        %v2657 = vshrl.u32 %v2656, 7
        %v2658 = vsub.s32 0, %v2657
        %v2659 = vrot.slane %v2654, %v2658
        %v2661 = vmul.f32 %v2653, %v2659
        %v2662 = vld [vmem:[%s18] sm:$0x1]
        %v2664 = vlaneseq
        %v2665 = vshrl.u32 %v2664, 7
        %v2666 = vsub.s32 0, %v2665
        %v2667 = vrot.slane %v2662, %v2666
        %v2669 = vadd.f32 %v2661, %v2667
        %v2670 = vpack.c.bf16 %v2669, %v2669
        %v2671 = vld [vmem:[%s19] sm:$0xf]
        %v2672 = vld [vmem:[%s19 + $0x4] sm:$0xf]
        %v2673 = vld [vmem:[%s19 + $0x8] sm:$0xf]
        %v2674 = vld [vmem:[%s19 + $0xc] sm:$0xf]
        %v2675 = vld [vmem:[%s19 + $0x10] sm:$0xf]
        %v2676 = vld [vmem:[%s19 + $0x14] sm:$0xf]
        %v2677 = vld [vmem:[%s19 + $0x18] sm:$0xf]
        %v2678 = vld [vmem:[%s19 + $0x1c] sm:$0xf]
        %v2679 = vld [vmem:[%s19 + $0x20] sm:$0xf]
        %v2680 = vld [vmem:[%s19 + $0x24] sm:$0xf]
        %v2681 = vld [vmem:[%s19 + $0x28] sm:$0xf]
        %v2682 = vld [vmem:[%s19 + $0x2c] sm:$0xf]
        %v2683 = vld [vmem:[%s19 + $0x30] sm:$0xf]
        %v2684 = vld [vmem:[%s19 + $0x34] sm:$0xf]
        %v2685 = vld [vmem:[%s19 + $0x38] sm:$0xf]
        %v2686 = vld [vmem:[%s19 + $0x3c] sm:$0xf]
        %v2687 = vld [vmem:[%s20] sm:$0x1]
        %v2689 = vlaneseq
        %v2690 = vshrl.u32 %v2689, 7
        %v2691 = vsub.s32 0, %v2690
        %v2692 = vrot.slane %v2687, %v2691
        %v2710 = vunpack.c.l.b16 %v2671
        %v2711 = vunpack.c.l.b16 %v2672
        %v2712 = vunpack.c.l.b16 %v2673
        %v2713 = vunpack.c.l.b16 %v2674
        %v2714 = vunpack.c.l.b16 %v2675
        %v2715 = vunpack.c.l.b16 %v2676
        %v2716 = vunpack.c.l.b16 %v2677
        %v2717 = vunpack.c.l.b16 %v2678
        %v2718 = vunpack.c.l.b16 %v2679
        %v2719 = vunpack.c.l.b16 %v2680
        %v2720 = vunpack.c.l.b16 %v2681
        %v2721 = vunpack.c.l.b16 %v2682
        %v2722 = vunpack.c.l.b16 %v2683
        %v2723 = vunpack.c.l.b16 %v2684
        %v2724 = vunpack.c.l.b16 %v2685
        %v2725 = vunpack.c.l.b16 %v2686
        %v2726 = vpack.c.b16 %v2711, %v2710
        %v2727 = vpack.c.b16 %v2713, %v2712
        %v2728 = vpack.c.b16 %v2715, %v2714
        %v2729 = vpack.c.b16 %v2717, %v2716
        %v2730 = vpack.c.b16 %v2719, %v2718
        %v2731 = vpack.c.b16 %v2721, %v2720
        %v2732 = vpack.c.b16 %v2723, %v2722
        %v2733 = vpack.c.b16 %v2725, %v2724
        %2742 = vmatprep.subr.bf16.mxu0 0
        %2743 = vmatpush1.bf16.msra.mxu0 %v2726
        %2744 = vmatprep.subr.bf16.mxu0 0
        %2745 = vmatpush1.bf16.msra.mxu0 %v2727
        %2746 = vmatprep.subr.bf16.mxu0 0
        %2747 = vmatpush1.bf16.msra.mxu0 %v2728
        %2748 = vmatprep.subr.bf16.mxu0 0
        %2749 = vmatpush1.bf16.msra.mxu0 %v2729
        %2750 = vmatprep.subr.bf16.mxu0 0
        %2751 = vmatpush1.bf16.msra.mxu0 %v2730
        %2752 = vmatprep.subr.bf16.mxu0 0
        %2753 = vmatpush1.bf16.msra.mxu0 %v2731
        %2754 = vmatprep.subr.bf16.mxu0 0
        %2755 = vmatpush1.bf16.msra.mxu0 %v2732
        %2756 = vmatprep.subr.bf16.mxu0 0
        %2757 = vmatpush1.bf16.msra.mxu0 %v2733
        %2758 = vmatprep.subr.bf16.mxu0 0
        %2759 = vmatpush1.bf16.msra.mxu0 0
        %2760 = vmatprep.subr.bf16.mxu0 0
        %2761 = vmatpush1.bf16.msra.mxu0 0
        %2762 = vmatprep.subr.bf16.mxu0 0
        %2763 = vmatpush1.bf16.msra.mxu0 0
        %2764 = vmatprep.subr.bf16.mxu0 0
        %2765 = vmatpush1.bf16.msra.mxu0 0
        %2766 = vmatprep.subr.bf16.mxu0 0
        %2767 = vmatpush1.bf16.msra.mxu0 0
        %2768 = vmatprep.subr.bf16.mxu0 0
        %2769 = vmatpush1.bf16.msra.mxu0 0
        %2770 = vmatprep.subr.bf16.mxu0 0
        %2771 = vmatpush1.bf16.msra.mxu0 0
        %2772 = vmatprep.subr.bf16.mxu0 0
        %2773 = vmatpush1.bf16.msra.mxu0 0
        %2774 = vmatprep.mubr.bf16.mxu0 0
        %2775 = vmatmul.mubr.bf16.gmra.mrb[0].mxu0 %v2670
        %v2776 = vpop.f32.mrb[0].mxu0
        %v2777 = vadd.f32 %v2692, %v2776
        %v2778 = vpop.f32.mrb[0].mxu0
        %v2779 = vpop.f32.mrb[0].mxu0
        %v2780 = vpop.f32.mrb[0].mxu0
        %2781 = vdwg.mxu0
        %2782 = vst [vmem:[%s788] sm:$0xff] %v2777
        %s2783 = sand.u32 %s505, 1
        %s2784 = scalar_lea.sflag [#allocation4], %s2783
        %s2785 = sand.u32 %s505, 1
        %s2786 = smul.addr %s2785, 8
        %s2787 = scalar_lea.vmem [#allocation14], %s2786
        // Predicated region
        $region133: #{tpu_custom_call.1} parent=103 // pred_check
          %p2788 = pneg %p515
        $region134: #{tpu_custom_call.1} parent=103 // pred_check_branch
          %2790 = sbr.rel (%p2788) target = $region136
        $region135: #{tpu_custom_call.1} parent=103 // pred_region
          %s2792 = ssub.s32 128, 128
          %2793 = vsyncadd %s2784, %s2792
          %s2794 = smul.addr %s41, 128
          %s2795 = scalar_lea.hbm %s21, %s2794
          %s2797 = sshll.u32 %s2787, 4
          %s2798 = int_to_ptr.vmem [resolvable:$true] %s2797
          %2800 = dma.vmem_to_hbm [thread:$0]  %s2798, 128, %s2795, %s2784
        $region136: #{tpu_custom_call.1} parent=103 // pred_fallthru
          _
      $region104: #{tpu_custom_call.1} parent=5 // pred_fallthru
        _
      %p2801 = scmp.le.s32.totalorder 2, %s36
      // Predicated region
      $region137: #{tpu_custom_call.1} parent=5 // pred_check
        %p2802 = pneg %p2801
      $region138: #{tpu_custom_call.1} parent=5 // pred_check_branch
        %2804 = sbr.rel (%p2802) target = $region140
      $region139: #{tpu_custom_call.1} parent=5 // pred_region
        %s2805 = ssub.s32 %s36, 2
        // Predicated region
        $region141: #{tpu_custom_call.1} parent=139 // pred_check
          %p2806 = pneg %p521
        $region142: #{tpu_custom_call.1} parent=139 // pred_check_branch
          %2808 = sbr.rel (%p2806) target = $region144
        $region143: #{tpu_custom_call.1} parent=139 // pred_region
          %s2809 = sand.u32 %s506, 1
          %s2810 = scalar_lea.sflag [#allocation4], %s2809
          %s2811 = sand.u32 %s506, 1
          %s2812 = smul.addr %s2811, 8
          %s2813 = scalar_lea.vmem [#allocation14], %s2812
          %2814 = dma.done %s2810, 128
        $region144: #{tpu_custom_call.1} parent=139 // pred_fallthru
          _
      $region140: #{tpu_custom_call.1} parent=5 // pred_fallthru
        _
    $region6: #{tpu_custom_call.1} parent=1 // loop_footer
      %s40 = sadd.s32 1, %s36
    $region7: #{tpu_custom_call.1} parent=1 // loop_footer_branch
      %35 = sbr.rel target = $region3
    $region8: #{tpu_custom_call.1} parent=1 // loop_exit
      _
    %2815 = vsyncpa [#allocation3], 1
    %s2816 = scalar_lea.sflag [#allocation3], 1
    %2817 = vsyncpa %s2816, 1
    %2818 = vsyncpa [#allocation6], 1
    %2819 = vsyncpa [#allocation9], 1
    %2820 = vsyncpa [#allocation12], 1
    %2821 = vsyncpa [#allocation4], 1
    %s2822 = scalar_lea.sflag [#allocation4], 1
    %2823 = vsyncpa %s2822, 1

// kernel: tpu_custom_call.1
$region0: #{tpu_custom_call.1}
  #allocation0 [shape = 'u32[]', space=smem, size = 0x4, offset = 0x4, fixed_abs, tag = 'smem constant byte address 0x4 - core index']
  #allocation1 [shape = 'u32[144,128]{1,0:T(1,128)}', space=vmem, size = 0x12000, scoped, tag = 'internal scratch']
  %s0 = inlined_call_operand.hbm [shape: bf16[128,128], index: 0, kind: input, shape index: {}]
  %s1 = inlined_call_operand.vmem [shape: bf16[16,128], index: 1, kind: input, shape index: {}]
  %s2 = inlined_call_operand.vmem [shape: f32[16,1,8], index: 2, kind: input, shape index: {}]
  %s3 = inlined_call_operand.hbm [shape: bf16[128,128], index: 3, kind: input, shape index: {}]
  %s4 = inlined_call_operand.hbm [shape: bf16[128,128], index: 4, kind: input, shape index: {}]
  %s5 = inlined_call_operand.hbm [shape: bf16[128,128], index: 5, kind: input, shape index: {}]
  %s6 = inlined_call_operand.vmem [shape: f32[1,128], index: 6, kind: input, shape index: {}]
  %s7 = inlined_call_operand.vmem [shape: f32[1,128], index: 7, kind: input, shape index: {}]
  %s8 = inlined_call_operand.vmem [shape: f32[1,128], index: 8, kind: input, shape index: {}]
  %s9 = inlined_call_operand.hbm [shape: bf16[128,128], index: 9, kind: input, shape index: {}]
  %s10 = inlined_call_operand.vmem [shape: f32[1,128], index: 10, kind: input, shape index: {}]
  %s11 = inlined_call_operand.vmem [shape: f32[1,128], index: 11, kind: input, shape index: {}]
  %s12 = inlined_call_operand.vmem [shape: f32[1,128], index: 12, kind: input, shape index: {}]
  %s13 = inlined_call_operand.hbm [shape: bf16[128,256], index: 13, kind: input, shape index: {}]
  %s14 = inlined_call_operand.vmem [shape: f32[1,256], index: 14, kind: input, shape index: {}]
  %s15 = inlined_call_operand.hbm [shape: bf16[256,128], index: 15, kind: input, shape index: {}]
  %s16 = inlined_call_operand.vmem [shape: f32[1,128], index: 16, kind: input, shape index: {}]
  %s17 = inlined_call_operand.vmem [shape: f32[1,128], index: 17, kind: input, shape index: {}]
  %s18 = inlined_call_operand.vmem [shape: f32[1,128], index: 18, kind: input, shape index: {}]
  %s19 = inlined_call_operand.vmem [shape: bf16[128,128], index: 19, kind: input, shape index: {}]
  %s20 = inlined_call_operand.vmem [shape: f32[1,128], index: 20, kind: input, shape index: {}]
  %s21 = inlined_call_operand.hbm [shape: f32[16,128], index: 21, kind: output, shape index: {}]
  %s22 = sld [smem:[#allocation0]]
  $region145: #{tpu_custom_call.1} parent=0
    _
  %s24 = ssub.s32 1, %s22
  %s25 = scalar_select 0, %s24, %s22
  $region1: #{tpu_custom_call.1} parent=0
    #allocation2 [shape = 'u8[32768]{0}', space=vmem, size = 0x8000, scoped, tag = 'input window, operand 0']
    #allocation3 [shape = 's32[2]{0}', space=sflag, size = 0x8, scoped, tag = 'scoped memory for tpu_custom_call.1']
    #allocation4 [shape = 's32[2]{0}', space=sflag, size = 0x8, scoped, tag = 'scoped memory for tpu_custom_call.1']
    #allocation5 [shape = 'u8[32768]{0}', space=vmem, size = 0x8000, scoped, tag = 'input window, operand 3, single buffered']
    #allocation6 [shape = 's32[1]{0}', space=sflag, size = 0x4, scoped, tag = 'scoped memory for tpu_custom_call.1']
    #allocation7 [shape = 'u8[32768]{0}', space=vmem, size = 0x8000, scoped, tag = 'input window, operand 4, single buffered']
    #allocation8 [shape = 'u8[32768]{0}', space=vmem, size = 0x8000, scoped, tag = 'input window, operand 5, single buffered']
    #allocation9 [shape = 's32[1]{0}', space=sflag, size = 0x4, scoped, tag = 'scoped memory for tpu_custom_call.1']
    #allocation10 [shape = 'u8[32768]{0}', space=vmem, size = 0x8000, scoped, tag = 'input window, operand 9, single buffered']
    #allocation11 [shape = 'u8[65536]{0}', space=vmem, size = 0x10000, scoped, tag = 'input window, operand 13, single buffered']
    #allocation12 [shape = 's32[1]{0}', space=sflag, size = 0x4, scoped, tag = 'scoped memory for tpu_custom_call.1']
    #allocation13 [shape = 'u8[65536]{0}', space=vmem, size = 0x10000, scoped, tag = 'input window, operand 15, single buffered']
    #allocation14 [shape = 'u8[8192]{0}', space=vmem, size = 0x2000, scoped, tag = 'output window, operand 0']
    %26 = vsyncpa [#allocation3], 0
    %s27 = scalar_lea.sflag [#allocation3], 1
    %28 = vsyncpa %s27, 0
    %29 = vsyncpa [#allocation6], 0
    %30 = vsyncpa [#allocation9], 0
    %31 = vsyncpa [#allocation12], 0
    %32 = vsyncpa [#allocation4], 0
    %s33 = scalar_lea.sflag [#allocation4], 1
    %34 = vsyncpa %s33, 0
    loop: start=0, step=1, limit=4
    $region2: #{tpu_custom_call.1} parent=1 // loop_pre_header
      _
    $region3: #{tpu_custom_call.1} parent=1 // loop_header
      %s36 = sphi 0, %s40
      %p37 = scmp.ge.s32.totalorder %s36, 4
      %s46 = sphi 0, %s48
      %s49 = sphi 0, %s46
      %s50 = sphi 0, %s49
      %s66 = sphi 0, %s50
      %s72 = sphi 0, %s74
      %s75 = sphi 0, %s72
      %s76 = sphi 0, %s75
      %s92 = sphi 0, %s76
      %s98 = sphi 0, %s100
      %s101 = sphi 0, %s98
      %s102 = sphi 0, %s101
      %s118 = sphi 0, %s102
      %s122 = sphi 0, %s122
      %s124 = sphi 0, %s122
      %s125 = sphi 0, %s124
      %s139 = sphi 0, %s125
      %s143 = sphi 0, %s143
      %s145 = sphi 0, %s143
      %s146 = sphi 0, %s145
      %s160 = sphi 0, %s146
      %s164 = sphi 0, %s164
      %s166 = sphi 0, %s164
      %s167 = sphi 0, %s166
      %s181 = sphi 0, %s167
      %s185 = sphi 0, %s185
      %s187 = sphi 0, %s185
      %s188 = sphi 0, %s187
      %s202 = sphi 0, %s188
      %s206 = sphi 0, %s206
      %s208 = sphi 0, %s206
      %s209 = sphi 0, %s208
      %s223 = sphi 0, %s209
      %s227 = sphi 0, %s227
      %s229 = sphi 0, %s227
      %s230 = sphi 0, %s229
      %s244 = sphi 0, %s230
      %s248 = sphi 0, %s248
      %s250 = sphi 0, %s248
      %s251 = sphi 0, %s250
      %s265 = sphi 0, %s251
      %s269 = sphi 0, %s269
      %s271 = sphi 0, %s269
      %s272 = sphi 0, %s271
      %s286 = sphi 0, %s272
      %s290 = sphi 0, %s290
      %s292 = sphi 0, %s290
      %s293 = sphi 0, %s292
      %s307 = sphi 0, %s293
      %s311 = sphi 0, %s311
      %s313 = sphi 0, %s311
      %s314 = sphi 0, %s313
      %s328 = sphi 0, %s314
      %s332 = sphi 0, %s332
      %s334 = sphi 0, %s332
      %s335 = sphi 0, %s334
      %s349 = sphi 0, %s335
      %s353 = sphi 0, %s353
      %s355 = sphi 0, %s353
      %s356 = sphi 0, %s355
      %s370 = sphi 0, %s356
      %s374 = sphi 0, %s374
      %s376 = sphi 0, %s374
      %s377 = sphi 0, %s376
      %s391 = sphi 0, %s377
      %s395 = sphi 0, %s395
      %s397 = sphi 0, %s395
      %s398 = sphi 0, %s397
      %s412 = sphi 0, %s398
      %s416 = sphi 0, %s416
      %s418 = sphi 0, %s416
      %s419 = sphi 0, %s418
      %s433 = sphi 0, %s419
      %s437 = sphi 0, %s437
      %s439 = sphi 0, %s437
      %s440 = sphi 0, %s439
      %s454 = sphi 0, %s440
      %s458 = sphi 0, %s458
      %s460 = sphi 0, %s458
      %s461 = sphi 0, %s460
      %s475 = sphi 0, %s461
      %s479 = sphi 0, %s479
      %s481 = sphi 0, %s479
      %s482 = sphi 0, %s481
      %s496 = sphi 0, %s482
      %s502 = sphi 0, %s504
      %s505 = sphi 0, %s502
      %s506 = sphi 0, %s505
      %s522 = sphi 0, %s506
    $region4: #{tpu_custom_call.1} parent=1 // loop_header_branch
      %39 = sbr.rel (%p37) target = $region8
    $region5: #{tpu_custom_call.1} parent=1 // loop_body
      %s41 = ssub.s32 %s36, 1
      %s42 = ssub.s32 %s36, 2
      %s43 = sadd.s32 %s36, 1
      %s44 = ssub.s32 %s36, %s43
      %p45 = scmp.eq.s32.totalorder %s44, 0
      %s47 = sadd.s32 %s46, 1
      %s48 = scalar_select %p45, %s46, %s47
      %p51 = pneg %p45
      %p52 = scmp.eq.s32.totalorder %s36, 1
      %p53 = por %p51, %p52
      %p54 = scmp.ne.s32.totalorder %s46, %s49
      %p55 = scmp.eq.s32.totalorder %s36, 0
      %p56 = por %p54, %p55
      %p57 = scmp.ne.s32.totalorder %s46, %s49
      %p58 = scmp.eq.s32.totalorder %s41, 1
      %p59 = por %p57, %p58
      %p60 = scmp.ne.s32.totalorder %s49, %s50
      %p61 = scmp.eq.s32.totalorder %s41, 0
      %p62 = por %p60, %p61
      %p63 = scmp.ne.s32.totalorder %s49, %s50
      %p64 = scmp.eq.s32.totalorder %s42, 1
      %p65 = por %p63, %p64
      %p67 = scmp.ne.s32.totalorder %s50, %s66
      %p68 = scmp.eq.s32.totalorder %s42, 0
      %p69 = por %p67, %p68
      %s70 = ssub.s32 %s36, %s43
      %p71 = scmp.eq.s32.totalorder %s70, 0
      %s73 = sadd.s32 %s72, 1
      %s74 = scalar_select %p71, %s72, %s73
      %p77 = pneg %p71
      %p78 = scmp.eq.s32.totalorder %s36, 1
      %p79 = por %p77, %p78
      %p80 = scmp.ne.s32.totalorder %s72, %s75
      %p81 = scmp.eq.s32.totalorder %s36, 0
      %p82 = por %p80, %p81
      %p83 = scmp.ne.s32.totalorder %s72, %s75
      %p84 = scmp.eq.s32.totalorder %s41, 1
      %p85 = por %p83, %p84
      %p86 = scmp.ne.s32.totalorder %s75, %s76
      %p87 = scmp.eq.s32.totalorder %s41, 0
      %p88 = por %p86, %p87
      %p89 = scmp.ne.s32.totalorder %s75, %s76
      %p90 = scmp.eq.s32.totalorder %s42, 1
      %p91 = por %p89, %p90
      %p93 = scmp.ne.s32.totalorder %s76, %s92
      %p94 = scmp.eq.s32.totalorder %s42, 0
      %p95 = por %p93, %p94
      %s96 = ssub.s32 %s36, %s43
      %p97 = scmp.eq.s32.totalorder %s96, 0
      %s99 = sadd.s32 %s98, 1
      %s100 = scalar_select %p97, %s98, %s99
      %p103 = pneg %p97
      %p104 = scmp.eq.s32.totalorder %s36, 1
      %p105 = por %p103, %p104
      %p106 = scmp.ne.s32.totalorder %s98, %s101
      %p107 = scmp.eq.s32.totalorder %s36, 0
      %p108 = por %p106, %p107
      %p109 = scmp.ne.s32.totalorder %s98, %s101
      %p110 = scmp.eq.s32.totalorder %s41, 1
      %p111 = por %p109, %p110
      %p112 = scmp.ne.s32.totalorder %s101, %s102
      %p113 = scmp.eq.s32.totalorder %s41, 0
      %p114 = por %p112, %p113
      %p115 = scmp.ne.s32.totalorder %s101, %s102
      %p116 = scmp.eq.s32.totalorder %s42, 1
      %p117 = por %p115, %p116
      %p119 = scmp.ne.s32.totalorder %s102, %s118
      %p120 = scmp.eq.s32.totalorder %s42, 0
      %p121 = por %p119, %p120
      %s123 = sadd.s32 %s122, 1
      %p126 = scmp.eq.s32.totalorder %s36, 1
      %p127 = scmp.ne.s32.totalorder %s122, %s124
      %p128 = scmp.eq.s32.totalorder %s36, 0
      %p129 = por %p127, %p128
      %p130 = scmp.ne.s32.totalorder %s122, %s124
      %p131 = scmp.eq.s32.totalorder %s41, 1
      %p132 = por %p130, %p131
      %p133 = scmp.ne.s32.totalorder %s124, %s125
      %p134 = scmp.eq.s32.totalorder %s41, 0
      %p135 = por %p133, %p134
      %p136 = scmp.ne.s32.totalorder %s124, %s125
      %p137 = scmp.eq.s32.totalorder %s42, 1
      %p138 = por %p136, %p137
      %p140 = scmp.ne.s32.totalorder %s125, %s139
      %p141 = scmp.eq.s32.totalorder %s42, 0
      %p142 = por %p140, %p141
      %s144 = sadd.s32 %s143, 1
      %p147 = scmp.eq.s32.totalorder %s36, 1
      %p148 = scmp.ne.s32.totalorder %s143, %s145
      %p149 = scmp.eq.s32.totalorder %s36, 0
      %p150 = por %p148, %p149
      %p151 = scmp.ne.s32.totalorder %s143, %s145
      %p152 = scmp.eq.s32.totalorder %s41, 1
      %p153 = por %p151, %p152
      %p154 = scmp.ne.s32.totalorder %s145, %s146
      %p155 = scmp.eq.s32.totalorder %s41, 0
      %p156 = por %p154, %p155
      %p157 = scmp.ne.s32.totalorder %s145, %s146
      %p158 = scmp.eq.s32.totalorder %s42, 1
      %p159 = por %p157, %p158
      %p161 = scmp.ne.s32.totalorder %s146, %s160
      %p162 = scmp.eq.s32.totalorder %s42, 0
      %p163 = por %p161, %p162
      %s165 = sadd.s32 %s164, 1
      %p168 = scmp.eq.s32.totalorder %s36, 1
      %p169 = scmp.ne.s32.totalorder %s164, %s166
      %p170 = scmp.eq.s32.totalorder %s36, 0
      %p171 = por %p169, %p170
      %p172 = scmp.ne.s32.totalorder %s164, %s166
      %p173 = scmp.eq.s32.totalorder %s41, 1
      %p174 = por %p172, %p173
      %p175 = scmp.ne.s32.totalorder %s166, %s167
      %p176 = scmp.eq.s32.totalorder %s41, 0
      %p177 = por %p175, %p176
      %p178 = scmp.ne.s32.totalorder %s166, %s167
      %p179 = scmp.eq.s32.totalorder %s42, 1
      %p180 = por %p178, %p179
      %p182 = scmp.ne.s32.totalorder %s167, %s181
      %p183 = scmp.eq.s32.totalorder %s42, 0
      %p184 = por %p182, %p183
      %s186 = sadd.s32 %s185, 1
      %p189 = scmp.eq.s32.totalorder %s36, 1
      %p190 = scmp.ne.s32.totalorder %s185, %s187
      %p191 = scmp.eq.s32.totalorder %s36, 0
      %p192 = por %p190, %p191
      %p193 = scmp.ne.s32.totalorder %s185, %s187
      %p194 = scmp.eq.s32.totalorder %s41, 1
      %p195 = por %p193, %p194
      %p196 = scmp.ne.s32.totalorder %s187, %s188
      %p197 = scmp.eq.s32.totalorder %s41, 0
      %p198 = por %p196, %p197
      %p199 = scmp.ne.s32.totalorder %s187, %s188
      %p200 = scmp.eq.s32.totalorder %s42, 1
      %p201 = por %p199, %p200
      %p203 = scmp.ne.s32.totalorder %s188, %s202
      %p204 = scmp.eq.s32.totalorder %s42, 0
      %p205 = por %p203, %p204
      %s207 = sadd.s32 %s206, 1
      %p210 = scmp.eq.s32.totalorder %s36, 1
      %p211 = scmp.ne.s32.totalorder %s206, %s208
      %p212 = scmp.eq.s32.totalorder %s36, 0
      %p213 = por %p211, %p212
      %p214 = scmp.ne.s32.totalorder %s206, %s208
      %p215 = scmp.eq.s32.totalorder %s41, 1
      %p216 = por %p214, %p215
      %p217 = scmp.ne.s32.totalorder %s208, %s209
      %p218 = scmp.eq.s32.totalorder %s41, 0
      %p219 = por %p217, %p218
      %p220 = scmp.ne.s32.totalorder %s208, %s209
      %p221 = scmp.eq.s32.totalorder %s42, 1
      %p222 = por %p220, %p221
      %p224 = scmp.ne.s32.totalorder %s209, %s223
      %p225 = scmp.eq.s32.totalorder %s42, 0
      %p226 = por %p224, %p225
      %s228 = sadd.s32 %s227, 1
      %p231 = scmp.eq.s32.totalorder %s36, 1
      %p232 = scmp.ne.s32.totalorder %s227, %s229
      %p233 = scmp.eq.s32.totalorder %s36, 0
      %p234 = por %p232, %p233
      %p235 = scmp.ne.s32.totalorder %s227, %s229
      %p236 = scmp.eq.s32.totalorder %s41, 1
      %p237 = por %p235, %p236
      %p238 = scmp.ne.s32.totalorder %s229, %s230
      %p239 = scmp.eq.s32.totalorder %s41, 0
      %p240 = por %p238, %p239
      %p241 = scmp.ne.s32.totalorder %s229, %s230
      %p242 = scmp.eq.s32.totalorder %s42, 1
      %p243 = por %p241, %p242
      %p245 = scmp.ne.s32.totalorder %s230, %s244
      %p246 = scmp.eq.s32.totalorder %s42, 0
      %p247 = por %p245, %p246
      %s249 = sadd.s32 %s248, 1
      %p252 = scmp.eq.s32.totalorder %s36, 1
      %p253 = scmp.ne.s32.totalorder %s248, %s250
      %p254 = scmp.eq.s32.totalorder %s36, 0
      %p255 = por %p253, %p254
      %p256 = scmp.ne.s32.totalorder %s248, %s250
      %p257 = scmp.eq.s32.totalorder %s41, 1
      %p258 = por %p256, %p257
      %p259 = scmp.ne.s32.totalorder %s250, %s251
      %p260 = scmp.eq.s32.totalorder %s41, 0
      %p261 = por %p259, %p260
      %p262 = scmp.ne.s32.totalorder %s250, %s251
      %p263 = scmp.eq.s32.totalorder %s42, 1
      %p264 = por %p262, %p263
      %p266 = scmp.ne.s32.totalorder %s251, %s265
      %p267 = scmp.eq.s32.totalorder %s42, 0
      %p268 = por %p266, %p267
      %s270 = sadd.s32 %s269, 1
      %p273 = scmp.eq.s32.totalorder %s36, 1
      %p274 = scmp.ne.s32.totalorder %s269, %s271
      %p275 = scmp.eq.s32.totalorder %s36, 0
      %p276 = por %p274, %p275
      %p277 = scmp.ne.s32.totalorder %s269, %s271
      %p278 = scmp.eq.s32.totalorder %s41, 1
      %p279 = por %p277, %p278
      %p280 = scmp.ne.s32.totalorder %s271, %s272
      %p281 = scmp.eq.s32.totalorder %s41, 0
      %p282 = por %p280, %p281
      %p283 = scmp.ne.s32.totalorder %s271, %s272
      %p284 = scmp.eq.s32.totalorder %s42, 1
      %p285 = por %p283, %p284
      %p287 = scmp.ne.s32.totalorder %s272, %s286
      %p288 = scmp.eq.s32.totalorder %s42, 0
      %p289 = por %p287, %p288
      %s291 = sadd.s32 %s290, 1
      %p294 = scmp.eq.s32.totalorder %s36, 1
      %p295 = scmp.ne.s32.totalorder %s290, %s292
      %p296 = scmp.eq.s32.totalorder %s36, 0
      %p297 = por %p295, %p296
      %p298 = scmp.ne.s32.totalorder %s290, %s292
      %p299 = scmp.eq.s32.totalorder %s41, 1
      %p300 = por %p298, %p299
      %p301 = scmp.ne.s32.totalorder %s292, %s293
      %p302 = scmp.eq.s32.totalorder %s41, 0
      %p303 = por %p301, %p302
      %p304 = scmp.ne.s32.totalorder %s292, %s293
      %p305 = scmp.eq.s32.totalorder %s42, 1
      %p306 = por %p304, %p305
      %p308 = scmp.ne.s32.totalorder %s293, %s307
      %p309 = scmp.eq.s32.totalorder %s42, 0
      %p310 = por %p308, %p309
      %s312 = sadd.s32 %s311, 1
      %p315 = scmp.eq.s32.totalorder %s36, 1
      %p316 = scmp.ne.s32.totalorder %s311, %s313
      %p317 = scmp.eq.s32.totalorder %s36, 0
      %p318 = por %p316, %p317
      %p319 = scmp.ne.s32.totalorder %s311, %s313
      %p320 = scmp.eq.s32.totalorder %s41, 1
      %p321 = por %p319, %p320
      %p322 = scmp.ne.s32.totalorder %s313, %s314
      %p323 = scmp.eq.s32.totalorder %s41, 0
      %p324 = por %p322, %p323
      %p325 = scmp.ne.s32.totalorder %s313, %s314
      %p326 = scmp.eq.s32.totalorder %s42, 1
      %p327 = por %p325, %p326
      %p329 = scmp.ne.s32.totalorder %s314, %s328
      %p330 = scmp.eq.s32.totalorder %s42, 0
      %p331 = por %p329, %p330
      %s333 = sadd.s32 %s332, 1
      %p336 = scmp.eq.s32.totalorder %s36, 1
      %p337 = scmp.ne.s32.totalorder %s332, %s334
      %p338 = scmp.eq.s32.totalorder %s36, 0
      %p339 = por %p337, %p338
      %p340 = scmp.ne.s32.totalorder %s332, %s334
      %p341 = scmp.eq.s32.totalorder %s41, 1
      %p342 = por %p340, %p341
      %p343 = scmp.ne.s32.totalorder %s334, %s335
      %p344 = scmp.eq.s32.totalorder %s41, 0
      %p345 = por %p343, %p344
      %p346 = scmp.ne.s32.totalorder %s334, %s335
      %p347 = scmp.eq.s32.totalorder %s42, 1
      %p348 = por %p346, %p347
      %p350 = scmp.ne.s32.totalorder %s335, %s349
      %p351 = scmp.eq.s32.totalorder %s42, 0
      %p352 = por %p350, %p351
      %s354 = sadd.s32 %s353, 1
      %p357 = scmp.eq.s32.totalorder %s36, 1
      %p358 = scmp.ne.s32.totalorder %s353, %s355
      %p359 = scmp.eq.s32.totalorder %s36, 0
      %p360 = por %p358, %p359
      %p361 = scmp.ne.s32.totalorder %s353, %s355
      %p362 = scmp.eq.s32.totalorder %s41, 1
      %p363 = por %p361, %p362
      %p364 = scmp.ne.s32.totalorder %s355, %s356
      %p365 = scmp.eq.s32.totalorder %s41, 0
      %p366 = por %p364, %p365
      %p367 = scmp.ne.s32.totalorder %s355, %s356
      %p368 = scmp.eq.s32.totalorder %s42, 1
      %p369 = por %p367, %p368
      %p371 = scmp.ne.s32.totalorder %s356, %s370
      %p372 = scmp.eq.s32.totalorder %s42, 0
      %p373 = por %p371, %p372
      %s375 = sadd.s32 %s374, 1
      %p378 = scmp.eq.s32.totalorder %s36, 1
      %p379 = scmp.ne.s32.totalorder %s374, %s376
      %p380 = scmp.eq.s32.totalorder %s36, 0
      %p381 = por %p379, %p380
      %p382 = scmp.ne.s32.totalorder %s374, %s376
      %p383 = scmp.eq.s32.totalorder %s41, 1
      %p384 = por %p382, %p383
      %p385 = scmp.ne.s32.totalorder %s376, %s377
      %p386 = scmp.eq.s32.totalorder %s41, 0
      %p387 = por %p385, %p386
      %p388 = scmp.ne.s32.totalorder %s376, %s377
      %p389 = scmp.eq.s32.totalorder %s42, 1
      %p390 = por %p388, %p389
      %p392 = scmp.ne.s32.totalorder %s377, %s391
      %p393 = scmp.eq.s32.totalorder %s42, 0
      %p394 = por %p392, %p393
      %s396 = sadd.s32 %s395, 1
      %p399 = scmp.eq.s32.totalorder %s36, 1
      %p400 = scmp.ne.s32.totalorder %s395, %s397
      %p401 = scmp.eq.s32.totalorder %s36, 0
      %p402 = por %p400, %p401
      %p403 = scmp.ne.s32.totalorder %s395, %s397
      %p404 = scmp.eq.s32.totalorder %s41, 1
      %p405 = por %p403, %p404
      %p406 = scmp.ne.s32.totalorder %s397, %s398
      %p407 = scmp.eq.s32.totalorder %s41, 0
      %p408 = por %p406, %p407
      %p409 = scmp.ne.s32.totalorder %s397, %s398
      %p410 = scmp.eq.s32.totalorder %s42, 1
      %p411 = por %p409, %p410
      %p413 = scmp.ne.s32.totalorder %s398, %s412
      %p414 = scmp.eq.s32.totalorder %s42, 0
      %p415 = por %p413, %p414
      %s417 = sadd.s32 %s416, 1
      %p420 = scmp.eq.s32.totalorder %s36, 1
      %p421 = scmp.ne.s32.totalorder %s416, %s418
      %p422 = scmp.eq.s32.totalorder %s36, 0
      %p423 = por %p421, %p422
      %p424 = scmp.ne.s32.totalorder %s416, %s418
      %p425 = scmp.eq.s32.totalorder %s41, 1
      %p426 = por %p424, %p425
      %p427 = scmp.ne.s32.totalorder %s418, %s419
      %p428 = scmp.eq.s32.totalorder %s41, 0
      %p429 = por %p427, %p428
      %p430 = scmp.ne.s32.totalorder %s418, %s419
      %p431 = scmp.eq.s32.totalorder %s42, 1
      %p432 = por %p430, %p431
      %p434 = scmp.ne.s32.totalorder %s419, %s433
      %p435 = scmp.eq.s32.totalorder %s42, 0
      %p436 = por %p434, %p435
      %s438 = sadd.s32 %s437, 1
      %p441 = scmp.eq.s32.totalorder %s36, 1
      %p442 = scmp.ne.s32.totalorder %s437, %s439
      %p443 = scmp.eq.s32.totalorder %s36, 0
      %p444 = por %p442, %p443
      %p445 = scmp.ne.s32.totalorder %s437, %s439
      %p446 = scmp.eq.s32.totalorder %s41, 1
      %p447 = por %p445, %p446
      %p448 = scmp.ne.s32.totalorder %s439, %s440
      %p449 = scmp.eq.s32.totalorder %s41, 0
      %p450 = por %p448, %p449
      %p451 = scmp.ne.s32.totalorder %s439, %s440
      %p452 = scmp.eq.s32.totalorder %s42, 1
      %p453 = por %p451, %p452
      %p455 = scmp.ne.s32.totalorder %s440, %s454
      %p456 = scmp.eq.s32.totalorder %s42, 0
      %p457 = por %p455, %p456
      %s459 = sadd.s32 %s458, 1
      %p462 = scmp.eq.s32.totalorder %s36, 1
      %p463 = scmp.ne.s32.totalorder %s458, %s460
      %p464 = scmp.eq.s32.totalorder %s36, 0
      %p465 = por %p463, %p464
      %p466 = scmp.ne.s32.totalorder %s458, %s460
      %p467 = scmp.eq.s32.totalorder %s41, 1
      %p468 = por %p466, %p467
      %p469 = scmp.ne.s32.totalorder %s460, %s461
      %p470 = scmp.eq.s32.totalorder %s41, 0
      %p471 = por %p469, %p470
      %p472 = scmp.ne.s32.totalorder %s460, %s461
      %p473 = scmp.eq.s32.totalorder %s42, 1
      %p474 = por %p472, %p473
      %p476 = scmp.ne.s32.totalorder %s461, %s475
      %p477 = scmp.eq.s32.totalorder %s42, 0
      %p478 = por %p476, %p477
      %s480 = sadd.s32 %s479, 1
      %p483 = scmp.eq.s32.totalorder %s36, 1
      %p484 = scmp.ne.s32.totalorder %s479, %s481
      %p485 = scmp.eq.s32.totalorder %s36, 0
      %p486 = por %p484, %p485
      %p487 = scmp.ne.s32.totalorder %s479, %s481
      %p488 = scmp.eq.s32.totalorder %s41, 1
      %p489 = por %p487, %p488
      %p490 = scmp.ne.s32.totalorder %s481, %s482
      %p491 = scmp.eq.s32.totalorder %s41, 0
      %p492 = por %p490, %p491
      %p493 = scmp.ne.s32.totalorder %s481, %s482
      %p494 = scmp.eq.s32.totalorder %s42, 1
      %p495 = por %p493, %p494
      %p497 = scmp.ne.s32.totalorder %s482, %s496
      %p498 = scmp.eq.s32.totalorder %s42, 0
      %p499 = por %p497, %p498
      %s500 = ssub.s32 %s36, %s43
      %p501 = scmp.eq.s32.totalorder %s500, 0
      %s503 = sadd.s32 %s502, 1
      %s504 = scalar_select %p501, %s502, %s503
      %p507 = pneg %p501
      %p508 = scmp.eq.s32.totalorder %s36, 1
      %p509 = por %p507, %p508
      %p510 = scmp.ne.s32.totalorder %s502, %s505
      %p511 = scmp.eq.s32.totalorder %s36, 0
      %p512 = por %p510, %p511
      %p513 = scmp.ne.s32.totalorder %s502, %s505
      %p514 = scmp.eq.s32.totalorder %s41, 1
      %p515 = por %p513, %p514
      %p516 = scmp.ne.s32.totalorder %s505, %s506
      %p517 = scmp.eq.s32.totalorder %s41, 0
      %p518 = por %p516, %p517
      %p519 = scmp.ne.s32.totalorder %s505, %s506
      %p520 = scmp.eq.s32.totalorder %s42, 1
      %p521 = por %p519, %p520
      %p523 = scmp.ne.s32.totalorder %s506, %s522
      %p524 = scmp.eq.s32.totalorder %s42, 0
      %p525 = por %p523, %p524
      %p526 = scmp.le.s32.totalorder 1, %s36
      %p527 = scmp.lt.s32.totalorder %s36, 3
      %p528 = pnand %p526, %p527
      %p529 = pneg %p528
      // Predicated region
      $region9: #{tpu_custom_call.1} parent=5 // pred_check
        _
      $region10: #{tpu_custom_call.1} parent=5 // pred_check_branch
        %531 = sbr.rel (%p528) target = $region12
      $region11: #{tpu_custom_call.1} parent=5 // pred_region
        %s532 = ssub.s32 %s36, 1
        // Predicated region
        $region13: #{tpu_custom_call.1} parent=11 // pred_check
          %p533 = pneg %p135
        $region14: #{tpu_custom_call.1} parent=11 // pred_check_branch
          %535 = sbr.rel (%p533) target = $region16
        $region15: #{tpu_custom_call.1} parent=11 // pred_region
          %s537 = ssub.s32 1024, 1024
          %538 = vsyncadd [#allocation6], %s537
          %s539 = sshll.u32 [#allocation5], 4
          %s540 = int_to_ptr.vmem [resolvable:$true] %s539
          %545 = dma.hbm_to_vmem [thread:$0]  %s3, 1024, %s540, [#allocation6], 64, 64, 4
        $region16: #{tpu_custom_call.1} parent=11 // pred_fallthru
          _
        // Predicated region
        $region17: #{tpu_custom_call.1} parent=11 // pred_check
          %p546 = pneg %p156
        $region18: #{tpu_custom_call.1} parent=11 // pred_check_branch
          %548 = sbr.rel (%p546) target = $region20
        $region19: #{tpu_custom_call.1} parent=11 // pred_region
          %s550 = ssub.s32 1024, 1024
          %551 = vsyncadd [#allocation6], %s550
          %s552 = sshll.u32 [#allocation7], 4
          %s553 = int_to_ptr.vmem [resolvable:$true] %s552
          %558 = dma.hbm_to_vmem [thread:$0]  %s4, 1024, %s553, [#allocation6], 64, 64, 4
        $region20: #{tpu_custom_call.1} parent=11 // pred_fallthru
          _
        // Predicated region
        $region21: #{tpu_custom_call.1} parent=11 // pred_check
          %p559 = pneg %p177
        $region22: #{tpu_custom_call.1} parent=11 // pred_check_branch
          %561 = sbr.rel (%p559) target = $region24
        $region23: #{tpu_custom_call.1} parent=11 // pred_region
          %s563 = ssub.s32 1024, 1024
          %564 = vsyncadd [#allocation9], %s563
          %s565 = sshll.u32 [#allocation8], 4
          %s566 = int_to_ptr.vmem [resolvable:$true] %s565
          %571 = dma.hbm_to_vmem [thread:$0]  %s5, 1024, %s566, [#allocation9], 64, 64, 4
        $region24: #{tpu_custom_call.1} parent=11 // pred_fallthru
          _
        // Predicated region
        $region25: #{tpu_custom_call.1} parent=11 // pred_check
          %p572 = pneg %p198
        $region26: #{tpu_custom_call.1} parent=11 // pred_check_branch
          %574 = sbr.rel (%p572) target = $region28
        $region27: #{tpu_custom_call.1} parent=11 // pred_region
          _
        $region28: #{tpu_custom_call.1} parent=11 // pred_fallthru
          _
        // Predicated region
        $region29: #{tpu_custom_call.1} parent=11 // pred_check
          %p575 = pneg %p219
        $region30: #{tpu_custom_call.1} parent=11 // pred_check_branch
          %577 = sbr.rel (%p575) target = $region32
        $region31: #{tpu_custom_call.1} parent=11 // pred_region
          _
        $region32: #{tpu_custom_call.1} parent=11 // pred_fallthru
          _
        // Predicated region
        $region33: #{tpu_custom_call.1} parent=11 // pred_check
          %p578 = pneg %p240
        $region34: #{tpu_custom_call.1} parent=11 // pred_check_branch
          %580 = sbr.rel (%p578) target = $region36
        $region35: #{tpu_custom_call.1} parent=11 // pred_region
          _
        $region36: #{tpu_custom_call.1} parent=11 // pred_fallthru
          _
        // Predicated region
        $region37: #{tpu_custom_call.1} parent=11 // pred_check
          %p581 = pneg %p261
        $region38: #{tpu_custom_call.1} parent=11 // pred_check_branch
          %583 = sbr.rel (%p581) target = $region40
        $region39: #{tpu_custom_call.1} parent=11 // pred_region
          %s585 = ssub.s32 1024, 1024
          %586 = vsyncadd [#allocation9], %s585
          %s587 = sshll.u32 [#allocation10], 4
          %s588 = int_to_ptr.vmem [resolvable:$true] %s587
          %593 = dma.hbm_to_vmem [thread:$0]  %s9, 1024, %s588, [#allocation9], 64, 64, 4
        $region40: #{tpu_custom_call.1} parent=11 // pred_fallthru
          _
        // Predicated region
        $region41: #{tpu_custom_call.1} parent=11 // pred_check
          %p594 = pneg %p282
        $region42: #{tpu_custom_call.1} parent=11 // pred_check_branch
          %596 = sbr.rel (%p594) target = $region44
        $region43: #{tpu_custom_call.1} parent=11 // pred_region
          _
        $region44: #{tpu_custom_call.1} parent=11 // pred_fallthru
          _
        // Predicated region
        $region45: #{tpu_custom_call.1} parent=11 // pred_check
          %p597 = pneg %p303
        $region46: #{tpu_custom_call.1} parent=11 // pred_check_branch
          %599 = sbr.rel (%p597) target = $region48
        $region47: #{tpu_custom_call.1} parent=11 // pred_region
          _
        $region48: #{tpu_custom_call.1} parent=11 // pred_fallthru
          _
        // Predicated region
        $region49: #{tpu_custom_call.1} parent=11 // pred_check
          %p600 = pneg %p324
        $region50: #{tpu_custom_call.1} parent=11 // pred_check_branch
          %602 = sbr.rel (%p600) target = $region52
        $region51: #{tpu_custom_call.1} parent=11 // pred_region
          _
        $region52: #{tpu_custom_call.1} parent=11 // pred_fallthru
          _
        // Predicated region
        $region53: #{tpu_custom_call.1} parent=11 // pred_check
          %p603 = pneg %p345
        $region54: #{tpu_custom_call.1} parent=11 // pred_check_branch
          %605 = sbr.rel (%p603) target = $region56
        $region55: #{tpu_custom_call.1} parent=11 // pred_region
          %s607 = ssub.s32 2048, 2048
          %608 = vsyncadd [#allocation12], %s607
          %s609 = sshll.u32 [#allocation11], 4
          %s610 = int_to_ptr.vmem [resolvable:$true] %s609
          %615 = dma.hbm_to_vmem [thread:$0]  %s13, 2048, %s610, [#allocation12], 128, 128, 8
        $region56: #{tpu_custom_call.1} parent=11 // pred_fallthru
          _
        // Predicated region
        $region57: #{tpu_custom_call.1} parent=11 // pred_check
          %p616 = pneg %p366
        $region58: #{tpu_custom_call.1} parent=11 // pred_check_branch
          %618 = sbr.rel (%p616) target = $region60
        $region59: #{tpu_custom_call.1} parent=11 // pred_region
          _
        $region60: #{tpu_custom_call.1} parent=11 // pred_fallthru
          _
        // Predicated region
        $region61: #{tpu_custom_call.1} parent=11 // pred_check
          %p619 = pneg %p387
        $region62: #{tpu_custom_call.1} parent=11 // pred_check_branch
          %621 = sbr.rel (%p619) target = $region64
        $region63: #{tpu_custom_call.1} parent=11 // pred_region
          %s623 = ssub.s32 2048, 2048
          %624 = vsyncadd [#allocation12], %s623
          %s625 = sshll.u32 [#allocation13], 4
          %s626 = int_to_ptr.vmem [resolvable:$true] %s625
          %631 = dma.hbm_to_vmem [thread:$0]  %s15, 2048, %s626, [#allocation12], 64, 64, 4
        $region64: #{tpu_custom_call.1} parent=11 // pred_fallthru
          _
        // Predicated region
        $region65: #{tpu_custom_call.1} parent=11 // pred_check
          %p632 = pneg %p408
        $region66: #{tpu_custom_call.1} parent=11 // pred_check_branch
          %634 = sbr.rel (%p632) target = $region68
        $region67: #{tpu_custom_call.1} parent=11 // pred_region
          _
        $region68: #{tpu_custom_call.1} parent=11 // pred_fallthru
          _
        // Predicated region
        $region69: #{tpu_custom_call.1} parent=11 // pred_check
          %p635 = pneg %p429
        $region70: #{tpu_custom_call.1} parent=11 // pred_check_branch
          %637 = sbr.rel (%p635) target = $region72
        $region71: #{tpu_custom_call.1} parent=11 // pred_region
          _
        $region72: #{tpu_custom_call.1} parent=11 // pred_fallthru
          _
        // Predicated region
        $region73: #{tpu_custom_call.1} parent=11 // pred_check
          %p638 = pneg %p450
        $region74: #{tpu_custom_call.1} parent=11 // pred_check_branch
          %640 = sbr.rel (%p638) target = $region76
        $region75: #{tpu_custom_call.1} parent=11 // pred_region
          _
        $region76: #{tpu_custom_call.1} parent=11 // pred_fallthru
          _
        // Predicated region
        $region77: #{tpu_custom_call.1} parent=11 // pred_check
          %p641 = pneg %p471
        $region78: #{tpu_custom_call.1} parent=11 // pred_check_branch
          %643 = sbr.rel (%p641) target = $region80
        $region79: #{tpu_custom_call.1} parent=11 // pred_region
          _
        $region80: #{tpu_custom_call.1} parent=11 // pred_fallthru
          _
        // Predicated region
        $region81: #{tpu_custom_call.1} parent=11 // pred_check
          %p644 = pneg %p492
        $region82: #{tpu_custom_call.1} parent=11 // pred_check_branch
          %646 = sbr.rel (%p644) target = $region84
        $region83: #{tpu_custom_call.1} parent=11 // pred_region
          _
        $region84: #{tpu_custom_call.1} parent=11 // pred_fallthru
          _
      $region12: #{tpu_custom_call.1} parent=5 // pred_fallthru
        _
      %p647 = scmp.lt.s32.totalorder %s36, 2
      // Predicated region
      $region85: #{tpu_custom_call.1} parent=5 // pred_check
        %p648 = pneg %p647
      $region86: #{tpu_custom_call.1} parent=5 // pred_check_branch
        %650 = sbr.rel (%p648) target = $region88
      $region87: #{tpu_custom_call.1} parent=5 // pred_region
        // Predicated region
        $region89: #{tpu_custom_call.1} parent=87 // pred_check
          %p651 = pneg %p56
        $region90: #{tpu_custom_call.1} parent=87 // pred_check_branch
          %653 = sbr.rel (%p651) target = $region92
        $region91: #{tpu_custom_call.1} parent=87 // pred_region
          %s654 = sand.u32 %s46, 1
          %s655 = scalar_lea.sflag [#allocation3], %s654
          %s656 = sand.u32 %s46, 1
          %s657 = smul.addr %s656, 32
          %s658 = scalar_lea.vmem [#allocation2], %s657
          %s659 = smul.u32 8, %s36
          %s661 = ssub.s32 512, 512
          %662 = vsyncadd %s655, %s661
          %s663 = smul.addr %s659, 64
          %s664 = scalar_lea.hbm %s0, %s663
          %s665 = sshll.u32 %s658, 4
          %s666 = int_to_ptr.vmem [resolvable:$true] %s665
          %671 = dma.hbm_to_vmem [thread:$0]  %s664, 512, %s666, %s655, 64, 64, 4
        $region92: #{tpu_custom_call.1} parent=87 // pred_fallthru
          _
        // Predicated region
        $region93: #{tpu_custom_call.1} parent=87 // pred_check
          %p672 = pneg %p82
        $region94: #{tpu_custom_call.1} parent=87 // pred_check_branch
          %674 = sbr.rel (%p672) target = $region96
        $region95: #{tpu_custom_call.1} parent=87 // pred_region
          %p675 = scmp.lt.s32.totalorder %s36, 1
          %s676 = scalar_select %p675, %s36, 1
          %s677 = smul.addr %s676, 4
          %s678 = scalar_lea.vmem %s1, %s677
        $region96: #{tpu_custom_call.1} parent=87 // pred_fallthru
          _
        // Predicated region
        $region97: #{tpu_custom_call.1} parent=87 // pred_check
          %p679 = pneg %p108
        $region98: #{tpu_custom_call.1} parent=87 // pred_check_branch
          %681 = sbr.rel (%p679) target = $region100
        $region99: #{tpu_custom_call.1} parent=87 // pred_region
          %s682 = smul.u32 8, %s36
          %p683 = scmp.lt.s32.totalorder %s682, 15
          %s684 = scalar_select %p683, %s682, 15
          %s685 = scalar_lea.vmem %s2, %s684
          %s686 = smul.u32 8, %s36
        $region100: #{tpu_custom_call.1} parent=87 // pred_fallthru
          _
      $region88: #{tpu_custom_call.1} parent=5 // pred_fallthru
        _
      %p687 = scmp.le.s32.totalorder 1, %s36
      %p688 = scmp.lt.s32.totalorder %s36, 3
      %p689 = pnand %p687, %p688
      %p690 = pneg %p689
      // Predicated region
      $region101: #{tpu_custom_call.1} parent=5 // pred_check
        _
      $region102: #{tpu_custom_call.1} parent=5 // pred_check_branch
        %692 = sbr.rel (%p689) target = $region104
      $region103: #{tpu_custom_call.1} parent=5 // pred_region
        %s693 = ssub.s32 %s36, 1
        %s694 = sand.u32 %s49, 1
        %s695 = scalar_lea.sflag [#allocation3], %s694
        %s696 = sand.u32 %s49, 1
        %s697 = smul.addr %s696, 32
        %s698 = scalar_lea.vmem [#allocation2], %s697
        // Predicated region
        $region105: #{tpu_custom_call.1} parent=103 // pred_check
          %p699 = pneg %p62
        $region106: #{tpu_custom_call.1} parent=103 // pred_check_branch
          %701 = sbr.rel (%p699) target = $region108
        $region107: #{tpu_custom_call.1} parent=103 // pred_region
          %702 = dma.done %s695, 512
        $region108: #{tpu_custom_call.1} parent=103 // pred_fallthru
          _
        // Predicated region
        $region109: #{tpu_custom_call.1} parent=103 // pred_check
          %p703 = pneg %p135
        $region110: #{tpu_custom_call.1} parent=103 // pred_check_branch
          %705 = sbr.rel (%p703) target = $region112
        $region111: #{tpu_custom_call.1} parent=103 // pred_region
          %706 = dma.done [#allocation6], 1024
        $region112: #{tpu_custom_call.1} parent=103 // pred_fallthru
          _
        // Predicated region
        $region113: #{tpu_custom_call.1} parent=103 // pred_check
          %p707 = pneg %p156
        $region114: #{tpu_custom_call.1} parent=103 // pred_check_branch
          %709 = sbr.rel (%p707) target = $region116
        $region115: #{tpu_custom_call.1} parent=103 // pred_region
          %710 = dma.done [#allocation6], 1024
        $region116: #{tpu_custom_call.1} parent=103 // pred_fallthru
          _
        // Predicated region
        $region117: #{tpu_custom_call.1} parent=103 // pred_check
          %p711 = pneg %p177
        $region118: #{tpu_custom_call.1} parent=103 // pred_check_branch
          %713 = sbr.rel (%p711) target = $region120
        $region119: #{tpu_custom_call.1} parent=103 // pred_region
          %714 = dma.done [#allocation9], 1024
        $region120: #{tpu_custom_call.1} parent=103 // pred_fallthru
          _
        // Predicated region
        $region121: #{tpu_custom_call.1} parent=103 // pred_check
          %p715 = pneg %p261
        $region122: #{tpu_custom_call.1} parent=103 // pred_check_branch
          %717 = sbr.rel (%p715) target = $region124
        $region123: #{tpu_custom_call.1} parent=103 // pred_region
          %718 = dma.done [#allocation9], 1024
        $region124: #{tpu_custom_call.1} parent=103 // pred_fallthru
          _
        // Predicated region
        $region125: #{tpu_custom_call.1} parent=103 // pred_check
          %p719 = pneg %p345
        $region126: #{tpu_custom_call.1} parent=103 // pred_check_branch
          %721 = sbr.rel (%p719) target = $region128
        $region127: #{tpu_custom_call.1} parent=103 // pred_region
          %722 = dma.done [#allocation12], 2048
        $region128: #{tpu_custom_call.1} parent=103 // pred_fallthru
          _
        // Predicated region
        $region129: #{tpu_custom_call.1} parent=103 // pred_check
          %p723 = pneg %p387
        $region130: #{tpu_custom_call.1} parent=103 // pred_check_branch
          %725 = sbr.rel (%p723) target = $region132
        $region131: #{tpu_custom_call.1} parent=103 // pred_region
          %726 = dma.done [#allocation12], 2048
        $region132: #{tpu_custom_call.1} parent=103 // pred_fallthru
          _
        %s727 = sand.u32 %s49, 1
        %s728 = scalar_lea.sflag [#allocation3], %s727
        %s729 = sand.u32 %s49, 1
        %s730 = smul.addr %s729, 32
        %s731 = scalar_lea.vmem [#allocation2], %s730
        %p732 = pneg %p62
        %p733 = pneg %p59
        %p734 = scmp.lt.s32.totalorder %s41, 1
        %s735 = scalar_select %p734, %s41, 1
        %s736 = smul.addr %s735, 4
        %s737 = scalar_lea.vmem %s1, %s736
        %p738 = pneg %p88
        %p739 = pneg %p85
        %s740 = smul.u32 8, %s41
        %p741 = scmp.lt.s32.totalorder %s740, 15
        %s742 = scalar_select %p741, %s740, 15
        %s743 = scalar_lea.vmem %s2, %s742
        %p744 = pneg %p114
        %p745 = pneg %p111
        %p746 = pneg %p135
        %p747 = pneg %p132
        %p748 = pneg %p156
        %p749 = pneg %p153
        %p750 = pneg %p177
        %p751 = pneg %p174
        %p752 = pneg %p198
        %p753 = pneg %p195
        %p754 = pneg %p219
        %p755 = pneg %p216
        %p756 = pneg %p240
        %p757 = pneg %p237
        %p758 = pneg %p261
        %p759 = pneg %p258
        %p760 = pneg %p282
        %p761 = pneg %p279
        %p762 = pneg %p303
        %p763 = pneg %p300
        %p764 = pneg %p324
        %p765 = pneg %p321
        %p766 = pneg %p345
        %p767 = pneg %p342
        %p768 = pneg %p366
        %p769 = pneg %p363
        %p770 = pneg %p387
        %p771 = pneg %p384
        %p772 = pneg %p408
        %p773 = pneg %p405
        %p774 = pneg %p429
        %p775 = pneg %p426
        %p776 = pneg %p450
        %p777 = pneg %p447
        %p778 = pneg %p471
        %p779 = pneg %p468
        %p780 = pneg %p492
        %p781 = pneg %p489
        %p782 = pneg %p518
        %p783 = pneg %p515
        %s784 = sand.u32 %s505, 1
        %s785 = scalar_lea.sflag [#allocation4], %s784
        %s786 = sand.u32 %s505, 1
        %s787 = smul.addr %s786, 8
        %s788 = scalar_lea.vmem [#allocation14], %s787
        %s789 = smul.u32 8, %s41
        %p790 = scmp.lt.s32.totalorder %s41, 1
        %s791 = scalar_select %p790, %s41, 1
        %s792 = smul.addr %s791, 4
        %s793 = scalar_lea.vmem %s1, %s792
        %s794 = smul.u32 8, %s41
        %p795 = scmp.lt.s32.totalorder %s794, 15
        %s796 = scalar_select %p795, %s794, 15
        %s797 = scalar_lea.vmem %s2, %s796
        %s798 = smul.u32 8, %s41
        %v800 = vld [vmem:[%s698] sm:$0xf]
        %v801 = vld [vmem:[%s698 + $0x4] sm:$0xf]
        %v802 = vld [vmem:[%s698 + $0x8] sm:$0xf]
        %v803 = vld [vmem:[%s698 + $0xc] sm:$0xf]
        %v804 = vld [vmem:[%s698 + $0x10] sm:$0xf]
        %v805 = vld [vmem:[%s698 + $0x14] sm:$0xf]
        %v806 = vld [vmem:[%s698 + $0x18] sm:$0xf]
        %v807 = vld [vmem:[%s698 + $0x1c] sm:$0xf]
        %v808 = vld [vmem:[#allocation7] sm:$0xf]
        %v809 = vld [vmem:[#allocation7 + $0x4] sm:$0xf]
        %v810 = vld [vmem:[#allocation7 + $0x8] sm:$0xf]
        %v811 = vld [vmem:[#allocation7 + $0xc] sm:$0xf]
        %v812 = vld [vmem:[#allocation7 + $0x10] sm:$0xf]
        %v813 = vld [vmem:[#allocation7 + $0x14] sm:$0xf]
        %v814 = vld [vmem:[#allocation7 + $0x18] sm:$0xf]
        %v815 = vld [vmem:[#allocation7 + $0x1c] sm:$0xf]
        %v816 = vld [vmem:[#allocation7 + $0x20] sm:$0xf]
        %v817 = vld [vmem:[#allocation7 + $0x24] sm:$0xf]
        %v818 = vld [vmem:[#allocation7 + $0x28] sm:$0xf]
        %v819 = vld [vmem:[#allocation7 + $0x2c] sm:$0xf]
        %v820 = vld [vmem:[#allocation7 + $0x30] sm:$0xf]
        %v821 = vld [vmem:[#allocation7 + $0x34] sm:$0xf]
        %v822 = vld [vmem:[#allocation7 + $0x38] sm:$0xf]
        %v823 = vld [vmem:[#allocation7 + $0x3c] sm:$0xf]
        %v824 = vld [vmem:[%s7] sm:$0x1]
        %v826 = vlaneseq
        %v827 = vshrl.u32 %v826, 7
        %v828 = vsub.s32 0, %v827
        %v829 = vrot.slane %v824, %v828
        %v839 = vunpack.c.l.b16 %v800
        %v840 = vunpack.c.l.b16 %v801
        %v841 = vunpack.c.l.b16 %v802
        %v842 = vunpack.c.l.b16 %v803
        %v843 = vunpack.c.l.b16 %v804
        %v844 = vunpack.c.l.b16 %v805
        %v845 = vunpack.c.l.b16 %v806
        %v846 = vunpack.c.l.b16 %v807
        %v847 = vpack.c.b16 %v840, %v839
        %v848 = vpack.c.b16 %v842, %v841
        %v849 = vpack.c.b16 %v844, %v843
        %v850 = vpack.c.b16 %v846, %v845
        %v871 = vunpack.c.l.b16 %v808
        %v872 = vunpack.c.l.b16 %v809
        %v873 = vunpack.c.l.b16 %v810
        %v874 = vunpack.c.l.b16 %v811
        %v875 = vunpack.c.l.b16 %v812
        %v876 = vunpack.c.l.b16 %v813
        %v877 = vunpack.c.l.b16 %v814
        %v878 = vunpack.c.l.b16 %v815
        %v879 = vunpack.c.l.b16 %v816
        %v880 = vunpack.c.l.b16 %v817
        %v881 = vunpack.c.l.b16 %v818
        %v882 = vunpack.c.l.b16 %v819
        %v883 = vunpack.c.l.b16 %v820
        %v884 = vunpack.c.l.b16 %v821
        %v885 = vunpack.c.l.b16 %v822
        %v886 = vunpack.c.l.b16 %v823
        %v887 = vpack.c.b16 %v872, %v871
        %v888 = vpack.c.b16 %v874, %v873
        %v889 = vpack.c.b16 %v876, %v875
        %v890 = vpack.c.b16 %v878, %v877
        %v891 = vpack.c.b16 %v880, %v879
        %v892 = vpack.c.b16 %v882, %v881
        %v893 = vpack.c.b16 %v884, %v883
        %v894 = vpack.c.b16 %v886, %v885
        %903 = vmatprep.subr.bf16.mxu0 0
        %904 = vmatpush1.bf16.msra.mxu0 %v887
        %905 = vmatprep.subr.bf16.mxu0 0
        %906 = vmatpush1.bf16.msra.mxu0 %v888
        %907 = vmatprep.subr.bf16.mxu0 0
        %908 = vmatpush1.bf16.msra.mxu0 %v889
        %909 = vmatprep.subr.bf16.mxu0 0
        %910 = vmatpush1.bf16.msra.mxu0 %v890
        %911 = vmatprep.subr.bf16.mxu0 0
        %912 = vmatpush1.bf16.msra.mxu0 %v891
        %913 = vmatprep.subr.bf16.mxu0 0
        %914 = vmatpush1.bf16.msra.mxu0 %v892
        %915 = vmatprep.subr.bf16.mxu0 0
        %916 = vmatpush1.bf16.msra.mxu0 %v893
        %917 = vmatprep.subr.bf16.mxu0 0
        %918 = vmatpush1.bf16.msra.mxu0 %v894
        %919 = vmatprep.subr.bf16.mxu0 0
        %920 = vmatpush1.bf16.msra.mxu0 0
        %921 = vmatprep.subr.bf16.mxu0 0
        %922 = vmatpush1.bf16.msra.mxu0 0
        %923 = vmatprep.subr.bf16.mxu0 0
        %924 = vmatpush1.bf16.msra.mxu0 0
        %925 = vmatprep.subr.bf16.mxu0 0
        %926 = vmatpush1.bf16.msra.mxu0 0
        %927 = vmatprep.subr.bf16.mxu0 0
        %928 = vmatpush1.bf16.msra.mxu0 0
        %929 = vmatprep.subr.bf16.mxu0 0
        %930 = vmatpush1.bf16.msra.mxu0 0
        %931 = vmatprep.subr.bf16.mxu0 0
        %932 = vmatpush1.bf16.msra.mxu0 0
        %933 = vmatprep.subr.bf16.mxu0 0
        %934 = vmatpush1.bf16.msra.mxu0 0
        %935 = vmatprep.mubr.bf16.mxu0 0
        %936 = vmatmul.mubr.bf16.gmra.mrb[0].mxu0 %v847
        %v937 = vpop.f32.mrb[0].mxu0
        %v938 = vadd.f32 %v829, %v937
        %v939 = vpop.f32.mrb[0].mxu0
        %v940 = vpop.f32.mrb[0].mxu0
        %v941 = vadd.f32 %v829, %v940
        %v942 = vpop.f32.mrb[0].mxu0
        %943 = vmatprep.mubr.bf16.mxu0 0
        %944 = vmatmul.mubr.bf16.gmra.mrb[0].mxu0 %v848
        %v945 = vpop.f32.mrb[0].mxu0
        %v946 = vadd.f32 %v829, %v945
        %v947 = vpop.f32.mrb[0].mxu0
        %v948 = vpop.f32.mrb[0].mxu0
        %v949 = vadd.f32 %v829, %v948
        %v950 = vpop.f32.mrb[0].mxu0
        %951 = vmatprep.mubr.bf16.mxu0 0
        %952 = vmatmul.mubr.bf16.gmra.mrb[0].mxu0 %v849
        %v953 = vpop.f32.mrb[0].mxu0
        %v954 = vadd.f32 %v829, %v953
        %v955 = vpop.f32.mrb[0].mxu0
        %v956 = vpop.f32.mrb[0].mxu0
        %v957 = vadd.f32 %v829, %v956
        %v958 = vpop.f32.mrb[0].mxu0
        %959 = vmatprep.mubr.bf16.mxu0 0
        %960 = vmatmul.mubr.bf16.gmra.mrb[0].mxu0 %v850
        %v961 = vpop.f32.mrb[0].mxu0
        %v962 = vadd.f32 %v829, %v961
        %v963 = vpop.f32.mrb[0].mxu0
        %v964 = vpop.f32.mrb[0].mxu0
        %v965 = vadd.f32 %v829, %v964
        %v966 = vpop.f32.mrb[0].mxu0
        %967 = vdwg.mxu0
        %v968 = vld [vmem:[#allocation8] sm:$0xf]
        %v969 = vld [vmem:[#allocation8 + $0x4] sm:$0xf]
        %v970 = vld [vmem:[#allocation8 + $0x8] sm:$0xf]
        %v971 = vld [vmem:[#allocation8 + $0xc] sm:$0xf]
        %v972 = vld [vmem:[#allocation8 + $0x10] sm:$0xf]
        %v973 = vld [vmem:[#allocation8 + $0x14] sm:$0xf]
        %v974 = vld [vmem:[#allocation8 + $0x18] sm:$0xf]
        %v975 = vld [vmem:[#allocation8 + $0x1c] sm:$0xf]
        %v976 = vld [vmem:[#allocation8 + $0x20] sm:$0xf]
        %v977 = vld [vmem:[#allocation8 + $0x24] sm:$0xf]
        %v978 = vld [vmem:[#allocation8 + $0x28] sm:$0xf]
        %v979 = vld [vmem:[#allocation8 + $0x2c] sm:$0xf]
        %v980 = vld [vmem:[#allocation8 + $0x30] sm:$0xf]
        %v981 = vld [vmem:[#allocation8 + $0x34] sm:$0xf]
        %v982 = vld [vmem:[#allocation8 + $0x38] sm:$0xf]
        %v983 = vld [vmem:[#allocation8 + $0x3c] sm:$0xf]
        %v984 = vld [vmem:[%s8] sm:$0x1]
        %v986 = vlaneseq
        %v987 = vshrl.u32 %v986, 7
        %v988 = vsub.s32 0, %v987
        %v989 = vrot.slane %v984, %v988
        %v1007 = vunpack.c.l.b16 %v968
        %v1008 = vunpack.c.l.b16 %v969
        %v1009 = vunpack.c.l.b16 %v970
        %v1010 = vunpack.c.l.b16 %v971
        %v1011 = vunpack.c.l.b16 %v972
        %v1012 = vunpack.c.l.b16 %v973
        %v1013 = vunpack.c.l.b16 %v974
        %v1014 = vunpack.c.l.b16 %v975
        %v1015 = vunpack.c.l.b16 %v976
        %v1016 = vunpack.c.l.b16 %v977
        %v1017 = vunpack.c.l.b16 %v978
        %v1018 = vunpack.c.l.b16 %v979
        %v1019 = vunpack.c.l.b16 %v980
        %v1020 = vunpack.c.l.b16 %v981
        %v1021 = vunpack.c.l.b16 %v982
        %v1022 = vunpack.c.l.b16 %v983
        %v1023 = vpack.c.b16 %v1008, %v1007
        %v1024 = vpack.c.b16 %v1010, %v1009
        %v1025 = vpack.c.b16 %v1012, %v1011
        %v1026 = vpack.c.b16 %v1014, %v1013
        %v1027 = vpack.c.b16 %v1016, %v1015
        %v1028 = vpack.c.b16 %v1018, %v1017
        %v1029 = vpack.c.b16 %v1020, %v1019
        %v1030 = vpack.c.b16 %v1022, %v1021
        %1039 = vmatprep.subr.bf16.mxu0 0
        %1040 = vmatpush1.bf16.msra.mxu0 %v1023
        %1041 = vmatprep.subr.bf16.mxu0 0
        %1042 = vmatpush1.bf16.msra.mxu0 %v1024
        %1043 = vmatprep.subr.bf16.mxu0 0
        %1044 = vmatpush1.bf16.msra.mxu0 %v1025
        %1045 = vmatprep.subr.bf16.mxu0 0
        %1046 = vmatpush1.bf16.msra.mxu0 %v1026
        %1047 = vmatprep.subr.bf16.mxu0 0
        %1048 = vmatpush1.bf16.msra.mxu0 %v1027
        %1049 = vmatprep.subr.bf16.mxu0 0
        %1050 = vmatpush1.bf16.msra.mxu0 %v1028
        %1051 = vmatprep.subr.bf16.mxu0 0
        %1052 = vmatpush1.bf16.msra.mxu0 %v1029
        %1053 = vmatprep.subr.bf16.mxu0 0
        %1054 = vmatpush1.bf16.msra.mxu0 %v1030
        %1055 = vmatprep.subr.bf16.mxu0 0
        %1056 = vmatpush1.bf16.msra.mxu0 0
        %1057 = vmatprep.subr.bf16.mxu0 0
        %1058 = vmatpush1.bf16.msra.mxu0 0
        %1059 = vmatprep.subr.bf16.mxu0 0
        %1060 = vmatpush1.bf16.msra.mxu0 0
        %1061 = vmatprep.subr.bf16.mxu0 0
        %1062 = vmatpush1.bf16.msra.mxu0 0
        %1063 = vmatprep.subr.bf16.mxu0 0
        %1064 = vmatpush1.bf16.msra.mxu0 0
        %1065 = vmatprep.subr.bf16.mxu0 0
        %1066 = vmatpush1.bf16.msra.mxu0 0
        %1067 = vmatprep.subr.bf16.mxu0 0
        %1068 = vmatpush1.bf16.msra.mxu0 0
        %1069 = vmatprep.subr.bf16.mxu0 0
        %1070 = vmatpush1.bf16.msra.mxu0 0
        %1071 = vmatprep.mubr.bf16.mxu0 0
        %1072 = vmatmul.mubr.bf16.gmra.mrb[0].mxu0 %v847
        %v1073 = vpop.f32.mrb[0].mxu0
        %v1074 = vadd.f32 %v989, %v1073
        %v1075 = vpop.f32.mrb[0].mxu0
        %v1076 = vpop.f32.mrb[0].mxu0
        %v1077 = vadd.f32 %v989, %v1076
        %v1078 = vpop.f32.mrb[0].mxu0
        %1079 = vmatprep.mubr.bf16.mxu0 0
        %1080 = vmatmul.mubr.bf16.gmra.mrb[0].mxu0 %v848
        %v1081 = vpop.f32.mrb[0].mxu0
        %v1082 = vadd.f32 %v989, %v1081
        %v1083 = vpop.f32.mrb[0].mxu0
        %v1084 = vpop.f32.mrb[0].mxu0
        %v1085 = vadd.f32 %v989, %v1084
        %v1086 = vpop.f32.mrb[0].mxu0
        %1087 = vmatprep.mubr.bf16.mxu0 0
        %1088 = vmatmul.mubr.bf16.gmra.mrb[0].mxu0 %v849
        %v1089 = vpop.f32.mrb[0].mxu0
        %v1090 = vadd.f32 %v989, %v1089
        %v1091 = vpop.f32.mrb[0].mxu0
        %v1092 = vpop.f32.mrb[0].mxu0
        %v1093 = vadd.f32 %v989, %v1092
        %v1094 = vpop.f32.mrb[0].mxu0
        %1095 = vmatprep.mubr.bf16.mxu0 0
        %1096 = vmatmul.mubr.bf16.gmra.mrb[0].mxu0 %v850
        %v1097 = vpop.f32.mrb[0].mxu0
        %v1098 = vadd.f32 %v989, %v1097
        %v1099 = vpop.f32.mrb[0].mxu0
        %v1100 = vpop.f32.mrb[0].mxu0
        %v1101 = vadd.f32 %v989, %v1100
        %v1102 = vpop.f32.mrb[0].mxu0
        %1103 = vdwg.mxu0
        %v1104 = vpack.c.bf16 %v938, %v938
        %v1105 = vpack.c.bf16 %v941, %v941
        %v1106 = vpack.c.bf16 %v946, %v946
        %v1107 = vpack.c.bf16 %v949, %v949
        %v1108 = vpack.c.bf16 %v954, %v954
        %v1109 = vpack.c.bf16 %v957, %v957
        %v1110 = vpack.c.bf16 %v962, %v962
        %v1111 = vpack.c.bf16 %v965, %v965
        %v1112 = vpack.c.bf16 %v1074, %v1074
        %v1113 = vpack.c.bf16 %v1077, %v1077
        %v1114 = vpack.c.bf16 %v1082, %v1082
        %v1115 = vpack.c.bf16 %v1085, %v1085
        %v1116 = vpack.c.bf16 %v1090, %v1090
        %v1117 = vpack.c.bf16 %v1093, %v1093
        %v1118 = vpack.c.bf16 %v1098, %v1098
        %v1119 = vpack.c.bf16 %v1101, %v1101
        %v1120 = vld [vmem:[%s793] sm:$0xf]
        %v1121 = vld [vmem:[#allocation5] sm:$0xf]
        %v1122 = vld [vmem:[#allocation5 + $0x4] sm:$0xf]
        %v1123 = vld [vmem:[#allocation5 + $0x8] sm:$0xf]
        %v1124 = vld [vmem:[#allocation5 + $0xc] sm:$0xf]
        %v1125 = vld [vmem:[#allocation5 + $0x10] sm:$0xf]
        %v1126 = vld [vmem:[#allocation5 + $0x14] sm:$0xf]
        %v1127 = vld [vmem:[#allocation5 + $0x18] sm:$0xf]
        %v1128 = vld [vmem:[#allocation5 + $0x1c] sm:$0xf]
        %v1129 = vld [vmem:[#allocation5 + $0x20] sm:$0xf]
        %v1130 = vld [vmem:[#allocation5 + $0x24] sm:$0xf]
        %v1131 = vld [vmem:[#allocation5 + $0x28] sm:$0xf]
        %v1132 = vld [vmem:[#allocation5 + $0x2c] sm:$0xf]
        %v1133 = vld [vmem:[#allocation5 + $0x30] sm:$0xf]
        %v1134 = vld [vmem:[#allocation5 + $0x34] sm:$0xf]
        %v1135 = vld [vmem:[#allocation5 + $0x38] sm:$0xf]
        %v1136 = vld [vmem:[#allocation5 + $0x3c] sm:$0xf]
        %v1137 = vld [vmem:[%s6] sm:$0x1]
        %v1139 = vlaneseq
        %v1140 = vshrl.u32 %v1139, 7
        %v1141 = vsub.s32 0, %v1140
        %v1142 = vrot.slane %v1137, %v1141
        %v1160 = vunpack.c.l.b16 %v1121
        %v1161 = vunpack.c.l.b16 %v1122
        %v1162 = vunpack.c.l.b16 %v1123
        %v1163 = vunpack.c.l.b16 %v1124
        %v1164 = vunpack.c.l.b16 %v1125
        %v1165 = vunpack.c.l.b16 %v1126
        %v1166 = vunpack.c.l.b16 %v1127
        %v1167 = vunpack.c.l.b16 %v1128
        %v1168 = vunpack.c.l.b16 %v1129
        %v1169 = vunpack.c.l.b16 %v1130
        %v1170 = vunpack.c.l.b16 %v1131
        %v1171 = vunpack.c.l.b16 %v1132
        %v1172 = vunpack.c.l.b16 %v1133
        %v1173 = vunpack.c.l.b16 %v1134
        %v1174 = vunpack.c.l.b16 %v1135
        %v1175 = vunpack.c.l.b16 %v1136
        %v1176 = vpack.c.b16 %v1161, %v1160
        %v1177 = vpack.c.b16 %v1163, %v1162
        %v1178 = vpack.c.b16 %v1165, %v1164
        %v1179 = vpack.c.b16 %v1167, %v1166
        %v1180 = vpack.c.b16 %v1169, %v1168
        %v1181 = vpack.c.b16 %v1171, %v1170
        %v1182 = vpack.c.b16 %v1173, %v1172
        %v1183 = vpack.c.b16 %v1175, %v1174
        %1192 = vmatprep.subr.bf16.mxu0 0
        %1193 = vmatpush1.bf16.msra.mxu0 %v1176
        %1194 = vmatprep.subr.bf16.mxu0 0
        %1195 = vmatpush1.bf16.msra.mxu0 %v1177
        %1196 = vmatprep.subr.bf16.mxu0 0
        %1197 = vmatpush1.bf16.msra.mxu0 %v1178
        %1198 = vmatprep.subr.bf16.mxu0 0
        %1199 = vmatpush1.bf16.msra.mxu0 %v1179
        %1200 = vmatprep.subr.bf16.mxu0 0
        %1201 = vmatpush1.bf16.msra.mxu0 %v1180
        %1202 = vmatprep.subr.bf16.mxu0 0
        %1203 = vmatpush1.bf16.msra.mxu0 %v1181
        %1204 = vmatprep.subr.bf16.mxu0 0
        %1205 = vmatpush1.bf16.msra.mxu0 %v1182
        %1206 = vmatprep.subr.bf16.mxu0 0
        %1207 = vmatpush1.bf16.msra.mxu0 %v1183
        %1208 = vmatprep.subr.bf16.mxu0 0
        %1209 = vmatpush1.bf16.msra.mxu0 0
        %1210 = vmatprep.subr.bf16.mxu0 0
        %1211 = vmatpush1.bf16.msra.mxu0 0
        %1212 = vmatprep.subr.bf16.mxu0 0
        %1213 = vmatpush1.bf16.msra.mxu0 0
        %1214 = vmatprep.subr.bf16.mxu0 0
        %1215 = vmatpush1.bf16.msra.mxu0 0
        %1216 = vmatprep.subr.bf16.mxu0 0
        %1217 = vmatpush1.bf16.msra.mxu0 0
        %1218 = vmatprep.subr.bf16.mxu0 0
        %1219 = vmatpush1.bf16.msra.mxu0 0
        %1220 = vmatprep.subr.bf16.mxu0 0
        %1221 = vmatpush1.bf16.msra.mxu0 0
        %1222 = vmatprep.subr.bf16.mxu0 0
        %1223 = vmatpush1.bf16.msra.mxu0 0
        %1224 = vmatprep.mubr.bf16.mxu0 0
        %1225 = vmatmul.mubr.bf16.gmra.mrb[0].mxu0 %v1120
        %v1226 = vpop.f32.mrb[0].mxu0
        %v1227 = vadd.f32 %v1142, %v1226
        %v1228 = vpop.f32.mrb[0].mxu0
        %v1229 = vpop.f32.mrb[0].mxu0
        %v1230 = vpop.f32.mrb[0].mxu0
        %1231 = vdwg.mxu0
        %v1232 = vpack.c.bf16 %v1227, %v1227
        %v1235 = vunpack.c.l.s4 1966171168
        %v1236 = vunpack.c.0.s8 %v1235
        %v1237 = vlaneseq
        %v1238 = vshrl.u32 %v1237, 7
        %v1239 = vsub.s32 %v1236, %v1238
        %v1240 = vrot.slane %v1232, %v1239
        %v1241 = vcombine.high %v1240, %v1240
        %v1243 = vunpack.c.l.s4 1966171168
        %v1244 = vunpack.c.0.s8 %v1243
        %v1245 = vlaneseq
        %v1246 = vshrl.u32 %v1245, 7
        %v1247 = vsub.s32 %v1244, %v1246
        %v1248 = vrot.slane %v1240, %v1247
        %v1250 = vunpack.c.l.s4 1966171168
        %v1251 = vunpack.c.0.s8 %v1250
        %v1252 = vlaneseq
        %v1253 = vshrl.u32 %v1252, 7
        %v1254 = vsub.s32 %v1251, %v1253
        %v1255 = vrot.slane %v1241, %v1254
        %v1256 = vcombine.high %v1248, %v1248
        %v1257 = vcombine.high %v1255, %v1255
        %v1258 = vunpack.i.l.s16 %v1248
        %v1259 = vunpack.i.h.s16 %v1248
        %v1260 = vunpack.i.l.s16 %v1255
        %v1261 = vunpack.i.h.s16 %v1255
        %v1262 = vunpack.i.l.s16 %v1256
        %v1263 = vunpack.i.h.s16 %v1256
        %v1264 = vunpack.i.l.s16 %v1257
        %v1265 = vunpack.i.h.s16 %v1257
        %v1266 = vld [vmem:[%s797] sm:$0x1]
        %v1267 = vld [vmem:[%s797 + $0x1] sm:$0x1]
        %v1268 = vld [vmem:[%s797 + $0x2] sm:$0x1]
        %v1269 = vld [vmem:[%s797 + $0x3] sm:$0x1]
        %v1270 = vld [vmem:[%s797 + $0x4] sm:$0x1]
        %v1271 = vld [vmem:[%s797 + $0x5] sm:$0x1]
        %v1272 = vld [vmem:[%s797 + $0x6] sm:$0x1]
        %v1273 = vld [vmem:[%s797 + $0x7] sm:$0x1]
        %v1274 = vpack.i.b16 %v1258, %v1258
        %v1275 = vlaneseq
        %v1276 = vshrl.u32 %v1275, 7
        %v1277 = vsub.s32 0, %v1276
        %v1278 = vrot.slane %v1274, %v1277
        %1280 = vmatprep.subr.bf16.mxu0 0
        %1281 = vmatpush1.bf16.xpose.msra.mxu0 %v1104
        %1282 = vmatprep.subr.bf16.mxu0 0
        %1283 = vmatpush1.bf16.xpose.msra.mxu0 0
        %1284 = vmatprep.subr.bf16.mxu0 0
        %1285 = vmatpush1.bf16.xpose.msra.mxu0 0
        %1286 = vmatprep.subr.bf16.mxu0 0
        %1287 = vmatpush1.bf16.xpose.msra.mxu0 0
        %1288 = vmatprep.subr.bf16.mxu0 0
        %1289 = vmatpush1.bf16.xpose.msra.mxu0 0
        %1290 = vmatprep.subr.bf16.mxu0 0
        %1291 = vmatpush1.bf16.xpose.msra.mxu0 0
        %1292 = vmatprep.subr.bf16.mxu0 0
        %1293 = vmatpush1.bf16.xpose.msra.mxu0 0
        %1294 = vmatprep.subr.bf16.mxu0 0
        %1295 = vmatpush1.bf16.xpose.msra.mxu0 0
        %1296 = vmatprep.subr.bf16.mxu0 0
        %1297 = vmatpush1.bf16.xpose.msra.mxu0 0
        %1298 = vmatprep.subr.bf16.mxu0 0
        %1299 = vmatpush1.bf16.xpose.msra.mxu0 0
        %1300 = vmatprep.subr.bf16.mxu0 0
        %1301 = vmatpush1.bf16.xpose.msra.mxu0 0
        %1302 = vmatprep.subr.bf16.mxu0 0
        %1303 = vmatpush1.bf16.xpose.msra.mxu0 0
        %1304 = vmatprep.subr.bf16.mxu0 0
        %1305 = vmatpush1.bf16.xpose.msra.mxu0 0
        %1306 = vmatprep.subr.bf16.mxu0 0
        %1307 = vmatpush1.bf16.xpose.msra.mxu0 0
        %1308 = vmatprep.subr.bf16.mxu0 0
        %1309 = vmatpush1.bf16.xpose.msra.mxu0 0
        %1310 = vmatprep.subr.bf16.mxu0 0
        %1311 = vmatpush1.bf16.xpose.msra.mxu0 0
        %1312 = vmatprep.mubr.bf16.mxu0 0
        %1313 = vmatmul.mubr.bf16.gmra.mrb[0].mxu0 %v1278
        %v1314 = vpop.f32.mrb[0].mxu0
        %v1315 = vadd.f32 %v1266, %v1314
        %v1316 = vpop.f32.mrb[0].mxu0
        %v1317 = vpop.f32.mrb[0].mxu0
        %v1318 = vpop.f32.mrb[0].mxu0
        %1319 = vdwg.mxu0
        %v1320 = vpack.i.b16 %v1259, %v1259
        %v1321 = vlaneseq
        %v1322 = vshrl.u32 %v1321, 7
        %v1323 = vsub.s32 0, %v1322
        %v1324 = vrot.slane %v1320, %v1323
        %1326 = vmatprep.subr.bf16.mxu0 0
        %1327 = vmatpush1.bf16.xpose.msra.mxu0 %v1105
        %1328 = vmatprep.subr.bf16.mxu0 0
        %1329 = vmatpush1.bf16.xpose.msra.mxu0 0
        %1330 = vmatprep.subr.bf16.mxu0 0
        %1331 = vmatpush1.bf16.xpose.msra.mxu0 0
        %1332 = vmatprep.subr.bf16.mxu0 0
        %1333 = vmatpush1.bf16.xpose.msra.mxu0 0
        %1334 = vmatprep.subr.bf16.mxu0 0
        %1335 = vmatpush1.bf16.xpose.msra.mxu0 0
        %1336 = vmatprep.subr.bf16.mxu0 0
        %1337 = vmatpush1.bf16.xpose.msra.mxu0 0
        %1338 = vmatprep.subr.bf16.mxu0 0
        %1339 = vmatpush1.bf16.xpose.msra.mxu0 0
        %1340 = vmatprep.subr.bf16.mxu0 0
        %1341 = vmatpush1.bf16.xpose.msra.mxu0 0
        %1342 = vmatprep.subr.bf16.mxu0 0
        %1343 = vmatpush1.bf16.xpose.msra.mxu0 0
        %1344 = vmatprep.subr.bf16.mxu0 0
        %1345 = vmatpush1.bf16.xpose.msra.mxu0 0
        %1346 = vmatprep.subr.bf16.mxu0 0
        %1347 = vmatpush1.bf16.xpose.msra.mxu0 0
        %1348 = vmatprep.subr.bf16.mxu0 0
        %1349 = vmatpush1.bf16.xpose.msra.mxu0 0
        %1350 = vmatprep.subr.bf16.mxu0 0
        %1351 = vmatpush1.bf16.xpose.msra.mxu0 0
        %1352 = vmatprep.subr.bf16.mxu0 0
        %1353 = vmatpush1.bf16.xpose.msra.mxu0 0
        %1354 = vmatprep.subr.bf16.mxu0 0
        %1355 = vmatpush1.bf16.xpose.msra.mxu0 0
        %1356 = vmatprep.subr.bf16.mxu0 0
        %1357 = vmatpush1.bf16.xpose.msra.mxu0 0
        %1358 = vmatprep.mubr.bf16.mxu0 0
        %1359 = vmatmul.mubr.bf16.gmra.mrb[0].mxu0 %v1324
        %v1360 = vpop.f32.mrb[0].mxu0
        %v1361 = vadd.f32 %v1267, %v1360
        %v1362 = vpop.f32.mrb[0].mxu0
        %v1363 = vpop.f32.mrb[0].mxu0
        %v1364 = vpop.f32.mrb[0].mxu0
        %1365 = vdwg.mxu0
        %v1366 = vpack.i.b16 %v1260, %v1260
        %v1367 = vlaneseq
        %v1368 = vshrl.u32 %v1367, 7
        %v1369 = vsub.s32 0, %v1368
        %v1370 = vrot.slane %v1366, %v1369
        %1372 = vmatprep.subr.bf16.mxu0 0
        %1373 = vmatpush1.bf16.xpose.msra.mxu0 %v1106
        %1374 = vmatprep.subr.bf16.mxu0 0
        %1375 = vmatpush1.bf16.xpose.msra.mxu0 0
        %1376 = vmatprep.subr.bf16.mxu0 0
        %1377 = vmatpush1.bf16.xpose.msra.mxu0 0
        %1378 = vmatprep.subr.bf16.mxu0 0
        %1379 = vmatpush1.bf16.xpose.msra.mxu0 0
        %1380 = vmatprep.subr.bf16.mxu0 0
        %1381 = vmatpush1.bf16.xpose.msra.mxu0 0
        %1382 = vmatprep.subr.bf16.mxu0 0
        %1383 = vmatpush1.bf16.xpose.msra.mxu0 0
        %1384 = vmatprep.subr.bf16.mxu0 0
        %1385 = vmatpush1.bf16.xpose.msra.mxu0 0
        %1386 = vmatprep.subr.bf16.mxu0 0
        %1387 = vmatpush1.bf16.xpose.msra.mxu0 0
        %1388 = vmatprep.subr.bf16.mxu0 0
        %1389 = vmatpush1.bf16.xpose.msra.mxu0 0
        %1390 = vmatprep.subr.bf16.mxu0 0
        %1391 = vmatpush1.bf16.xpose.msra.mxu0 0
        %1392 = vmatprep.subr.bf16.mxu0 0
        %1393 = vmatpush1.bf16.xpose.msra.mxu0 0
        %1394 = vmatprep.subr.bf16.mxu0 0
        %1395 = vmatpush1.bf16.xpose.msra.mxu0 0
        %1396 = vmatprep.subr.bf16.mxu0 0
        %1397 = vmatpush1.bf16.xpose.msra.mxu0 0
        %1398 = vmatprep.subr.bf16.mxu0 0
        %1399 = vmatpush1.bf16.xpose.msra.mxu0 0
        %1400 = vmatprep.subr.bf16.mxu0 0
        %1401 = vmatpush1.bf16.xpose.msra.mxu0 0
        %1402 = vmatprep.subr.bf16.mxu0 0
        %1403 = vmatpush1.bf16.xpose.msra.mxu0 0
        %1404 = vmatprep.mubr.bf16.mxu0 0
        %1405 = vmatmul.mubr.bf16.gmra.mrb[0].mxu0 %v1370
        %v1406 = vpop.f32.mrb[0].mxu0
        %v1407 = vadd.f32 %v1268, %v1406
        %v1408 = vpop.f32.mrb[0].mxu0
        %v1409 = vpop.f32.mrb[0].mxu0
        %v1410 = vpop.f32.mrb[0].mxu0
        %1411 = vdwg.mxu0
        %v1412 = vpack.i.b16 %v1261, %v1261
        %v1413 = vlaneseq
        %v1414 = vshrl.u32 %v1413, 7
        %v1415 = vsub.s32 0, %v1414
        %v1416 = vrot.slane %v1412, %v1415
        %1418 = vmatprep.subr.bf16.mxu0 0
        %1419 = vmatpush1.bf16.xpose.msra.mxu0 %v1107
        %1420 = vmatprep.subr.bf16.mxu0 0
        %1421 = vmatpush1.bf16.xpose.msra.mxu0 0
        %1422 = vmatprep.subr.bf16.mxu0 0
        %1423 = vmatpush1.bf16.xpose.msra.mxu0 0
        %1424 = vmatprep.subr.bf16.mxu0 0
        %1425 = vmatpush1.bf16.xpose.msra.mxu0 0
        %1426 = vmatprep.subr.bf16.mxu0 0
        %1427 = vmatpush1.bf16.xpose.msra.mxu0 0
        %1428 = vmatprep.subr.bf16.mxu0 0
        %1429 = vmatpush1.bf16.xpose.msra.mxu0 0
        %1430 = vmatprep.subr.bf16.mxu0 0
        %1431 = vmatpush1.bf16.xpose.msra.mxu0 0
        %1432 = vmatprep.subr.bf16.mxu0 0
        %1433 = vmatpush1.bf16.xpose.msra.mxu0 0
        %1434 = vmatprep.subr.bf16.mxu0 0
        %1435 = vmatpush1.bf16.xpose.msra.mxu0 0
        %1436 = vmatprep.subr.bf16.mxu0 0
        %1437 = vmatpush1.bf16.xpose.msra.mxu0 0
        %1438 = vmatprep.subr.bf16.mxu0 0
        %1439 = vmatpush1.bf16.xpose.msra.mxu0 0
        %1440 = vmatprep.subr.bf16.mxu0 0
        %1441 = vmatpush1.bf16.xpose.msra.mxu0 0
        %1442 = vmatprep.subr.bf16.mxu0 0
        %1443 = vmatpush1.bf16.xpose.msra.mxu0 0
        %1444 = vmatprep.subr.bf16.mxu0 0
        %1445 = vmatpush1.bf16.xpose.msra.mxu0 0
        %1446 = vmatprep.subr.bf16.mxu0 0
        %1447 = vmatpush1.bf16.xpose.msra.mxu0 0
        %1448 = vmatprep.subr.bf16.mxu0 0
        %1449 = vmatpush1.bf16.xpose.msra.mxu0 0
        %1450 = vmatprep.mubr.bf16.mxu0 0
        %1451 = vmatmul.mubr.bf16.gmra.mrb[0].mxu0 %v1416
        %v1452 = vpop.f32.mrb[0].mxu0
        %v1453 = vadd.f32 %v1269, %v1452
        %v1454 = vpop.f32.mrb[0].mxu0
        %v1455 = vpop.f32.mrb[0].mxu0
        %v1456 = vpop.f32.mrb[0].mxu0
        %1457 = vdwg.mxu0
        %v1458 = vpack.i.b16 %v1262, %v1262
        %v1459 = vlaneseq
        %v1460 = vshrl.u32 %v1459, 7
        %v1461 = vsub.s32 0, %v1460
        %v1462 = vrot.slane %v1458, %v1461
        %1464 = vmatprep.subr.bf16.mxu0 0
        %1465 = vmatpush1.bf16.xpose.msra.mxu0 %v1108
        %1466 = vmatprep.subr.bf16.mxu0 0
        %1467 = vmatpush1.bf16.xpose.msra.mxu0 0
        %1468 = vmatprep.subr.bf16.mxu0 0
        %1469 = vmatpush1.bf16.xpose.msra.mxu0 0
        %1470 = vmatprep.subr.bf16.mxu0 0
        %1471 = vmatpush1.bf16.xpose.msra.mxu0 0
        %1472 = vmatprep.subr.bf16.mxu0 0
        %1473 = vmatpush1.bf16.xpose.msra.mxu0 0
        %1474 = vmatprep.subr.bf16.mxu0 0
        %1475 = vmatpush1.bf16.xpose.msra.mxu0 0
        %1476 = vmatprep.subr.bf16.mxu0 0
        %1477 = vmatpush1.bf16.xpose.msra.mxu0 0
        %1478 = vmatprep.subr.bf16.mxu0 0
        %1479 = vmatpush1.bf16.xpose.msra.mxu0 0
        %1480 = vmatprep.subr.bf16.mxu0 0
        %1481 = vmatpush1.bf16.xpose.msra.mxu0 0
        %1482 = vmatprep.subr.bf16.mxu0 0
        %1483 = vmatpush1.bf16.xpose.msra.mxu0 0
        %1484 = vmatprep.subr.bf16.mxu0 0
        %1485 = vmatpush1.bf16.xpose.msra.mxu0 0
        %1486 = vmatprep.subr.bf16.mxu0 0
        %1487 = vmatpush1.bf16.xpose.msra.mxu0 0
        %1488 = vmatprep.subr.bf16.mxu0 0
        %1489 = vmatpush1.bf16.xpose.msra.mxu0 0
        %1490 = vmatprep.subr.bf16.mxu0 0
        %1491 = vmatpush1.bf16.xpose.msra.mxu0 0
        %1492 = vmatprep.subr.bf16.mxu0 0
        %1493 = vmatpush1.bf16.xpose.msra.mxu0 0
        %1494 = vmatprep.subr.bf16.mxu0 0
        %1495 = vmatpush1.bf16.xpose.msra.mxu0 0
        %1496 = vmatprep.mubr.bf16.mxu0 0
        %1497 = vmatmul.mubr.bf16.gmra.mrb[0].mxu0 %v1462
        %v1498 = vpop.f32.mrb[0].mxu0
        %v1499 = vadd.f32 %v1270, %v1498
        %v1500 = vpop.f32.mrb[0].mxu0
        %v1501 = vpop.f32.mrb[0].mxu0
        %v1502 = vpop.f32.mrb[0].mxu0
        %1503 = vdwg.mxu0
        %v1504 = vpack.i.b16 %v1263, %v1263
        %v1505 = vlaneseq
        %v1506 = vshrl.u32 %v1505, 7
        %v1507 = vsub.s32 0, %v1506
        %v1508 = vrot.slane %v1504, %v1507
        %1510 = vmatprep.subr.bf16.mxu0 0
        %1511 = vmatpush1.bf16.xpose.msra.mxu0 %v1109
        %1512 = vmatprep.subr.bf16.mxu0 0
        %1513 = vmatpush1.bf16.xpose.msra.mxu0 0
        %1514 = vmatprep.subr.bf16.mxu0 0
        %1515 = vmatpush1.bf16.xpose.msra.mxu0 0
        %1516 = vmatprep.subr.bf16.mxu0 0
        %1517 = vmatpush1.bf16.xpose.msra.mxu0 0
        %1518 = vmatprep.subr.bf16.mxu0 0
        %1519 = vmatpush1.bf16.xpose.msra.mxu0 0
        %1520 = vmatprep.subr.bf16.mxu0 0
        %1521 = vmatpush1.bf16.xpose.msra.mxu0 0
        %1522 = vmatprep.subr.bf16.mxu0 0
        %1523 = vmatpush1.bf16.xpose.msra.mxu0 0
        %1524 = vmatprep.subr.bf16.mxu0 0
        %1525 = vmatpush1.bf16.xpose.msra.mxu0 0
        %1526 = vmatprep.subr.bf16.mxu0 0
        %1527 = vmatpush1.bf16.xpose.msra.mxu0 0
        %1528 = vmatprep.subr.bf16.mxu0 0
        %1529 = vmatpush1.bf16.xpose.msra.mxu0 0
        %1530 = vmatprep.subr.bf16.mxu0 0
        %1531 = vmatpush1.bf16.xpose.msra.mxu0 0
        %1532 = vmatprep.subr.bf16.mxu0 0
        %1533 = vmatpush1.bf16.xpose.msra.mxu0 0
        %1534 = vmatprep.subr.bf16.mxu0 0
        %1535 = vmatpush1.bf16.xpose.msra.mxu0 0
        %1536 = vmatprep.subr.bf16.mxu0 0
        %1537 = vmatpush1.bf16.xpose.msra.mxu0 0
        %1538 = vmatprep.subr.bf16.mxu0 0
        %1539 = vmatpush1.bf16.xpose.msra.mxu0 0
        %1540 = vmatprep.subr.bf16.mxu0 0
        %1541 = vmatpush1.bf16.xpose.msra.mxu0 0
        %1542 = vmatprep.mubr.bf16.mxu0 0
        %1543 = vmatmul.mubr.bf16.gmra.mrb[0].mxu0 %v1508
        %v1544 = vpop.f32.mrb[0].mxu0
        %v1545 = vadd.f32 %v1271, %v1544
        %v1546 = vpop.f32.mrb[0].mxu0
        %v1547 = vpop.f32.mrb[0].mxu0
        %v1548 = vpop.f32.mrb[0].mxu0
        %1549 = vdwg.mxu0
        %v1550 = vpack.i.b16 %v1264, %v1264
        %v1551 = vlaneseq
        %v1552 = vshrl.u32 %v1551, 7
        %v1553 = vsub.s32 0, %v1552
        %v1554 = vrot.slane %v1550, %v1553
        %1556 = vmatprep.subr.bf16.mxu0 0
        %1557 = vmatpush1.bf16.xpose.msra.mxu0 %v1110
        %1558 = vmatprep.subr.bf16.mxu0 0
        %1559 = vmatpush1.bf16.xpose.msra.mxu0 0
        %1560 = vmatprep.subr.bf16.mxu0 0
        %1561 = vmatpush1.bf16.xpose.msra.mxu0 0
        %1562 = vmatprep.subr.bf16.mxu0 0
        %1563 = vmatpush1.bf16.xpose.msra.mxu0 0
        %1564 = vmatprep.subr.bf16.mxu0 0
        %1565 = vmatpush1.bf16.xpose.msra.mxu0 0
        %1566 = vmatprep.subr.bf16.mxu0 0
        %1567 = vmatpush1.bf16.xpose.msra.mxu0 0
        %1568 = vmatprep.subr.bf16.mxu0 0
        %1569 = vmatpush1.bf16.xpose.msra.mxu0 0
        %1570 = vmatprep.subr.bf16.mxu0 0
        %1571 = vmatpush1.bf16.xpose.msra.mxu0 0
        %1572 = vmatprep.subr.bf16.mxu0 0
        %1573 = vmatpush1.bf16.xpose.msra.mxu0 0
        %1574 = vmatprep.subr.bf16.mxu0 0
        %1575 = vmatpush1.bf16.xpose.msra.mxu0 0
        %1576 = vmatprep.subr.bf16.mxu0 0
        %1577 = vmatpush1.bf16.xpose.msra.mxu0 0
        %1578 = vmatprep.subr.bf16.mxu0 0
        %1579 = vmatpush1.bf16.xpose.msra.mxu0 0
        %1580 = vmatprep.subr.bf16.mxu0 0
        %1581 = vmatpush1.bf16.xpose.msra.mxu0 0
        %1582 = vmatprep.subr.bf16.mxu0 0
        %1583 = vmatpush1.bf16.xpose.msra.mxu0 0
        %1584 = vmatprep.subr.bf16.mxu0 0
        %1585 = vmatpush1.bf16.xpose.msra.mxu0 0
        %1586 = vmatprep.subr.bf16.mxu0 0
        %1587 = vmatpush1.bf16.xpose.msra.mxu0 0
        %1588 = vmatprep.mubr.bf16.mxu0 0
        %1589 = vmatmul.mubr.bf16.gmra.mrb[0].mxu0 %v1554
        %v1590 = vpop.f32.mrb[0].mxu0
        %v1591 = vadd.f32 %v1272, %v1590
        %v1592 = vpop.f32.mrb[0].mxu0
        %v1593 = vpop.f32.mrb[0].mxu0
        %v1594 = vpop.f32.mrb[0].mxu0
        %1595 = vdwg.mxu0
        %v1596 = vpack.i.b16 %v1265, %v1265
        %v1597 = vlaneseq
        %v1598 = vshrl.u32 %v1597, 7
        %v1599 = vsub.s32 0, %v1598
        %v1600 = vrot.slane %v1596, %v1599
        %1602 = vmatprep.subr.bf16.mxu0 0
        %1603 = vmatpush1.bf16.xpose.msra.mxu0 %v1111
        %1604 = vmatprep.subr.bf16.mxu0 0
        %1605 = vmatpush1.bf16.xpose.msra.mxu0 0
        %1606 = vmatprep.subr.bf16.mxu0 0
        %1607 = vmatpush1.bf16.xpose.msra.mxu0 0
        %1608 = vmatprep.subr.bf16.mxu0 0
        %1609 = vmatpush1.bf16.xpose.msra.mxu0 0
        %1610 = vmatprep.subr.bf16.mxu0 0
        %1611 = vmatpush1.bf16.xpose.msra.mxu0 0
        %1612 = vmatprep.subr.bf16.mxu0 0
        %1613 = vmatpush1.bf16.xpose.msra.mxu0 0
        %1614 = vmatprep.subr.bf16.mxu0 0
        %1615 = vmatpush1.bf16.xpose.msra.mxu0 0
        %1616 = vmatprep.subr.bf16.mxu0 0
        %1617 = vmatpush1.bf16.xpose.msra.mxu0 0
        %1618 = vmatprep.subr.bf16.mxu0 0
        %1619 = vmatpush1.bf16.xpose.msra.mxu0 0
        %1620 = vmatprep.subr.bf16.mxu0 0
        %1621 = vmatpush1.bf16.xpose.msra.mxu0 0
        %1622 = vmatprep.subr.bf16.mxu0 0
        %1623 = vmatpush1.bf16.xpose.msra.mxu0 0
        %1624 = vmatprep.subr.bf16.mxu0 0
        %1625 = vmatpush1.bf16.xpose.msra.mxu0 0
        %1626 = vmatprep.subr.bf16.mxu0 0
        %1627 = vmatpush1.bf16.xpose.msra.mxu0 0
        %1628 = vmatprep.subr.bf16.mxu0 0
        %1629 = vmatpush1.bf16.xpose.msra.mxu0 0
        %1630 = vmatprep.subr.bf16.mxu0 0
        %1631 = vmatpush1.bf16.xpose.msra.mxu0 0
        %1632 = vmatprep.subr.bf16.mxu0 0
        %1633 = vmatpush1.bf16.xpose.msra.mxu0 0
        %1634 = vmatprep.mubr.bf16.mxu0 0
        %1635 = vmatmul.mubr.bf16.gmra.mrb[0].mxu0 %v1600
        %v1636 = vpop.f32.mrb[0].mxu0
        %v1637 = vadd.f32 %v1273, %v1636
        %v1638 = vpop.f32.mrb[0].mxu0
        %v1639 = vpop.f32.mrb[0].mxu0
        %v1640 = vpop.f32.mrb[0].mxu0
        %1641 = vdwg.mxu0
        %vm1642 = vcmask 57344
        %v1643 = vsel %vm1642, %v1315, -inf
        %1644 = vmax.xlane.f32.xlu0 %v1643
        %v1645 = vpop.xlane.xlu0 %1644
        %v1646 = vsel %vm1642, %v1361, -inf
        %1647 = vmax.xlane.f32.xlu0 %v1646
        %v1648 = vpop.xlane.xlu0 %1647
        %v1649 = vsel %vm1642, %v1407, -inf
        %1650 = vmax.xlane.f32.xlu0 %v1649
        %v1651 = vpop.xlane.xlu0 %1650
        %v1652 = vsel %vm1642, %v1453, -inf
        %1653 = vmax.xlane.f32.xlu0 %v1652
        %v1654 = vpop.xlane.xlu0 %1653
        %v1655 = vsel %vm1642, %v1499, -inf
        %1656 = vmax.xlane.f32.xlu0 %v1655
        %v1657 = vpop.xlane.xlu0 %1656
        %v1658 = vsel %vm1642, %v1545, -inf
        %1659 = vmax.xlane.f32.xlu0 %v1658
        %v1660 = vpop.xlane.xlu0 %1659
        %v1661 = vsel %vm1642, %v1591, -inf
        %1662 = vmax.xlane.f32.xlu0 %v1661
        %v1663 = vpop.xlane.xlu0 %1662
        %v1664 = vsel %vm1642, %v1637, -inf
        %1665 = vmax.xlane.f32.xlu0 %v1664
        %v1666 = vpop.xlane.xlu0 %1665
        %v1667 = vsub.f32 %v1315, %v1645
        %v1668 = vsub.f32 %v1361, %v1648
        %v1669 = vsub.f32 %v1407, %v1651
        %v1670 = vsub.f32 %v1453, %v1654
        %v1671 = vsub.f32 %v1499, %v1657
        %v1672 = vsub.f32 %v1545, %v1660
        %v1673 = vsub.f32 %v1591, %v1663
        %v1674 = vsub.f32 %v1637, %v1666
        %v1675 = vmul.f32 %v1667, 1.442695
        %v1676 = vpow.pop %v1675
        %v1677 = vmul.f32 %v1668, 1.442695
        %v1678 = vpow.pop %v1677
        %v1679 = vmul.f32 %v1669, 1.442695
        %v1680 = vpow.pop %v1679
        %v1681 = vmul.f32 %v1670, 1.442695
        %v1682 = vpow.pop %v1681
        %v1683 = vmul.f32 %v1671, 1.442695
        %v1684 = vpow.pop %v1683
        %v1685 = vmul.f32 %v1672, 1.442695
        %v1686 = vpow.pop %v1685
        %v1687 = vmul.f32 %v1673, 1.442695
        %v1688 = vpow.pop %v1687
        %v1689 = vmul.f32 %v1674, 1.442695
        %v1690 = vpow.pop %v1689
        %v1691 = vsel %vm1642, %v1676, 0.0
        %1692 = vadd.xlane.f32.xlu0 %v1691
        %v1693 = vpop.xlane.xlu0 %1692
        %v1694 = vsel %vm1642, %v1678, 0.0
        %1695 = vadd.xlane.f32.xlu0 %v1694
        %v1696 = vpop.xlane.xlu0 %1695
        %v1697 = vsel %vm1642, %v1680, 0.0
        %1698 = vadd.xlane.f32.xlu0 %v1697
        %v1699 = vpop.xlane.xlu0 %1698
        %v1700 = vsel %vm1642, %v1682, 0.0
        %1701 = vadd.xlane.f32.xlu0 %v1700
        %v1702 = vpop.xlane.xlu0 %1701
        %v1703 = vsel %vm1642, %v1684, 0.0
        %1704 = vadd.xlane.f32.xlu0 %v1703
        %v1705 = vpop.xlane.xlu0 %1704
        %v1706 = vsel %vm1642, %v1686, 0.0
        %1707 = vadd.xlane.f32.xlu0 %v1706
        %v1708 = vpop.xlane.xlu0 %1707
        %v1709 = vsel %vm1642, %v1688, 0.0
        %1710 = vadd.xlane.f32.xlu0 %v1709
        %v1711 = vpop.xlane.xlu0 %1710
        %v1712 = vsel %vm1642, %v1690, 0.0
        %1713 = vadd.xlane.f32.xlu0 %v1712
        %v1714 = vpop.xlane.xlu0 %1713
        %v1715 = vrcp.pop %v1693
        %v1716 = vrcp.pop %v1696
        %v1717 = vrcp.pop %v1699
        %v1718 = vrcp.pop %v1702
        %v1719 = vrcp.pop %v1705
        %v1720 = vrcp.pop %v1708
        %v1721 = vrcp.pop %v1711
        %v1722 = vrcp.pop %v1714
        %v1723 = vmul.f32 %v1676, %v1715
        %v1724 = vmul.f32 %v1678, %v1716
        %v1725 = vmul.f32 %v1680, %v1717
        %v1726 = vmul.f32 %v1682, %v1718
        %v1727 = vmul.f32 %v1684, %v1719
        %v1728 = vmul.f32 %v1686, %v1720
        %v1729 = vmul.f32 %v1688, %v1721
        %v1730 = vmul.f32 %v1690, %v1722
        %v1731 = vpack.c.bf16 %v1723, %v1723
        %v1732 = vpack.c.bf16 %v1724, %v1724
        %v1733 = vpack.c.bf16 %v1725, %v1725
        %v1734 = vpack.c.bf16 %v1726, %v1726
        %v1735 = vpack.c.bf16 %v1727, %v1727
        %v1736 = vpack.c.bf16 %v1728, %v1728
        %v1737 = vpack.c.bf16 %v1729, %v1729
        %v1738 = vpack.c.bf16 %v1730, %v1730
        %vm1739 = vcmask 64512
        %v1741 = vsel %vm1739, %v1731, 0
        %vm1743 = vcmask 1043456
        %v1745 = vsel %vm1743, %v1112, 0
        %1747 = vmatprep.subr.bf16.mxu0 0
        %1748 = vmatpush1.bf16.msra.mxu0 %v1745
        %1749 = vmatprep.subr.bf16.mxu0 0
        %1750 = vmatpush1.bf16.msra.mxu0 0
        %1751 = vmatprep.subr.bf16.mxu0 0
        %1752 = vmatpush1.bf16.msra.mxu0 0
        %1753 = vmatprep.subr.bf16.mxu0 0
        %1754 = vmatpush1.bf16.msra.mxu0 0
        %1755 = vmatprep.subr.bf16.mxu0 0
        %1756 = vmatpush1.bf16.msra.mxu0 0
        %1757 = vmatprep.subr.bf16.mxu0 0
        %1758 = vmatpush1.bf16.msra.mxu0 0
        %1759 = vmatprep.subr.bf16.mxu0 0
        %1760 = vmatpush1.bf16.msra.mxu0 0
        %1761 = vmatprep.subr.bf16.mxu0 0
        %1762 = vmatpush1.bf16.msra.mxu0 0
        %1763 = vmatprep.subr.bf16.mxu0 0
        %1764 = vmatpush1.bf16.msra.mxu0 0
        %1765 = vmatprep.subr.bf16.mxu0 0
        %1766 = vmatpush1.bf16.msra.mxu0 0
        %1767 = vmatprep.subr.bf16.mxu0 0
        %1768 = vmatpush1.bf16.msra.mxu0 0
        %1769 = vmatprep.subr.bf16.mxu0 0
        %1770 = vmatpush1.bf16.msra.mxu0 0
        %1771 = vmatprep.subr.bf16.mxu0 0
        %1772 = vmatpush1.bf16.msra.mxu0 0
        %1773 = vmatprep.subr.bf16.mxu0 0
        %1774 = vmatpush1.bf16.msra.mxu0 0
        %1775 = vmatprep.subr.bf16.mxu0 0
        %1776 = vmatpush1.bf16.msra.mxu0 0
        %1777 = vmatprep.subr.bf16.mxu0 0
        %1778 = vmatpush1.bf16.msra.mxu0 0
        %1779 = vmatprep.mubr.bf16.mxu0 0
        %1780 = vmatmul.mubr.bf16.gmra.mrb[0].mxu0 %v1741
        %v1781 = vpop.f32.mrb[0].mxu0
        %v1782 = vadd.f32 0.0, %v1781
        %v1783 = vpop.f32.mrb[0].mxu0
        %v1784 = vpop.f32.mrb[0].mxu0
        %v1785 = vpop.f32.mrb[0].mxu0
        %1786 = vdwg.mxu0
        %v1788 = vsel %vm1739, %v1732, 0
        %v1791 = vsel %vm1743, %v1113, 0
        %1793 = vmatprep.subr.bf16.mxu0 0
        %1794 = vmatpush1.bf16.msra.mxu0 %v1791
        %1795 = vmatprep.subr.bf16.mxu0 0
        %1796 = vmatpush1.bf16.msra.mxu0 0
        %1797 = vmatprep.subr.bf16.mxu0 0
        %1798 = vmatpush1.bf16.msra.mxu0 0
        %1799 = vmatprep.subr.bf16.mxu0 0
        %1800 = vmatpush1.bf16.msra.mxu0 0
        %1801 = vmatprep.subr.bf16.mxu0 0
        %1802 = vmatpush1.bf16.msra.mxu0 0
        %1803 = vmatprep.subr.bf16.mxu0 0
        %1804 = vmatpush1.bf16.msra.mxu0 0
        %1805 = vmatprep.subr.bf16.mxu0 0
        %1806 = vmatpush1.bf16.msra.mxu0 0
        %1807 = vmatprep.subr.bf16.mxu0 0
        %1808 = vmatpush1.bf16.msra.mxu0 0
        %1809 = vmatprep.subr.bf16.mxu0 0
        %1810 = vmatpush1.bf16.msra.mxu0 0
        %1811 = vmatprep.subr.bf16.mxu0 0
        %1812 = vmatpush1.bf16.msra.mxu0 0
        %1813 = vmatprep.subr.bf16.mxu0 0
        %1814 = vmatpush1.bf16.msra.mxu0 0
        %1815 = vmatprep.subr.bf16.mxu0 0
        %1816 = vmatpush1.bf16.msra.mxu0 0
        %1817 = vmatprep.subr.bf16.mxu0 0
        %1818 = vmatpush1.bf16.msra.mxu0 0
        %1819 = vmatprep.subr.bf16.mxu0 0
        %1820 = vmatpush1.bf16.msra.mxu0 0
        %1821 = vmatprep.subr.bf16.mxu0 0
        %1822 = vmatpush1.bf16.msra.mxu0 0
        %1823 = vmatprep.subr.bf16.mxu0 0
        %1824 = vmatpush1.bf16.msra.mxu0 0
        %1825 = vmatprep.mubr.bf16.mxu0 0
        %1826 = vmatmul.mubr.bf16.gmra.mrb[0].mxu0 %v1788
        %v1827 = vpop.f32.mrb[0].mxu0
        %v1828 = vadd.f32 0.0, %v1827
        %v1829 = vpop.f32.mrb[0].mxu0
        %v1830 = vpop.f32.mrb[0].mxu0
        %v1831 = vpop.f32.mrb[0].mxu0
        %1832 = vdwg.mxu0
        %v1834 = vsel %vm1739, %v1733, 0
        %v1837 = vsel %vm1743, %v1114, 0
        %1839 = vmatprep.subr.bf16.mxu0 0
        %1840 = vmatpush1.bf16.msra.mxu0 %v1837
        %1841 = vmatprep.subr.bf16.mxu0 0
        %1842 = vmatpush1.bf16.msra.mxu0 0
        %1843 = vmatprep.subr.bf16.mxu0 0
        %1844 = vmatpush1.bf16.msra.mxu0 0
        %1845 = vmatprep.subr.bf16.mxu0 0
        %1846 = vmatpush1.bf16.msra.mxu0 0
        %1847 = vmatprep.subr.bf16.mxu0 0
        %1848 = vmatpush1.bf16.msra.mxu0 0
        %1849 = vmatprep.subr.bf16.mxu0 0
        %1850 = vmatpush1.bf16.msra.mxu0 0
        %1851 = vmatprep.subr.bf16.mxu0 0
        %1852 = vmatpush1.bf16.msra.mxu0 0
        %1853 = vmatprep.subr.bf16.mxu0 0
        %1854 = vmatpush1.bf16.msra.mxu0 0
        %1855 = vmatprep.subr.bf16.mxu0 0
        %1856 = vmatpush1.bf16.msra.mxu0 0
        %1857 = vmatprep.subr.bf16.mxu0 0
        %1858 = vmatpush1.bf16.msra.mxu0 0
        %1859 = vmatprep.subr.bf16.mxu0 0
        %1860 = vmatpush1.bf16.msra.mxu0 0
        %1861 = vmatprep.subr.bf16.mxu0 0
        %1862 = vmatpush1.bf16.msra.mxu0 0
        %1863 = vmatprep.subr.bf16.mxu0 0
        %1864 = vmatpush1.bf16.msra.mxu0 0
        %1865 = vmatprep.subr.bf16.mxu0 0
        %1866 = vmatpush1.bf16.msra.mxu0 0
        %1867 = vmatprep.subr.bf16.mxu0 0
        %1868 = vmatpush1.bf16.msra.mxu0 0
        %1869 = vmatprep.subr.bf16.mxu0 0
        %1870 = vmatpush1.bf16.msra.mxu0 0
        %1871 = vmatprep.mubr.bf16.mxu0 0
        %1872 = vmatmul.mubr.bf16.gmra.mrb[0].mxu0 %v1834
        %v1873 = vpop.f32.mrb[0].mxu0
        %v1874 = vadd.f32 0.0, %v1873
        %v1875 = vpop.f32.mrb[0].mxu0
        %v1876 = vpop.f32.mrb[0].mxu0
        %v1877 = vpop.f32.mrb[0].mxu0
        %1878 = vdwg.mxu0
        %v1880 = vsel %vm1739, %v1734, 0
        %v1883 = vsel %vm1743, %v1115, 0
        %1885 = vmatprep.subr.bf16.mxu0 0
        %1886 = vmatpush1.bf16.msra.mxu0 %v1883
        %1887 = vmatprep.subr.bf16.mxu0 0
        %1888 = vmatpush1.bf16.msra.mxu0 0
        %1889 = vmatprep.subr.bf16.mxu0 0
        %1890 = vmatpush1.bf16.msra.mxu0 0
        %1891 = vmatprep.subr.bf16.mxu0 0
        %1892 = vmatpush1.bf16.msra.mxu0 0
        %1893 = vmatprep.subr.bf16.mxu0 0
        %1894 = vmatpush1.bf16.msra.mxu0 0
        %1895 = vmatprep.subr.bf16.mxu0 0
        %1896 = vmatpush1.bf16.msra.mxu0 0
        %1897 = vmatprep.subr.bf16.mxu0 0
        %1898 = vmatpush1.bf16.msra.mxu0 0
        %1899 = vmatprep.subr.bf16.mxu0 0
        %1900 = vmatpush1.bf16.msra.mxu0 0
        %1901 = vmatprep.subr.bf16.mxu0 0
        %1902 = vmatpush1.bf16.msra.mxu0 0
        %1903 = vmatprep.subr.bf16.mxu0 0
        %1904 = vmatpush1.bf16.msra.mxu0 0
        %1905 = vmatprep.subr.bf16.mxu0 0
        %1906 = vmatpush1.bf16.msra.mxu0 0
        %1907 = vmatprep.subr.bf16.mxu0 0
        %1908 = vmatpush1.bf16.msra.mxu0 0
        %1909 = vmatprep.subr.bf16.mxu0 0
        %1910 = vmatpush1.bf16.msra.mxu0 0
        %1911 = vmatprep.subr.bf16.mxu0 0
        %1912 = vmatpush1.bf16.msra.mxu0 0
        %1913 = vmatprep.subr.bf16.mxu0 0
        %1914 = vmatpush1.bf16.msra.mxu0 0
        %1915 = vmatprep.subr.bf16.mxu0 0
        %1916 = vmatpush1.bf16.msra.mxu0 0
        %1917 = vmatprep.mubr.bf16.mxu0 0
        %1918 = vmatmul.mubr.bf16.gmra.mrb[0].mxu0 %v1880
        %v1919 = vpop.f32.mrb[0].mxu0
        %v1920 = vadd.f32 0.0, %v1919
        %v1921 = vpop.f32.mrb[0].mxu0
        %v1922 = vpop.f32.mrb[0].mxu0
        %v1923 = vpop.f32.mrb[0].mxu0
        %1924 = vdwg.mxu0
        %v1926 = vsel %vm1739, %v1735, 0
        %v1929 = vsel %vm1743, %v1116, 0
        %1931 = vmatprep.subr.bf16.mxu0 0
        %1932 = vmatpush1.bf16.msra.mxu0 %v1929
        %1933 = vmatprep.subr.bf16.mxu0 0
        %1934 = vmatpush1.bf16.msra.mxu0 0
        %1935 = vmatprep.subr.bf16.mxu0 0
        %1936 = vmatpush1.bf16.msra.mxu0 0
        %1937 = vmatprep.subr.bf16.mxu0 0
        %1938 = vmatpush1.bf16.msra.mxu0 0
        %1939 = vmatprep.subr.bf16.mxu0 0
        %1940 = vmatpush1.bf16.msra.mxu0 0
        %1941 = vmatprep.subr.bf16.mxu0 0
        %1942 = vmatpush1.bf16.msra.mxu0 0
        %1943 = vmatprep.subr.bf16.mxu0 0
        %1944 = vmatpush1.bf16.msra.mxu0 0
        %1945 = vmatprep.subr.bf16.mxu0 0
        %1946 = vmatpush1.bf16.msra.mxu0 0
        %1947 = vmatprep.subr.bf16.mxu0 0
        %1948 = vmatpush1.bf16.msra.mxu0 0
        %1949 = vmatprep.subr.bf16.mxu0 0
        %1950 = vmatpush1.bf16.msra.mxu0 0
        %1951 = vmatprep.subr.bf16.mxu0 0
        %1952 = vmatpush1.bf16.msra.mxu0 0
        %1953 = vmatprep.subr.bf16.mxu0 0
        %1954 = vmatpush1.bf16.msra.mxu0 0
        %1955 = vmatprep.subr.bf16.mxu0 0
        %1956 = vmatpush1.bf16.msra.mxu0 0
        %1957 = vmatprep.subr.bf16.mxu0 0
        %1958 = vmatpush1.bf16.msra.mxu0 0
        %1959 = vmatprep.subr.bf16.mxu0 0
        %1960 = vmatpush1.bf16.msra.mxu0 0
        %1961 = vmatprep.subr.bf16.mxu0 0
        %1962 = vmatpush1.bf16.msra.mxu0 0
        %1963 = vmatprep.mubr.bf16.mxu0 0
        %1964 = vmatmul.mubr.bf16.gmra.mrb[0].mxu0 %v1926
        %v1965 = vpop.f32.mrb[0].mxu0
        %v1966 = vadd.f32 0.0, %v1965
        %v1967 = vpop.f32.mrb[0].mxu0
        %v1968 = vpop.f32.mrb[0].mxu0
        %v1969 = vpop.f32.mrb[0].mxu0
        %1970 = vdwg.mxu0
        %v1972 = vsel %vm1739, %v1736, 0
        %v1975 = vsel %vm1743, %v1117, 0
        %1977 = vmatprep.subr.bf16.mxu0 0
        %1978 = vmatpush1.bf16.msra.mxu0 %v1975
        %1979 = vmatprep.subr.bf16.mxu0 0
        %1980 = vmatpush1.bf16.msra.mxu0 0
        %1981 = vmatprep.subr.bf16.mxu0 0
        %1982 = vmatpush1.bf16.msra.mxu0 0
        %1983 = vmatprep.subr.bf16.mxu0 0
        %1984 = vmatpush1.bf16.msra.mxu0 0
        %1985 = vmatprep.subr.bf16.mxu0 0
        %1986 = vmatpush1.bf16.msra.mxu0 0
        %1987 = vmatprep.subr.bf16.mxu0 0
        %1988 = vmatpush1.bf16.msra.mxu0 0
        %1989 = vmatprep.subr.bf16.mxu0 0
        %1990 = vmatpush1.bf16.msra.mxu0 0
        %1991 = vmatprep.subr.bf16.mxu0 0
        %1992 = vmatpush1.bf16.msra.mxu0 0
        %1993 = vmatprep.subr.bf16.mxu0 0
        %1994 = vmatpush1.bf16.msra.mxu0 0
        %1995 = vmatprep.subr.bf16.mxu0 0
        %1996 = vmatpush1.bf16.msra.mxu0 0
        %1997 = vmatprep.subr.bf16.mxu0 0
        %1998 = vmatpush1.bf16.msra.mxu0 0
        %1999 = vmatprep.subr.bf16.mxu0 0
        %2000 = vmatpush1.bf16.msra.mxu0 0
        %2001 = vmatprep.subr.bf16.mxu0 0
        %2002 = vmatpush1.bf16.msra.mxu0 0
        %2003 = vmatprep.subr.bf16.mxu0 0
        %2004 = vmatpush1.bf16.msra.mxu0 0
        %2005 = vmatprep.subr.bf16.mxu0 0
        %2006 = vmatpush1.bf16.msra.mxu0 0
        %2007 = vmatprep.subr.bf16.mxu0 0
        %2008 = vmatpush1.bf16.msra.mxu0 0
        %2009 = vmatprep.mubr.bf16.mxu0 0
        %2010 = vmatmul.mubr.bf16.gmra.mrb[0].mxu0 %v1972
        %v2011 = vpop.f32.mrb[0].mxu0
        %v2012 = vadd.f32 0.0, %v2011
        %v2013 = vpop.f32.mrb[0].mxu0
        %v2014 = vpop.f32.mrb[0].mxu0
        %v2015 = vpop.f32.mrb[0].mxu0
        %2016 = vdwg.mxu0
        %v2018 = vsel %vm1739, %v1737, 0
        %v2021 = vsel %vm1743, %v1118, 0
        %2023 = vmatprep.subr.bf16.mxu0 0
        %2024 = vmatpush1.bf16.msra.mxu0 %v2021
        %2025 = vmatprep.subr.bf16.mxu0 0
        %2026 = vmatpush1.bf16.msra.mxu0 0
        %2027 = vmatprep.subr.bf16.mxu0 0
        %2028 = vmatpush1.bf16.msra.mxu0 0
        %2029 = vmatprep.subr.bf16.mxu0 0
        %2030 = vmatpush1.bf16.msra.mxu0 0
        %2031 = vmatprep.subr.bf16.mxu0 0
        %2032 = vmatpush1.bf16.msra.mxu0 0
        %2033 = vmatprep.subr.bf16.mxu0 0
        %2034 = vmatpush1.bf16.msra.mxu0 0
        %2035 = vmatprep.subr.bf16.mxu0 0
        %2036 = vmatpush1.bf16.msra.mxu0 0
        %2037 = vmatprep.subr.bf16.mxu0 0
        %2038 = vmatpush1.bf16.msra.mxu0 0
        %2039 = vmatprep.subr.bf16.mxu0 0
        %2040 = vmatpush1.bf16.msra.mxu0 0
        %2041 = vmatprep.subr.bf16.mxu0 0
        %2042 = vmatpush1.bf16.msra.mxu0 0
        %2043 = vmatprep.subr.bf16.mxu0 0
        %2044 = vmatpush1.bf16.msra.mxu0 0
        %2045 = vmatprep.subr.bf16.mxu0 0
        %2046 = vmatpush1.bf16.msra.mxu0 0
        %2047 = vmatprep.subr.bf16.mxu0 0
        %2048 = vmatpush1.bf16.msra.mxu0 0
        %2049 = vmatprep.subr.bf16.mxu0 0
        %2050 = vmatpush1.bf16.msra.mxu0 0
        %2051 = vmatprep.subr.bf16.mxu0 0
        %2052 = vmatpush1.bf16.msra.mxu0 0
        %2053 = vmatprep.subr.bf16.mxu0 0
        %2054 = vmatpush1.bf16.msra.mxu0 0
        %2055 = vmatprep.mubr.bf16.mxu0 0
        %2056 = vmatmul.mubr.bf16.gmra.mrb[0].mxu0 %v2018
        %v2057 = vpop.f32.mrb[0].mxu0
        %v2058 = vadd.f32 0.0, %v2057
        %v2059 = vpop.f32.mrb[0].mxu0
        %v2060 = vpop.f32.mrb[0].mxu0
        %v2061 = vpop.f32.mrb[0].mxu0
        %2062 = vdwg.mxu0
        %v2064 = vsel %vm1739, %v1738, 0
        %v2067 = vsel %vm1743, %v1119, 0
        %2069 = vmatprep.subr.bf16.mxu0 0
        %2070 = vmatpush1.bf16.msra.mxu0 %v2067
        %2071 = vmatprep.subr.bf16.mxu0 0
        %2072 = vmatpush1.bf16.msra.mxu0 0
        %2073 = vmatprep.subr.bf16.mxu0 0
        %2074 = vmatpush1.bf16.msra.mxu0 0
        %2075 = vmatprep.subr.bf16.mxu0 0
        %2076 = vmatpush1.bf16.msra.mxu0 0
        %2077 = vmatprep.subr.bf16.mxu0 0
        %2078 = vmatpush1.bf16.msra.mxu0 0
        %2079 = vmatprep.subr.bf16.mxu0 0
        %2080 = vmatpush1.bf16.msra.mxu0 0
        %2081 = vmatprep.subr.bf16.mxu0 0
        %2082 = vmatpush1.bf16.msra.mxu0 0
        %2083 = vmatprep.subr.bf16.mxu0 0
        %2084 = vmatpush1.bf16.msra.mxu0 0
        %2085 = vmatprep.subr.bf16.mxu0 0
        %2086 = vmatpush1.bf16.msra.mxu0 0
        %2087 = vmatprep.subr.bf16.mxu0 0
        %2088 = vmatpush1.bf16.msra.mxu0 0
        %2089 = vmatprep.subr.bf16.mxu0 0
        %2090 = vmatpush1.bf16.msra.mxu0 0
        %2091 = vmatprep.subr.bf16.mxu0 0
        %2092 = vmatpush1.bf16.msra.mxu0 0
        %2093 = vmatprep.subr.bf16.mxu0 0
        %2094 = vmatpush1.bf16.msra.mxu0 0
        %2095 = vmatprep.subr.bf16.mxu0 0
        %2096 = vmatpush1.bf16.msra.mxu0 0
        %2097 = vmatprep.subr.bf16.mxu0 0
        %2098 = vmatpush1.bf16.msra.mxu0 0
        %2099 = vmatprep.subr.bf16.mxu0 0
        %2100 = vmatpush1.bf16.msra.mxu0 0
        %2101 = vmatprep.mubr.bf16.mxu0 0
        %2102 = vmatmul.mubr.bf16.gmra.mrb[0].mxu0 %v2064
        %v2103 = vpop.f32.mrb[0].mxu0
        %v2104 = vadd.f32 0.0, %v2103
        %v2105 = vpop.f32.mrb[0].mxu0
        %v2106 = vpop.f32.mrb[0].mxu0
        %v2107 = vpop.f32.mrb[0].mxu0
        %2108 = vdwg.mxu0
        %v2109 = vpack.c.bf16 %v1782, %v1782
        %v2110 = vpack.c.bf16 %v1828, %v1828
        %v2111 = vpack.c.bf16 %v1874, %v1874
        %v2112 = vpack.c.bf16 %v1920, %v1920
        %v2113 = vpack.c.bf16 %v1966, %v1966
        %v2114 = vpack.c.bf16 %v2012, %v2012
        %v2115 = vpack.c.bf16 %v2058, %v2058
        %v2116 = vpack.c.bf16 %v2104, %v2104
        %v2117 = vld [vmem:[#allocation10] sm:$0xf]
        %v2118 = vld [vmem:[#allocation10 + $0x4] sm:$0xf]
        %v2119 = vld [vmem:[#allocation10 + $0x8] sm:$0xf]
        %v2120 = vld [vmem:[#allocation10 + $0xc] sm:$0xf]
        %v2121 = vld [vmem:[#allocation10 + $0x10] sm:$0xf]
        %v2122 = vld [vmem:[#allocation10 + $0x14] sm:$0xf]
        %v2123 = vld [vmem:[#allocation10 + $0x18] sm:$0xf]
        %v2124 = vld [vmem:[#allocation10 + $0x1c] sm:$0xf]
        %v2125 = vld [vmem:[#allocation10 + $0x20] sm:$0xf]
        %v2126 = vld [vmem:[#allocation10 + $0x24] sm:$0xf]
        %v2127 = vld [vmem:[#allocation10 + $0x28] sm:$0xf]
        %v2128 = vld [vmem:[#allocation10 + $0x2c] sm:$0xf]
        %v2129 = vld [vmem:[#allocation10 + $0x30] sm:$0xf]
        %v2130 = vld [vmem:[#allocation10 + $0x34] sm:$0xf]
        %v2131 = vld [vmem:[#allocation10 + $0x38] sm:$0xf]
        %v2132 = vld [vmem:[#allocation10 + $0x3c] sm:$0xf]
        %v2133 = vld [vmem:[%s10] sm:$0x1]
        %v2135 = vlaneseq
        %v2136 = vshrl.u32 %v2135, 7
        %v2137 = vsub.s32 0, %v2136
        %v2138 = vrot.slane %v2133, %v2137
        %v2148 = vunpack.c.l.b16 %v2109
        %v2149 = vunpack.c.l.b16 %v2110
        %v2150 = vunpack.c.l.b16 %v2111
        %v2151 = vunpack.c.l.b16 %v2112
        %v2152 = vunpack.c.l.b16 %v2113
        %v2153 = vunpack.c.l.b16 %v2114
        %v2154 = vunpack.c.l.b16 %v2115
        %v2155 = vunpack.c.l.b16 %v2116
        %v2156 = vrot.slane %v2149, 7
        %vm2157 = vcmask 1041409
        %v2158 = vsel %vm2157, %v2156, %v2148
        %v2159 = vrot.slane %v2150, 6
        %vm2160 = vcmask 1042434
        %v2161 = vsel %vm2160, %v2159, %v2158
        %v2162 = vrot.slane %v2151, 5
        %vm2163 = vcmask 1043459
        %v2164 = vsel %vm2163, %v2162, %v2161
        %v2165 = vrot.slane %v2152, 4
        %vm2166 = vcmask 1044484
        %v2167 = vsel %vm2166, %v2165, %v2164
        %v2168 = vrot.slane %v2153, 3
        %vm2169 = vcmask 1045509
        %v2170 = vsel %vm2169, %v2168, %v2167
        %v2171 = vrot.slane %v2154, 2
        %vm2172 = vcmask 1046534
        %v2173 = vsel %vm2172, %v2171, %v2170
        %v2174 = vrot.slane %v2155, 1
        %vm2175 = vcmask 1047559
        %v2176 = vsel %vm2175, %v2174, %v2173
        %v2177 = vpack.c.b16 %v2176, %v2176
        %v2195 = vunpack.c.l.b16 %v2117
        %v2196 = vunpack.c.l.b16 %v2118
        %v2197 = vunpack.c.l.b16 %v2119
        %v2198 = vunpack.c.l.b16 %v2120
        %v2199 = vunpack.c.l.b16 %v2121
        %v2200 = vunpack.c.l.b16 %v2122
        %v2201 = vunpack.c.l.b16 %v2123
        %v2202 = vunpack.c.l.b16 %v2124
        %v2203 = vunpack.c.l.b16 %v2125
        %v2204 = vunpack.c.l.b16 %v2126
        %v2205 = vunpack.c.l.b16 %v2127
        %v2206 = vunpack.c.l.b16 %v2128
        %v2207 = vunpack.c.l.b16 %v2129
        %v2208 = vunpack.c.l.b16 %v2130
        %v2209 = vunpack.c.l.b16 %v2131
        %v2210 = vunpack.c.l.b16 %v2132
        %v2211 = vpack.c.b16 %v2196, %v2195
        %v2212 = vpack.c.b16 %v2198, %v2197
        %v2213 = vpack.c.b16 %v2200, %v2199
        %v2214 = vpack.c.b16 %v2202, %v2201
        %v2215 = vpack.c.b16 %v2204, %v2203
        %v2216 = vpack.c.b16 %v2206, %v2205
        %v2217 = vpack.c.b16 %v2208, %v2207
        %v2218 = vpack.c.b16 %v2210, %v2209
        %2227 = vmatprep.subr.bf16.mxu0 0
        %2228 = vmatpush1.bf16.msra.mxu0 %v2211
        %2229 = vmatprep.subr.bf16.mxu0 0
        %2230 = vmatpush1.bf16.msra.mxu0 %v2212
        %2231 = vmatprep.subr.bf16.mxu0 0
        %2232 = vmatpush1.bf16.msra.mxu0 %v2213
        %2233 = vmatprep.subr.bf16.mxu0 0
        %2234 = vmatpush1.bf16.msra.mxu0 %v2214
        %2235 = vmatprep.subr.bf16.mxu0 0
        %2236 = vmatpush1.bf16.msra.mxu0 %v2215
        %2237 = vmatprep.subr.bf16.mxu0 0
        %2238 = vmatpush1.bf16.msra.mxu0 %v2216
        %2239 = vmatprep.subr.bf16.mxu0 0
        %2240 = vmatpush1.bf16.msra.mxu0 %v2217
        %2241 = vmatprep.subr.bf16.mxu0 0
        %2242 = vmatpush1.bf16.msra.mxu0 %v2218
        %2243 = vmatprep.subr.bf16.mxu0 0
        %2244 = vmatpush1.bf16.msra.mxu0 0
        %2245 = vmatprep.subr.bf16.mxu0 0
        %2246 = vmatpush1.bf16.msra.mxu0 0
        %2247 = vmatprep.subr.bf16.mxu0 0
        %2248 = vmatpush1.bf16.msra.mxu0 0
        %2249 = vmatprep.subr.bf16.mxu0 0
        %2250 = vmatpush1.bf16.msra.mxu0 0
        %2251 = vmatprep.subr.bf16.mxu0 0
        %2252 = vmatpush1.bf16.msra.mxu0 0
        %2253 = vmatprep.subr.bf16.mxu0 0
        %2254 = vmatpush1.bf16.msra.mxu0 0
        %2255 = vmatprep.subr.bf16.mxu0 0
        %2256 = vmatpush1.bf16.msra.mxu0 0
        %2257 = vmatprep.subr.bf16.mxu0 0
        %2258 = vmatpush1.bf16.msra.mxu0 0
        %2259 = vmatprep.mubr.bf16.mxu0 0
        %2260 = vmatmul.mubr.bf16.gmra.mrb[0].mxu0 %v2177
        %v2261 = vpop.f32.mrb[0].mxu0
        %v2262 = vadd.f32 %v2138, %v2261
        %v2263 = vpop.f32.mrb[0].mxu0
        %v2264 = vpop.f32.mrb[0].mxu0
        %v2265 = vpop.f32.mrb[0].mxu0
        %2266 = vdwg.mxu0
        %v2267 = vunpack.c.l.bf16 %v1120
        %v2268 = vadd.f32 %v2267, %v2262
        %2269 = vadd.xlane.f32.xlu0 %v2268
        %v2270 = vpop.xlane.xlu0 %2269
        %v2271 = vrcp.pop 128.0
        %v2272 = vmul.f32 %v2270, %v2271
        %v2273 = vsub.f32 %v2268, %v2272
        %v2274 = vmul.f32 %v2273, %v2273
        %2275 = vadd.xlane.f32.xlu0 %v2274
        %v2276 = vpop.xlane.xlu0 %2275
        %v2277 = vmul.f32 %v2276, %v2271
        %v2278 = vadd.f32 %v2277, 1e-12
        %v2279 = vrsqrt.pop %v2278
        %v2280 = vmul.f32 %v2273, %v2279
        %v2281 = vld [vmem:[%s11] sm:$0x1]
        %v2283 = vlaneseq
        %v2284 = vshrl.u32 %v2283, 7
        %v2285 = vsub.s32 0, %v2284
        %v2286 = vrot.slane %v2281, %v2285
        %v2288 = vmul.f32 %v2280, %v2286
        %v2289 = vld [vmem:[%s12] sm:$0x1]
        %v2291 = vlaneseq
        %v2292 = vshrl.u32 %v2291, 7
        %v2293 = vsub.s32 0, %v2292
        %v2294 = vrot.slane %v2289, %v2293
        %v2296 = vadd.f32 %v2288, %v2294
        %v2297 = vpack.c.bf16 %v2296, %v2296
        %v2298 = vld [vmem:[#allocation11] sm:$0xff]
        %v2299 = vld [vmem:[#allocation11 + $0x8] sm:$0xff]
        %v2300 = vld [vmem:[#allocation11 + $0x10] sm:$0xff]
        %v2301 = vld [vmem:[#allocation11 + $0x18] sm:$0xff]
        %v2302 = vld [vmem:[#allocation11 + $0x20] sm:$0xff]
        %v2303 = vld [vmem:[#allocation11 + $0x28] sm:$0xff]
        %v2304 = vld [vmem:[#allocation11 + $0x30] sm:$0xff]
        %v2305 = vld [vmem:[#allocation11 + $0x38] sm:$0xff]
        %v2306 = vld [vmem:[#allocation11 + $0x40] sm:$0xff]
        %v2307 = vld [vmem:[#allocation11 + $0x48] sm:$0xff]
        %v2308 = vld [vmem:[#allocation11 + $0x50] sm:$0xff]
        %v2309 = vld [vmem:[#allocation11 + $0x58] sm:$0xff]
        %v2310 = vld [vmem:[#allocation11 + $0x60] sm:$0xff]
        %v2311 = vld [vmem:[#allocation11 + $0x68] sm:$0xff]
        %v2312 = vld [vmem:[#allocation11 + $0x70] sm:$0xff]
        %v2313 = vld [vmem:[#allocation11 + $0x78] sm:$0xff]
        %v2314 = vld [vmem:[%s14] sm:$0x3]
        %v2316 = vlaneseq
        %v2317 = vshrl.u32 %v2316, 7
        %v2318 = vsub.s32 0, %v2317
        %v2319 = vrot.slane %v2314, %v2318
        %v2320 = vlaneseq
        %v2321 = vshrl.u32 %v2320, 7
        %v2322 = vsub.s32 1, %v2321
        %v2323 = vrot.slane %v2314, %v2322
        %v2342 = vunpack.c.l.b16 %v2298
        %v2343 = vunpack.c.h.b16 %v2298
        %v2344 = vunpack.c.l.b16 %v2299
        %v2345 = vunpack.c.h.b16 %v2299
        %v2346 = vunpack.c.l.b16 %v2300
        %v2347 = vunpack.c.h.b16 %v2300
        %v2348 = vunpack.c.l.b16 %v2301
        %v2349 = vunpack.c.h.b16 %v2301
        %v2350 = vunpack.c.l.b16 %v2302
        %v2351 = vunpack.c.h.b16 %v2302
        %v2352 = vunpack.c.l.b16 %v2303
        %v2353 = vunpack.c.h.b16 %v2303
        %v2354 = vunpack.c.l.b16 %v2304
        %v2355 = vunpack.c.h.b16 %v2304
        %v2356 = vunpack.c.l.b16 %v2305
        %v2357 = vunpack.c.h.b16 %v2305
        %v2358 = vunpack.c.l.b16 %v2306
        %v2359 = vunpack.c.h.b16 %v2306
        %v2360 = vunpack.c.l.b16 %v2307
        %v2361 = vunpack.c.h.b16 %v2307
        %v2362 = vunpack.c.l.b16 %v2308
        %v2363 = vunpack.c.h.b16 %v2308
        %v2364 = vunpack.c.l.b16 %v2309
        %v2365 = vunpack.c.h.b16 %v2309
        %v2366 = vunpack.c.l.b16 %v2310
        %v2367 = vunpack.c.h.b16 %v2310
        %v2368 = vunpack.c.l.b16 %v2311
        %v2369 = vunpack.c.h.b16 %v2311
        %v2370 = vunpack.c.l.b16 %v2312
        %v2371 = vunpack.c.h.b16 %v2312
        %v2372 = vunpack.c.l.b16 %v2313
        %v2373 = vunpack.c.h.b16 %v2313
        %v2374 = vpack.c.b16 %v2344, %v2342
        %v2375 = vpack.c.b16 %v2345, %v2343
        %v2376 = vpack.c.b16 %v2348, %v2346
        %v2377 = vpack.c.b16 %v2349, %v2347
        %v2378 = vpack.c.b16 %v2352, %v2350
        %v2379 = vpack.c.b16 %v2353, %v2351
        %v2380 = vpack.c.b16 %v2356, %v2354
        %v2381 = vpack.c.b16 %v2357, %v2355
        %v2382 = vpack.c.b16 %v2360, %v2358
        %v2383 = vpack.c.b16 %v2361, %v2359
        %v2384 = vpack.c.b16 %v2364, %v2362
        %v2385 = vpack.c.b16 %v2365, %v2363
        %v2386 = vpack.c.b16 %v2368, %v2366
        %v2387 = vpack.c.b16 %v2369, %v2367
        %v2388 = vpack.c.b16 %v2372, %v2370
        %v2389 = vpack.c.b16 %v2373, %v2371
        %2406 = vmatprep.subr.bf16.mxu0 %v2375
        %2407 = vmatpush1.bf16.msra.mxu0 %v2374
        %2408 = vmatprep.subr.bf16.mxu0 %v2377
        %2409 = vmatpush1.bf16.msra.mxu0 %v2376
        %2410 = vmatprep.subr.bf16.mxu0 %v2379
        %2411 = vmatpush1.bf16.msra.mxu0 %v2378
        %2412 = vmatprep.subr.bf16.mxu0 %v2381
        %2413 = vmatpush1.bf16.msra.mxu0 %v2380
        %2414 = vmatprep.subr.bf16.mxu0 %v2383
        %2415 = vmatpush1.bf16.msra.mxu0 %v2382
        %2416 = vmatprep.subr.bf16.mxu0 %v2385
        %2417 = vmatpush1.bf16.msra.mxu0 %v2384
        %2418 = vmatprep.subr.bf16.mxu0 %v2387
        %2419 = vmatpush1.bf16.msra.mxu0 %v2386
        %2420 = vmatprep.subr.bf16.mxu0 %v2389
        %2421 = vmatpush1.bf16.msra.mxu0 %v2388
        %2422 = vmatprep.subr.bf16.mxu0 0
        %2423 = vmatpush1.bf16.msra.mxu0 0
        %2424 = vmatprep.subr.bf16.mxu0 0
        %2425 = vmatpush1.bf16.msra.mxu0 0
        %2426 = vmatprep.subr.bf16.mxu0 0
        %2427 = vmatpush1.bf16.msra.mxu0 0
        %2428 = vmatprep.subr.bf16.mxu0 0
        %2429 = vmatpush1.bf16.msra.mxu0 0
        %2430 = vmatprep.subr.bf16.mxu0 0
        %2431 = vmatpush1.bf16.msra.mxu0 0
        %2432 = vmatprep.subr.bf16.mxu0 0
        %2433 = vmatpush1.bf16.msra.mxu0 0
        %2434 = vmatprep.subr.bf16.mxu0 0
        %2435 = vmatpush1.bf16.msra.mxu0 0
        %2436 = vmatprep.subr.bf16.mxu0 0
        %2437 = vmatpush1.bf16.msra.mxu0 0
        %2438 = vmatprep.mubr.bf16.mxu0 0
        %2439 = vmatmul.mubr.bf16.gmra.mrb[0].mxu0 %v2297
        %v2440 = vpop.f32.mrb[0].mxu0
        %v2441 = vadd.f32 %v2319, %v2440
        %v2442 = vpop.f32.mrb[0].mxu0
        %v2443 = vadd.f32 %v2323, %v2442
        %v2444 = vpop.f32.mrb[0].mxu0
        %v2445 = vpop.f32.mrb[0].mxu0
        %2446 = vdwg.mxu0
        %v2447 = vmul.f32 %v2441, %v2441
        %v2448 = vmul.f32 %v2443, %v2443
        %v2449 = vmul.f32 %v2441, %v2447
        %v2450 = vmul.f32 %v2443, %v2448
        %v2451 = vmul.f32 %v2449, 0.044715
        %v2452 = vmul.f32 %v2450, 0.044715
        %v2453 = vadd.f32 %v2441, %v2451
        %v2454 = vadd.f32 %v2443, %v2452
        %v2455 = vmul.f32 %v2453, 0.7978846
        %v2456 = vmul.f32 %v2454, 0.7978846
        %v2457 = vtanh.pop %v2455
        %v2458 = vtanh.pop %v2456
        %v2459 = vadd.f32 %v2457, 1.0
        %v2460 = vadd.f32 %v2458, 1.0
        %v2461 = vmul.f32 %v2459, 0.5
        %v2462 = vmul.f32 %v2460, 0.5
        %v2463 = vmul.f32 %v2441, %v2461
        %v2464 = vmul.f32 %v2443, %v2462
        %v2465 = vpack.c.bf16 %v2463, %v2463
        %v2466 = vpack.c.bf16 %v2464, %v2464
        %v2467 = vld [vmem:[#allocation13] sm:$0xf]
        %v2468 = vld [vmem:[#allocation13 + $0x4] sm:$0xf]
        %v2469 = vld [vmem:[#allocation13 + $0x8] sm:$0xf]
        %v2470 = vld [vmem:[#allocation13 + $0xc] sm:$0xf]
        %v2471 = vld [vmem:[#allocation13 + $0x10] sm:$0xf]
        %v2472 = vld [vmem:[#allocation13 + $0x14] sm:$0xf]
        %v2473 = vld [vmem:[#allocation13 + $0x18] sm:$0xf]
        %v2474 = vld [vmem:[#allocation13 + $0x1c] sm:$0xf]
        %v2475 = vld [vmem:[#allocation13 + $0x20] sm:$0xf]
        %v2476 = vld [vmem:[#allocation13 + $0x24] sm:$0xf]
        %v2477 = vld [vmem:[#allocation13 + $0x28] sm:$0xf]
        %v2478 = vld [vmem:[#allocation13 + $0x2c] sm:$0xf]
        %v2479 = vld [vmem:[#allocation13 + $0x30] sm:$0xf]
        %v2480 = vld [vmem:[#allocation13 + $0x34] sm:$0xf]
        %v2481 = vld [vmem:[#allocation13 + $0x38] sm:$0xf]
        %v2482 = vld [vmem:[#allocation13 + $0x3c] sm:$0xf]
        %v2483 = vld [vmem:[#allocation13 + $0x40] sm:$0xf]
        %v2484 = vld [vmem:[#allocation13 + $0x44] sm:$0xf]
        %v2485 = vld [vmem:[#allocation13 + $0x48] sm:$0xf]
        %v2486 = vld [vmem:[#allocation13 + $0x4c] sm:$0xf]
        %v2487 = vld [vmem:[#allocation13 + $0x50] sm:$0xf]
        %v2488 = vld [vmem:[#allocation13 + $0x54] sm:$0xf]
        %v2489 = vld [vmem:[#allocation13 + $0x58] sm:$0xf]
        %v2490 = vld [vmem:[#allocation13 + $0x5c] sm:$0xf]
        %v2491 = vld [vmem:[#allocation13 + $0x60] sm:$0xf]
        %v2492 = vld [vmem:[#allocation13 + $0x64] sm:$0xf]
        %v2493 = vld [vmem:[#allocation13 + $0x68] sm:$0xf]
        %v2494 = vld [vmem:[#allocation13 + $0x6c] sm:$0xf]
        %v2495 = vld [vmem:[#allocation13 + $0x70] sm:$0xf]
        %v2496 = vld [vmem:[#allocation13 + $0x74] sm:$0xf]
        %v2497 = vld [vmem:[#allocation13 + $0x78] sm:$0xf]
        %v2498 = vld [vmem:[#allocation13 + $0x7c] sm:$0xf]
        %v2499 = vld [vmem:[%s16] sm:$0x1]
        %v2501 = vlaneseq
        %v2502 = vshrl.u32 %v2501, 7
        %v2503 = vsub.s32 0, %v2502
        %v2504 = vrot.slane %v2499, %v2503
        %v2538 = vunpack.c.l.b16 %v2467
        %v2539 = vunpack.c.l.b16 %v2468
        %v2540 = vunpack.c.l.b16 %v2469
        %v2541 = vunpack.c.l.b16 %v2470
        %v2542 = vunpack.c.l.b16 %v2471
        %v2543 = vunpack.c.l.b16 %v2472
        %v2544 = vunpack.c.l.b16 %v2473
        %v2545 = vunpack.c.l.b16 %v2474
        %v2546 = vunpack.c.l.b16 %v2475
        %v2547 = vunpack.c.l.b16 %v2476
        %v2548 = vunpack.c.l.b16 %v2477
        %v2549 = vunpack.c.l.b16 %v2478
        %v2550 = vunpack.c.l.b16 %v2479
        %v2551 = vunpack.c.l.b16 %v2480
        %v2552 = vunpack.c.l.b16 %v2481
        %v2553 = vunpack.c.l.b16 %v2482
        %v2554 = vunpack.c.l.b16 %v2483
        %v2555 = vunpack.c.l.b16 %v2484
        %v2556 = vunpack.c.l.b16 %v2485
        %v2557 = vunpack.c.l.b16 %v2486
        %v2558 = vunpack.c.l.b16 %v2487
        %v2559 = vunpack.c.l.b16 %v2488
        %v2560 = vunpack.c.l.b16 %v2489
        %v2561 = vunpack.c.l.b16 %v2490
        %v2562 = vunpack.c.l.b16 %v2491
        %v2563 = vunpack.c.l.b16 %v2492
        %v2564 = vunpack.c.l.b16 %v2493
        %v2565 = vunpack.c.l.b16 %v2494
        %v2566 = vunpack.c.l.b16 %v2495
        %v2567 = vunpack.c.l.b16 %v2496
        %v2568 = vunpack.c.l.b16 %v2497
        %v2569 = vunpack.c.l.b16 %v2498
        %v2570 = vpack.c.b16 %v2539, %v2538
        %v2571 = vpack.c.b16 %v2541, %v2540
        %v2572 = vpack.c.b16 %v2543, %v2542
        %v2573 = vpack.c.b16 %v2545, %v2544
        %v2574 = vpack.c.b16 %v2547, %v2546
        %v2575 = vpack.c.b16 %v2549, %v2548
        %v2576 = vpack.c.b16 %v2551, %v2550
        %v2577 = vpack.c.b16 %v2553, %v2552
        %v2578 = vpack.c.b16 %v2555, %v2554
        %v2579 = vpack.c.b16 %v2557, %v2556
        %v2580 = vpack.c.b16 %v2559, %v2558
        %v2581 = vpack.c.b16 %v2561, %v2560
        %v2582 = vpack.c.b16 %v2563, %v2562
        %v2583 = vpack.c.b16 %v2565, %v2564
        %v2584 = vpack.c.b16 %v2567, %v2566
        %v2585 = vpack.c.b16 %v2569, %v2568
        %2602 = vmatprep.subr.bf16.mxu0 0
        %2603 = vmatpush1.bf16.msra.mxu0 %v2570
        %2604 = vmatprep.subr.bf16.mxu0 0
        %2605 = vmatpush1.bf16.msra.mxu0 %v2571
        %2606 = vmatprep.subr.bf16.mxu0 0
        %2607 = vmatpush1.bf16.msra.mxu0 %v2572
        %2608 = vmatprep.subr.bf16.mxu0 0
        %2609 = vmatpush1.bf16.msra.mxu0 %v2573
        %2610 = vmatprep.subr.bf16.mxu0 0
        %2611 = vmatpush1.bf16.msra.mxu0 %v2574
        %2612 = vmatprep.subr.bf16.mxu0 0
        %2613 = vmatpush1.bf16.msra.mxu0 %v2575
        %2614 = vmatprep.subr.bf16.mxu0 0
        %2615 = vmatpush1.bf16.msra.mxu0 %v2576
        %2616 = vmatprep.subr.bf16.mxu0 0
        %2617 = vmatpush1.bf16.msra.mxu0 %v2577
        %2618 = vmatprep.subr.bf16.mxu0 0
        %2619 = vmatpush1.bf16.msra.mxu0 %v2578
        %2620 = vmatprep.subr.bf16.mxu0 0
        %2621 = vmatpush1.bf16.msra.mxu0 %v2579
        %2622 = vmatprep.subr.bf16.mxu0 0
        %2623 = vmatpush1.bf16.msra.mxu0 %v2580
        %2624 = vmatprep.subr.bf16.mxu0 0
        %2625 = vmatpush1.bf16.msra.mxu0 %v2581
        %2626 = vmatprep.subr.bf16.mxu0 0
        %2627 = vmatpush1.bf16.msra.mxu0 %v2582
        %2628 = vmatprep.subr.bf16.mxu0 0
        %2629 = vmatpush1.bf16.msra.mxu0 %v2583
        %2630 = vmatprep.subr.bf16.mxu0 0
        %2631 = vmatpush1.bf16.msra.mxu0 %v2584
        %2632 = vmatprep.subr.bf16.mxu0 0
        %2633 = vmatpush1.bf16.msra.mxu0 %v2585
        %2634 = vmatprep.mubr.bf16.mxu0 %v2466
        %2635 = vmatmul.mubr.bf16.gmra.mrb[0].mxu0 %v2465
        %v2636 = vpop.f32.mrb[0].mxu0
        %v2637 = vadd.f32 %v2504, %v2636
        %v2638 = vpop.f32.mrb[0].mxu0
        %v2639 = vpop.f32.mrb[0].mxu0
        %v2640 = vpop.f32.mrb[0].mxu0
        %2641 = vdwg.mxu0
        %v2642 = vadd.f32 %v2296, %v2637
        %2643 = vadd.xlane.f32.xlu0 %v2642
        %v2644 = vpop.xlane.xlu0 %2643
        %v2645 = vmul.f32 %v2644, %v2271
        %v2646 = vsub.f32 %v2642, %v2645
        %v2647 = vmul.f32 %v2646, %v2646
        %2648 = vadd.xlane.f32.xlu0 %v2647
        %v2649 = vpop.xlane.xlu0 %2648
        %v2650 = vmul.f32 %v2649, %v2271
        %v2651 = vadd.f32 %v2650, 1e-12
        %v2652 = vrsqrt.pop %v2651
        %v2653 = vmul.f32 %v2646, %v2652
        %v2654 = vld [vmem:[%s17] sm:$0x1]
        %v2656 = vlaneseq
        %v2657 = vshrl.u32 %v2656, 7
        %v2658 = vsub.s32 0, %v2657
        %v2659 = vrot.slane %v2654, %v2658
        %v2661 = vmul.f32 %v2653, %v2659
        %v2662 = vld [vmem:[%s18] sm:$0x1]
        %v2664 = vlaneseq
        %v2665 = vshrl.u32 %v2664, 7
        %v2666 = vsub.s32 0, %v2665
        %v2667 = vrot.slane %v2662, %v2666
        %v2669 = vadd.f32 %v2661, %v2667
        %v2670 = vpack.c.bf16 %v2669, %v2669
        %v2671 = vld [vmem:[%s19] sm:$0xf]
        %v2672 = vld [vmem:[%s19 + $0x4] sm:$0xf]
        %v2673 = vld [vmem:[%s19 + $0x8] sm:$0xf]
        %v2674 = vld [vmem:[%s19 + $0xc] sm:$0xf]
        %v2675 = vld [vmem:[%s19 + $0x10] sm:$0xf]
        %v2676 = vld [vmem:[%s19 + $0x14] sm:$0xf]
        %v2677 = vld [vmem:[%s19 + $0x18] sm:$0xf]
        %v2678 = vld [vmem:[%s19 + $0x1c] sm:$0xf]
        %v2679 = vld [vmem:[%s19 + $0x20] sm:$0xf]
        %v2680 = vld [vmem:[%s19 + $0x24] sm:$0xf]
        %v2681 = vld [vmem:[%s19 + $0x28] sm:$0xf]
        %v2682 = vld [vmem:[%s19 + $0x2c] sm:$0xf]
        %v2683 = vld [vmem:[%s19 + $0x30] sm:$0xf]
        %v2684 = vld [vmem:[%s19 + $0x34] sm:$0xf]
        %v2685 = vld [vmem:[%s19 + $0x38] sm:$0xf]
        %v2686 = vld [vmem:[%s19 + $0x3c] sm:$0xf]
        %v2687 = vld [vmem:[%s20] sm:$0x1]
        %v2689 = vlaneseq
        %v2690 = vshrl.u32 %v2689, 7
        %v2691 = vsub.s32 0, %v2690
        %v2692 = vrot.slane %v2687, %v2691
        %v2710 = vunpack.c.l.b16 %v2671
        %v2711 = vunpack.c.l.b16 %v2672
        %v2712 = vunpack.c.l.b16 %v2673
        %v2713 = vunpack.c.l.b16 %v2674
        %v2714 = vunpack.c.l.b16 %v2675
        %v2715 = vunpack.c.l.b16 %v2676
        %v2716 = vunpack.c.l.b16 %v2677
        %v2717 = vunpack.c.l.b16 %v2678
        %v2718 = vunpack.c.l.b16 %v2679
        %v2719 = vunpack.c.l.b16 %v2680
        %v2720 = vunpack.c.l.b16 %v2681
        %v2721 = vunpack.c.l.b16 %v2682
        %v2722 = vunpack.c.l.b16 %v2683
        %v2723 = vunpack.c.l.b16 %v2684
        %v2724 = vunpack.c.l.b16 %v2685
        %v2725 = vunpack.c.l.b16 %v2686
        %v2726 = vpack.c.b16 %v2711, %v2710
        %v2727 = vpack.c.b16 %v2713, %v2712
        %v2728 = vpack.c.b16 %v2715, %v2714
        %v2729 = vpack.c.b16 %v2717, %v2716
        %v2730 = vpack.c.b16 %v2719, %v2718
        %v2731 = vpack.c.b16 %v2721, %v2720
        %v2732 = vpack.c.b16 %v2723, %v2722
        %v2733 = vpack.c.b16 %v2725, %v2724
        %2742 = vmatprep.subr.bf16.mxu0 0
        %2743 = vmatpush1.bf16.msra.mxu0 %v2726
        %2744 = vmatprep.subr.bf16.mxu0 0
        %2745 = vmatpush1.bf16.msra.mxu0 %v2727
        %2746 = vmatprep.subr.bf16.mxu0 0
        %2747 = vmatpush1.bf16.msra.mxu0 %v2728
        %2748 = vmatprep.subr.bf16.mxu0 0
        %2749 = vmatpush1.bf16.msra.mxu0 %v2729
        %2750 = vmatprep.subr.bf16.mxu0 0
        %2751 = vmatpush1.bf16.msra.mxu0 %v2730
        %2752 = vmatprep.subr.bf16.mxu0 0
        %2753 = vmatpush1.bf16.msra.mxu0 %v2731
        %2754 = vmatprep.subr.bf16.mxu0 0
        %2755 = vmatpush1.bf16.msra.mxu0 %v2732
        %2756 = vmatprep.subr.bf16.mxu0 0
        %2757 = vmatpush1.bf16.msra.mxu0 %v2733
        %2758 = vmatprep.subr.bf16.mxu0 0
        %2759 = vmatpush1.bf16.msra.mxu0 0
        %2760 = vmatprep.subr.bf16.mxu0 0
        %2761 = vmatpush1.bf16.msra.mxu0 0
        %2762 = vmatprep.subr.bf16.mxu0 0
        %2763 = vmatpush1.bf16.msra.mxu0 0
        %2764 = vmatprep.subr.bf16.mxu0 0
        %2765 = vmatpush1.bf16.msra.mxu0 0
        %2766 = vmatprep.subr.bf16.mxu0 0
        %2767 = vmatpush1.bf16.msra.mxu0 0
        %2768 = vmatprep.subr.bf16.mxu0 0
        %2769 = vmatpush1.bf16.msra.mxu0 0
        %2770 = vmatprep.subr.bf16.mxu0 0
        %2771 = vmatpush1.bf16.msra.mxu0 0
        %2772 = vmatprep.subr.bf16.mxu0 0
        %2773 = vmatpush1.bf16.msra.mxu0 0
        %2774 = vmatprep.mubr.bf16.mxu0 0
        %2775 = vmatmul.mubr.bf16.gmra.mrb[0].mxu0 %v2670
        %v2776 = vpop.f32.mrb[0].mxu0
        %v2777 = vadd.f32 %v2692, %v2776
        %v2778 = vpop.f32.mrb[0].mxu0
        %v2779 = vpop.f32.mrb[0].mxu0
        %v2780 = vpop.f32.mrb[0].mxu0
        %2781 = vdwg.mxu0
        %2782 = vst [vmem:[%s788] sm:$0xff] %v2777
        %s2783 = sand.u32 %s505, 1
        %s2784 = scalar_lea.sflag [#allocation4], %s2783
        %s2785 = sand.u32 %s505, 1
        %s2786 = smul.addr %s2785, 8
        %s2787 = scalar_lea.vmem [#allocation14], %s2786
        // Predicated region
        $region133: #{tpu_custom_call.1} parent=103 // pred_check
          %p2788 = pneg %p515
        $region134: #{tpu_custom_call.1} parent=103 // pred_check_branch
          %2790 = sbr.rel (%p2788) target = $region136
        $region135: #{tpu_custom_call.1} parent=103 // pred_region
          %s2792 = ssub.s32 128, 128
          %2793 = vsyncadd %s2784, %s2792
          %s2794 = smul.addr %s41, 128
          %s2795 = scalar_lea.hbm %s21, %s2794
          %s2797 = sshll.u32 %s2787, 4
          %s2798 = int_to_ptr.vmem [resolvable:$true] %s2797
          %2800 = dma.vmem_to_hbm [thread:$0]  %s2798, 128, %s2795, %s2784
        $region136: #{tpu_custom_call.1} parent=103 // pred_fallthru
          _
      $region104: #{tpu_custom_call.1} parent=5 // pred_fallthru
        _
      %p2801 = scmp.le.s32.totalorder 2, %s36
      // Predicated region
      $region137: #{tpu_custom_call.1} parent=5 // pred_check
        %p2802 = pneg %p2801
      $region138: #{tpu_custom_call.1} parent=5 // pred_check_branch
        %2804 = sbr.rel (%p2802) target = $region140
      $region139: #{tpu_custom_call.1} parent=5 // pred_region
        %s2805 = ssub.s32 %s36, 2
        // Predicated region
        $region141: #{tpu_custom_call.1} parent=139 // pred_check
          %p2806 = pneg %p521
        $region142: #{tpu_custom_call.1} parent=139 // pred_check_branch
          %2808 = sbr.rel (%p2806) target = $region144
        $region143: #{tpu_custom_call.1} parent=139 // pred_region
          %s2809 = sand.u32 %s506, 1
          %s2810 = scalar_lea.sflag [#allocation4], %s2809
          %s2811 = sand.u32 %s506, 1
          %s2812 = smul.addr %s2811, 8
          %s2813 = scalar_lea.vmem [#allocation14], %s2812
          %2814 = dma.done %s2810, 128
        $region144: #{tpu_custom_call.1} parent=139 // pred_fallthru
          _
      $region140: #{tpu_custom_call.1} parent=5 // pred_fallthru
        _
    $region6: #{tpu_custom_call.1} parent=1 // loop_footer
      %s40 = sadd.s32 1, %s36
    $region7: #{tpu_custom_call.1} parent=1 // loop_footer_branch
      %35 = sbr.rel target = $region3
    $region8: #{tpu_custom_call.1} parent=1 // loop_exit
      _
    %2815 = vsyncpa [#allocation3], 1
    %s2816 = scalar_lea.sflag [#allocation3], 1
    %2817 = vsyncpa %s2816, 1
    %2818 = vsyncpa [#allocation6], 1
    %2819 = vsyncpa [#allocation9], 1
    %2820 = vsyncpa [#allocation12], 1
    %2821 = vsyncpa [#allocation4], 1
    %s2822 = scalar_lea.sflag [#allocation4], 1
    %2823 = vsyncpa %s2822, 1

</llo_original>
